<compile_context>
chip_gen: v7x
topology: tpu7x:2x2x1
jax: 0.10.0
libtpu: 0.0.40
codegen_flags: <defaults>
</compile_context>

<pallas_src>
import functools

import jax
import jax.numpy as jnp
from jax import lax
from jax.experimental import pallas as pl
from jax.experimental.pallas import tpu as pltpu

EPS = 1e-5      # PyTorch LayerNorm default
LANE = 128      # TPU lane width
SUBLANE = 8     # TPU sublane height


def _round_up(n, m):
    return (n + m - 1) // m * m


def _swap01(v):
    """(A, B, D) -> (B, A, D); lane dim untouched (sublane/XLU relayout, in VMEM)."""
    einshape = getattr(pltpu, "einshape", None)
    if einshape is not None:
        return einshape("abd->bad", v)
    return jnp.swapaxes(v, 0, 1)


def _sigmoid(v):
    # bf16 operand: the single EUP runs bf16 at ~2x the f32 rate on v6e/v7x
    # (harmless on v5e).  Surrounding adds/muls stay in f32.
    return jax.nn.sigmoid(v.astype(jnp.bfloat16)).astype(jnp.float32)


def _silu(v):
    return v * _sigmoid(v)


def _g(v):  # minGRU "g" activation
    return jnp.where(v >= 0, v + 0.5, _sigmoid(v))


def _layernorm(v, w, b, n_true):
    """LayerNorm over last dim; statistics over the first `n_true` columns.

    Assumes columns >= n_true of v are exactly zero and w, b are zero there,
    so the output is also exactly zero in the padded columns."""
    inv_n = 1.0 / n_true
    mu = jnp.sum(v, axis=-1, keepdims=True) * inv_n
    var = jnp.maximum(jnp.sum(v * v, axis=-1, keepdims=True) * inv_n - mu * mu, 0.0)
    return (v - mu) * lax.rsqrt(var + EPS) * w + b


def mamba_kernel(x_ref,
                 w12_ref, b12_ref, ln12w_ref, ln12b_ref,
                 wc_ref, bc_ref, clnw_ref, clnb_ref,
                 wzh_ref, bzh_ref, glnw_ref, glnb_ref,
                 wd_ref, bd_ref,
                 out_ref, last_ref,
                 a_scr, b_scr,
                 *, h_true):
    BT, S, Dp = x_ref.shape          # batch-tile, seq, padded Din (HBM-native layout)
    Hp = wd_ref.shape[0]             # padded hidden
    R = S * BT                       # flat rows, time-major: row = t*BT + b

    # ---- in-VMEM relayout to time-major flat rows (no wrapper HBM transpose) ----
    x = _swap01(x_ref[...]).reshape(R, Dp)        # f32, kept for the residual add
    xb = x.astype(jnp.bfloat16)

    lane = lax.broadcasted_iota(jnp.int32, (1, Hp), 1)
    h_mask = lane < h_true           # True on real hidden columns, False on pad

    # ---- fused input projections: x @ [W1 | W2] ----
    y12 = jnp.dot(xb, w12_ref[...], preferred_element_type=jnp.float32) + b12_ref[...]
    s1 = _layernorm(y12[:, :Hp], ln12w_ref[:, :Hp], ln12b_ref[:, :Hp], h_true)
    s2 = _silu(_layernorm(y12[:, Hp:], ln12w_ref[:, Hp:], ln12b_ref[:, Hp:], h_true))

    # ---- conv1d over time (k=3, pad=1): one wide matmul, shift the OUTPUT slabs ----
    yc = jnp.dot(s1.astype(jnp.bfloat16), wc_ref[...],
                 preferred_element_type=jnp.float32)            # (R, 3*Hp)
    row = lax.broadcasted_iota(jnp.int32, (R, 1), 0)
    prev = jnp.where(row >= BT, pltpu.roll(yc[:, :Hp], BT, 0), 0.0)            # x[t-1]
    nxt = jnp.where(row < R - BT, pltpu.roll(yc[:, 2 * Hp:], R - BT, 0), 0.0)  # x[t+1]
    conv = prev + yc[:, Hp:2 * Hp] + nxt + bc_ref[...]
    s1 = _silu(_layernorm(conv, clnw_ref[...], clnb_ref[...], h_true))

    # ---- minGRU gates: s1 @ [Wz | Wh]; precompute scan coefficients ----
    yzh = jnp.dot(s1.astype(jnp.bfloat16), wzh_ref[...],
                  preferred_element_type=jnp.float32) + bzh_ref[...]
    z = _sigmoid(yzh[:, :Hp])
    htil = jnp.where(h_mask, _g(yzh[:, Hp:]), 0.0)   # keep padded lanes exactly 0
    a_scr[...] = 1.0 - z
    b_scr[...] = z * htil

    # ---- sequential scan: h_t = a_t*h_{t-1} + b_t ;  h_0 = None -> g(0) = 0.5 ----
    # h_t overwrites b_t in place (b_t is consumed in the same iteration), so no
    # third (R, Hp) scratch array is needed.
    h0 = jnp.where(jnp.broadcast_to(h_mask, (BT, Hp)), 0.5, 0.0).astype(jnp.float32)

    def step(t, h):
        r0 = pl.multiple_of(t * BT, BT)
        h = a_scr[pl.ds(r0, BT), :] * h + b_scr[pl.ds(r0, BT), :]
        b_scr[pl.ds(r0, BT), :] = h
        return h

    h_last = lax.fori_loop(0, S, step, h0, unroll=min(8, S))

    # ---- gru LayerNorm, gate with strand2, down-projection, residual ----
    strand1 = _layernorm(b_scr[...], glnw_ref[...], glnb_ref[...], h_true)
    gated = (strand1 * s2).astype(jnp.bfloat16)
    x_out = (jnp.dot(gated, wd_ref[...], preferred_element_type=jnp.float32)
             + bd_ref[...] + x)
    # store directly in (batch, seq, Dp) layout — no wrapper-side transpose needed
    out_ref[...] = _swap01(x_out.reshape(S, BT, Dp))
    # last timestep of gru_ln(h); identical to strand1 rows of the final timestep
    last_ref[...] = _layernorm(h_last, glnw_ref[...], glnb_ref[...], h_true)


def _pad2(w, r, c):
    return jnp.pad(w, ((0, r - w.shape[0]), (0, c - w.shape[1])))


def prepare_inputs(x, params):
    """Pad to lane/sublane-dense shapes, fuse weights, cast matmul weights to bf16."""
    B, S, Din = x.shape
    H = params["w1"].shape[1]
    Bp = _round_up(B, SUBLANE)                 # keep every batch tile sublane-aligned
    Dp, Hp = _round_up(Din, LANE), _round_up(H, LANE)
    f32, bf16 = jnp.float32, jnp.bfloat16

    # natural (B, S, D) layout, zero-padded; no HBM transpose
    x_p = jnp.pad(x.astype(f32), ((0, Bp - B), (0, 0), (0, Dp - Din)))

    def pw(name, r, c):
        return _pad2(params[name].astype(f32), r, c)

    w12 = jnp.concatenate([pw("w1", Dp, Hp), pw("w2", Dp, Hp)], axis=1).astype(bf16)
    b12 = jnp.concatenate([pw("b1", 1, Hp), pw("b2", 1, Hp)], axis=1)
    ln12w = jnp.concatenate([pw("ln1w", 1, Hp), pw("ln2w", 1, Hp)], axis=1)
    ln12b = jnp.concatenate([pw("ln1b", 1, Hp), pw("ln2b", 1, Hp)], axis=1)
    # conv weight stored as (k, in, out); fuse along output dim: [prev | center | next]
    wc = jnp.concatenate([_pad2(params["wc"][k].astype(f32), Hp, Hp) for k in range(3)],
                         axis=1).astype(bf16)
    bc = pw("bc", 1, Hp)
    clnw, clnb = pw("clnw", 1, Hp), pw("clnb", 1, Hp)
    wzh = jnp.concatenate([pw("wz", Hp, Hp), pw("wh", Hp, Hp)], axis=1).astype(bf16)
    bzh = jnp.concatenate([pw("bz", 1, Hp), pw("bh", 1, Hp)], axis=1)
    glnw, glnb = pw("glnw", 1, Hp), pw("glnb", 1, Hp)
    wd = pw("wd", Hp, Dp).astype(bf16)
    bd = pw("bd", 1, Dp)

    weights = (w12, b12, ln12w, ln12b, wc, bc, clnw, clnb,
               wzh, bzh, glnw, glnb, wd, bd)
    return x_p, weights, (Bp, Dp, Hp)


def _device_budget():
    """(two_tensorcores, per-kernel VMEM budget in bytes) of the attached TPU."""
    try:
        kind = jax.devices()[0].device_kind.lower()
    except Exception:
        kind = ""
    two_cores = ("v7" in kind) or ("7x" in kind)
    # v7x: 64 MiB physical VMEM per core; v5e/v6e: 128 MiB.
    budget = (44 << 20) if two_cores else (80 << 20)
    return two_cores, budget


def _choose_bt(b_pad, s, dp, hp, weight_bytes, two_cores, budget):
    """Largest batch tile (multiple of 8, divides b_pad) fitting the VMEM budget.

    On 2-TC chips prefer an even grid so "parallel" sharding keeps both cores busy;
    on 1-TC chips (v5e/v6e) the whole batch in one grid step is best (fewer pipeline
    steps, bigger MXU M-dim)."""
    # Rough per-flat-row VMEM bytes: double-buffered x/out blocks (~4*Dp f32),
    # a/b scan scratch (2*Hp f32) and peak intermediate slabs (~Dp + 8*Hp f32).
    row_bytes = 4 * (5 * dp + 10 * hp)
    avail = budget - 2 * weight_bytes - (2 << 20)     # weights are double-buffered
    bt_max = max(SUBLANE, (avail // max(row_bytes * s, 1)) // SUBLANE * SUBLANE)
    cands = [bt for bt in range(SUBLANE, b_pad + 1, SUBLANE)
             if b_pad % bt == 0 and bt <= bt_max]
    if not cands:
        return SUBLANE
    if two_cores:
        even = [bt for bt in cands if (b_pad // bt) % 2 == 0]
        if even:
            return max(even)
    return max(cands)


def mamba_forward(x, params):
    B, S, Din = x.shape
    H = params["w1"].shape[1]
    x_p, weights, (Bp, Dp, Hp) = prepare_inputs(x, params)

    weight_bytes = sum(int(w.size) * w.dtype.itemsize for w in weights)
    two_cores, budget = _device_budget()
    BT = _choose_bt(Bp, S, Dp, Hp, weight_bytes, two_cores, budget)
    grid = (Bp // BT,)
    R = S * BT
    # TODO(synk): for very long sequences add an inner "arbitrary" grid axis over
    # S-chunks (carry h in a persistent (BT, Hp) scratch, handle the conv +-1 halo)
    # so a/b scratch stays bounded and BT can remain MXU-sized on v7x's 64 MiB VMEM.

    kernel = functools.partial(mamba_kernel, h_true=H)

    x_spec = pl.BlockSpec((BT, S, Dp), lambda b: (b, 0, 0))
    # Weight index_maps are grid-invariant, so each weight is DMA'd into VMEM once;
    # their (default) double-buffer footprint is already charged to the BT budget.
    w_specs = [pl.BlockSpec(w.shape, lambda b: (0, 0)) for w in weights]
    out_specs = (pl.BlockSpec((BT, S, Dp), lambda b: (b, 0, 0)),
                 pl.BlockSpec((BT, Hp), lambda b: (b, 0)))
    out_shape = (jax.ShapeDtypeStruct((Bp, S, Dp), jnp.float32),
                 jax.ShapeDtypeStruct((Bp, Hp), jnp.float32))
    scratch_shapes = [pltpu.VMEM((R, Hp), jnp.float32) for _ in range(2)]   # a, b/h

    block_bytes = 4 * S * BT * Dp * 4 + 2 * BT * Hp * 4 + 2 * weight_bytes
    vmem_limit = int(min(max(block_bytes + 2 * R * Hp * 4 + (8 << 20), 32 << 20),
                         budget + (16 << 20)))

    out_p, last = pl.pallas_call(
        kernel,
        out_shape=out_shape,
        grid=grid,
        in_specs=[x_spec] + w_specs,
        out_specs=out_specs,
        scratch_shapes=scratch_shapes,
        compiler_params=pltpu.CompilerParams(
            dimension_semantics=("parallel",),
            vmem_limit_bytes=vmem_limit),
    )(x_p, *weights)

    x_out = out_p[:B, :, :Din]                    # (B, S, Din); padded lanes/rows are 0
    last_hidden = last[:B, :H].reshape(B, 1, H)   # == gru_ln(h)[:, -1:, :]
    return x_out, last_hidden


def init_params(key, input_size, hidden_size):
    """Deterministic init mirroring the PyTorch module's _initialize_weights."""
    ks = jax.random.split(key, 6)

    def xavier(k, fan_in, fan_out):
        bound = (6.0 / (fan_in + fan_out)) ** 0.5
        return jax.random.uniform(k, (fan_in, fan_out), jnp.float32, -bound, bound)

    H, D = hidden_size, input_size
    ones_h = jnp.ones((1, H), jnp.float32)
    zeros_h = jnp.zeros((1, H), jnp.float32)

    # conv1d weight: torch shape (out=H, in=H, k=3), kaiming_uniform (relu)
    fan_in = H * 3
    bound = (2.0 ** 0.5) * (3.0 / fan_in) ** 0.5
    wc_torch = jax.random.uniform(ks[3], (H, H, 3), jnp.float32, -bound, bound)
    wc = jnp.transpose(wc_torch, (2, 1, 0))  # (k, in, out) so conv tap k is x @ Wc[k]

    return {
        "w1": xavier(ks[0], D, H), "b1": zeros_h,
        "ln1w": ones_h, "ln1b": zeros_h,
        "wc": wc, "bc": zeros_h,
        "clnw": ones_h, "clnb": zeros_h,
        "wz": xavier(ks[1], H, H), "bz": zeros_h,
        "wh": xavier(ks[2], H, H), "bh": zeros_h,
        "glnw": ones_h, "glnb": zeros_h,
        "w2": xavier(ks[4], D, H), "b2": zeros_h,
        "ln2w": ones_h, "ln2b": zeros_h,
        "wd": xavier(ks[5], H, D), "bd": jnp.zeros((1, D), jnp.float32),
        # dropout(p=0.0) and output_ln exist in the module but are unused in forward.
    }


if __name__ == "__main__":
    B, S, Din, H = 16, 8, 16, 32          # small shapes; BT auto-selected (8 or 16)
    key = jax.random.PRNGKey(0)
    kx, kp = jax.random.split(key)
    x = jax.random.normal(kx, (B, S, Din), jnp.float32)
    params = init_params(kp, Din, H)

    x_out, last_hidden = jax.jit(mamba_forward)(x, params)
    jax.block_until_ready((x_out, last_hidden))

    assert x_out.shape == (B, S, Din)
    assert last_hidden.shape == (B, 1, H)
    assert bool(jnp.all(jnp.isfinite(x_out))) and bool(jnp.all(jnp.isfinite(last_hidden)))
    print("KERNEL_OK")
</pallas_src>

<mosaic_0001>
module attributes {stable_mosaic.version = 11 : i64} {
  func.func @mamba_kernel(%arg0: i32, %arg1: memref<16x8x128xf32, #tpu.memory_space<vmem>>, %arg2: memref<128x256xbf16, #tpu.memory_space<vmem>>, %arg3: memref<1x256xf32, #tpu.memory_space<vmem>>, %arg4: memref<1x256xf32, #tpu.memory_space<vmem>>, %arg5: memref<1x256xf32, #tpu.memory_space<vmem>>, %arg6: memref<128x384xbf16, #tpu.memory_space<vmem>>, %arg7: memref<1x128xf32, #tpu.memory_space<vmem>>, %arg8: memref<1x128xf32, #tpu.memory_space<vmem>>, %arg9: memref<1x128xf32, #tpu.memory_space<vmem>>, %arg10: memref<128x256xbf16, #tpu.memory_space<vmem>>, %arg11: memref<1x256xf32, #tpu.memory_space<vmem>>, %arg12: memref<1x128xf32, #tpu.memory_space<vmem>>, %arg13: memref<1x128xf32, #tpu.memory_space<vmem>>, %arg14: memref<128x128xbf16, #tpu.memory_space<vmem>>, %arg15: memref<1x128xf32, #tpu.memory_space<vmem>>, %arg16: memref<16x8x128xf32, #tpu.memory_space<vmem>>, %arg17: memref<16x128xf32, #tpu.memory_space<vmem>>, %arg18: memref<128x128xf32, #tpu.memory_space<vmem>>, %arg19: memref<128x128xf32, #tpu.memory_space<vmem>>) attributes {dimension_semantics = [#tpu.dimension_semantics<parallel>], iteration_bounds = array<i64: 1>, scalar_prefetch = 0 : i64, scratch_operands = 2 : i64, tpu.core_type = #tpu.core_type<tc>, window_params = [{transform_indices = @transform_0, window_bounds = array<i64: 16, 8, 128>}, {pipeline_mode = #tpu.pipeline_mode<synchronous>, transform_indices = @transform_1, window_bounds = array<i64: 128, 256>}, {pipeline_mode = #tpu.pipeline_mode<synchronous>, transform_indices = @transform_2, window_bounds = array<i64: 1, 256>}, {pipeline_mode = #tpu.pipeline_mode<synchronous>, transform_indices = @transform_3, window_bounds = array<i64: 1, 256>}, {pipeline_mode = #tpu.pipeline_mode<synchronous>, transform_indices = @transform_4, window_bounds = array<i64: 1, 256>}, {pipeline_mode = #tpu.pipeline_mode<synchronous>, transform_indices = @transform_5, window_bounds = array<i64: 128, 384>}, {pipeline_mode = #tpu.pipeline_mode<synchronous>, transform_indices = @transform_6, window_bounds = array<i64: 1, 128>}, {pipeline_mode = #tpu.pipeline_mode<synchronous>, transform_indices = @transform_7, window_bounds = array<i64: 1, 128>}, {pipeline_mode = #tpu.pipeline_mode<synchronous>, transform_indices = @transform_8, window_bounds = array<i64: 1, 128>}, {pipeline_mode = #tpu.pipeline_mode<synchronous>, transform_indices = @transform_9, window_bounds = array<i64: 128, 256>}, {pipeline_mode = #tpu.pipeline_mode<synchronous>, transform_indices = @transform_10, window_bounds = array<i64: 1, 256>}, {pipeline_mode = #tpu.pipeline_mode<synchronous>, transform_indices = @transform_11, window_bounds = array<i64: 1, 128>}, {pipeline_mode = #tpu.pipeline_mode<synchronous>, transform_indices = @transform_12, window_bounds = array<i64: 1, 128>}, {pipeline_mode = #tpu.pipeline_mode<synchronous>, transform_indices = @transform_13, window_bounds = array<i64: 128, 128>}, {pipeline_mode = #tpu.pipeline_mode<synchronous>, transform_indices = @transform_14, window_bounds = array<i64: 1, 128>}, {transform_indices = @transform_15, window_bounds = array<i64: 16, 8, 128>}, {transform_indices = @transform_16, window_bounds = array<i64: 16, 128>}]} {
    %c0 = arith.constant 0 : index
    %c0_0 = arith.constant 0 : index
    %c0_1 = arith.constant 0 : index
    %0 = vector.load %arg1[%c0, %c0_0, %c0_1] : memref<16x8x128xf32, #tpu.memory_space<vmem>>, vector<16x8x128xf32>
    %1 = tpu.transpose %0, [1, 0, 2] : vector<16x8x128xf32> -> vector<8x16x128xf32>
    %2 = vector.shape_cast %1 : vector<8x16x128xf32> to vector<128x128xf32>
    %3 = arith.truncf %2 : vector<128x128xf32> to vector<128x128xbf16>
    %4 = tpu.iota {dimensions = array<i32: 1>} : vector<1x128xi32>
    %c32_i32 = arith.constant 32 : i32
    %5 = vector.broadcast %c32_i32 : i32 to vector<1x128xi32>
    %6 = arith.cmpi slt, %4, %5 : vector<1x128xi32>
    %c0_2 = arith.constant 0 : index
    %c0_3 = arith.constant 0 : index
    %7 = vector.load %arg2[%c0_2, %c0_3] : memref<128x256xbf16, #tpu.memory_space<vmem>>, vector<128x256xbf16>
    %cst = arith.constant dense<0.000000e+00> : vector<128x256xf32>
    %8 = tpu.matmul %3, %7, %cst {dimension_numbers = #tpu.dot_dimension_numbers<[1], [0], [0], [1], [0, 0, 1, 1], [], []>} : vector<128x128xbf16>, vector<128x256xbf16>, vector<128x256xf32> -> vector<128x256xf32>
    %c0_4 = arith.constant 0 : index
    %c0_5 = arith.constant 0 : index
    %9 = vector.load %arg3[%c0_4, %c0_5] : memref<1x256xf32, #tpu.memory_space<vmem>>, vector<1x256xf32>
    %10 = vector.broadcast %9 : vector<1x256xf32> to vector<128x256xf32>
    %11 = arith.addf %8, %10 : vector<128x256xf32>
    %12 = vector.extract_strided_slice %11 {offsets = [0, 0], sizes = [128, 128], strides = [1, 1]} : vector<128x256xf32> to vector<128x128xf32>
    %c0_6 = arith.constant 0 : index
    %c0_7 = arith.constant 0 : index
    %13 = vector.load %arg4[%c0_6, %c0_7] : memref<1x256xf32, #tpu.memory_space<vmem>>, vector<1x128xf32>
    %c0_8 = arith.constant 0 : index
    %c0_9 = arith.constant 0 : index
    %14 = vector.load %arg5[%c0_8, %c0_9] : memref<1x256xf32, #tpu.memory_space<vmem>>, vector<1x128xf32>
    %cst_10 = arith.constant dense<0.000000e+00> : vector<128xf32>
    %15 = vector.multi_reduction <add>, %12, %cst_10 [1] : vector<128x128xf32> to vector<128xf32>
    %16 = vector.shape_cast %15 : vector<128xf32> to vector<128x1xf32>
    %cst_11 = arith.constant 3.125000e-02 : f32
    %17 = vector.broadcast %cst_11 : f32 to vector<128x1xf32>
    %18 = arith.mulf %16, %17 : vector<128x1xf32>
    %19 = arith.mulf %12, %12 : vector<128x128xf32>
    %cst_12 = arith.constant dense<0.000000e+00> : vector<128xf32>
    %20 = vector.multi_reduction <add>, %19, %cst_12 [1] : vector<128x128xf32> to vector<128xf32>
    %21 = vector.shape_cast %20 : vector<128xf32> to vector<128x1xf32>
    %cst_13 = arith.constant 3.125000e-02 : f32
    %22 = vector.broadcast %cst_13 : f32 to vector<128x1xf32>
    %23 = arith.mulf %21, %22 : vector<128x1xf32>
    %24 = arith.mulf %18, %18 : vector<128x1xf32>
    %25 = arith.subf %23, %24 : vector<128x1xf32>
    %cst_14 = arith.constant 0.000000e+00 : f32
    %26 = vector.broadcast %cst_14 : f32 to vector<128x1xf32>
    %27 = arith.maximumf %25, %26 : vector<128x1xf32>
    %28 = vector.broadcast %18 : vector<128x1xf32> to vector<128x128xf32>
    %29 = arith.subf %12, %28 : vector<128x128xf32>
    %cst_15 = arith.constant 9.99999974E-6 : f32
    %30 = vector.broadcast %cst_15 : f32 to vector<128x1xf32>
    %31 = arith.addf %27, %30 : vector<128x1xf32>
    %32 = math.rsqrt %31 : vector<128x1xf32>
    %33 = vector.broadcast %32 : vector<128x1xf32> to vector<128x128xf32>
    %34 = arith.mulf %29, %33 : vector<128x128xf32>
    %35 = vector.broadcast %13 : vector<1x128xf32> to vector<128x128xf32>
    %36 = arith.mulf %34, %35 : vector<128x128xf32>
    %37 = vector.broadcast %14 : vector<1x128xf32> to vector<128x128xf32>
    %38 = arith.addf %36, %37 : vector<128x128xf32>
    %39 = vector.extract_strided_slice %11 {offsets = [0, 128], sizes = [128, 128], strides = [1, 1]} : vector<128x256xf32> to vector<128x128xf32>
    %c0_16 = arith.constant 0 : index
    %c128 = arith.constant 128 : index
    %40 = vector.load %arg4[%c0_16, %c128] : memref<1x256xf32, #tpu.memory_space<vmem>>, vector<1x128xf32>
    %c0_17 = arith.constant 0 : index
    %c128_18 = arith.constant 128 : index
    %41 = vector.load %arg5[%c0_17, %c128_18] : memref<1x256xf32, #tpu.memory_space<vmem>>, vector<1x128xf32>
    %cst_19 = arith.constant dense<0.000000e+00> : vector<128xf32>
    %42 = vector.multi_reduction <add>, %39, %cst_19 [1] : vector<128x128xf32> to vector<128xf32>
    %43 = vector.shape_cast %42 : vector<128xf32> to vector<128x1xf32>
    %cst_20 = arith.constant 3.125000e-02 : f32
    %44 = vector.broadcast %cst_20 : f32 to vector<128x1xf32>
    %45 = arith.mulf %43, %44 : vector<128x1xf32>
    %46 = arith.mulf %39, %39 : vector<128x128xf32>
    %cst_21 = arith.constant dense<0.000000e+00> : vector<128xf32>
    %47 = vector.multi_reduction <add>, %46, %cst_21 [1] : vector<128x128xf32> to vector<128xf32>
    %48 = vector.shape_cast %47 : vector<128xf32> to vector<128x1xf32>
    %cst_22 = arith.constant 3.125000e-02 : f32
    %49 = vector.broadcast %cst_22 : f32 to vector<128x1xf32>
    %50 = arith.mulf %48, %49 : vector<128x1xf32>
    %51 = arith.mulf %45, %45 : vector<128x1xf32>
    %52 = arith.subf %50, %51 : vector<128x1xf32>
    %cst_23 = arith.constant 0.000000e+00 : f32
    %53 = vector.broadcast %cst_23 : f32 to vector<128x1xf32>
    %54 = arith.maximumf %52, %53 : vector<128x1xf32>
    %55 = vector.broadcast %45 : vector<128x1xf32> to vector<128x128xf32>
    %56 = arith.subf %39, %55 : vector<128x128xf32>
    %cst_24 = arith.constant 9.99999974E-6 : f32
    %57 = vector.broadcast %cst_24 : f32 to vector<128x1xf32>
    %58 = arith.addf %54, %57 : vector<128x1xf32>
    %59 = math.rsqrt %58 : vector<128x1xf32>
    %60 = vector.broadcast %59 : vector<128x1xf32> to vector<128x128xf32>
    %61 = arith.mulf %56, %60 : vector<128x128xf32>
    %62 = vector.broadcast %40 : vector<1x128xf32> to vector<128x128xf32>
    %63 = arith.mulf %61, %62 : vector<128x128xf32>
    %64 = vector.broadcast %41 : vector<1x128xf32> to vector<128x128xf32>
    %65 = arith.addf %63, %64 : vector<128x128xf32>
    %66 = arith.truncf %65 : vector<128x128xf32> to vector<128x128xbf16>
    %67 = arith.negf %66 : vector<128x128xbf16>
    %68 = math.exp %67 : vector<128x128xbf16>
    %cst_25 = arith.constant 1.000000e+00 : bf16
    %69 = vector.broadcast %cst_25 : bf16 to vector<128x128xbf16>
    %70 = arith.addf %69, %68 : vector<128x128xbf16>
    %71 = arith.divf %69, %70 : vector<128x128xbf16>
    %72 = arith.extf %71 : vector<128x128xbf16> to vector<128x128xf32>
    %73 = arith.mulf %65, %72 : vector<128x128xf32>
    %74 = arith.truncf %38 : vector<128x128xf32> to vector<128x128xbf16>
    %c0_26 = arith.constant 0 : index
    %c0_27 = arith.constant 0 : index
    %75 = vector.load %arg6[%c0_26, %c0_27] : memref<128x384xbf16, #tpu.memory_space<vmem>>, vector<128x384xbf16>
    %cst_28 = arith.constant dense<0.000000e+00> : vector<128x384xf32>
    %76 = tpu.matmul %74, %75, %cst_28 {dimension_numbers = #tpu.dot_dimension_numbers<[1], [0], [0], [1], [0, 0, 1, 1], [], []>} : vector<128x128xbf16>, vector<128x384xbf16>, vector<128x384xf32> -> vector<128x384xf32>
    %77 = tpu.iota {dimensions = array<i32: 0>} : vector<128x1xi32>
    %c16_i32 = arith.constant 16 : i32
    %78 = vector.broadcast %c16_i32 : i32 to vector<128x1xi32>
    %79 = arith.cmpi sge, %77, %78 : vector<128x1xi32>
    %80 = vector.extract_strided_slice %76 {offsets = [0, 0], sizes = [128, 128], strides = [1, 1]} : vector<128x384xf32> to vector<128x128xf32>
    %c16_i32_29 = arith.constant 16 : i32
    %81 = tpu.dynamic_rotate %80 by %c16_i32_29 dim 0 : vector<128x128xf32>, i32 -> vector<128x128xf32>
    %cst_30 = arith.constant 0.000000e+00 : f32
    %82 = vector.shape_cast %79 : vector<128x1xi1> to vector<128x1xi1>
    %83 = vector.broadcast %82 : vector<128x1xi1> to vector<128x128xi1>
    %84 = vector.broadcast %cst_30 : f32 to vector<128x128xf32>
    %85 = arith.select %83, %81, %84 : vector<128x128xi1>, vector<128x128xf32>
    %c112_i32 = arith.constant 112 : i32
    %86 = vector.broadcast %c112_i32 : i32 to vector<128x1xi32>
    %87 = arith.cmpi slt, %77, %86 : vector<128x1xi32>
    %88 = vector.extract_strided_slice %76 {offsets = [0, 256], sizes = [128, 128], strides = [1, 1]} : vector<128x384xf32> to vector<128x128xf32>
    %c112_i32_31 = arith.constant 112 : i32
    %89 = tpu.dynamic_rotate %88 by %c112_i32_31 dim 0 : vector<128x128xf32>, i32 -> vector<128x128xf32>
    %cst_32 = arith.constant 0.000000e+00 : f32
    %90 = vector.shape_cast %87 : vector<128x1xi1> to vector<128x1xi1>
    %91 = vector.broadcast %90 : vector<128x1xi1> to vector<128x128xi1>
    %92 = vector.broadcast %cst_32 : f32 to vector<128x128xf32>
    %93 = arith.select %91, %89, %92 : vector<128x128xi1>, vector<128x128xf32>
    %94 = vector.extract_strided_slice %76 {offsets = [0, 128], sizes = [128, 128], strides = [1, 1]} : vector<128x384xf32> to vector<128x128xf32>
    %95 = arith.addf %85, %94 : vector<128x128xf32>
    %96 = arith.addf %95, %93 : vector<128x128xf32>
    %c0_33 = arith.constant 0 : index
    %c0_34 = arith.constant 0 : index
    %97 = vector.load %arg7[%c0_33, %c0_34] : memref<1x128xf32, #tpu.memory_space<vmem>>, vector<1x128xf32>
    %98 = vector.broadcast %97 : vector<1x128xf32> to vector<128x128xf32>
    %99 = arith.addf %96, %98 : vector<128x128xf32>
    %c0_35 = arith.constant 0 : index
    %c0_36 = arith.constant 0 : index
    %100 = vector.load %arg8[%c0_35, %c0_36] : memref<1x128xf32, #tpu.memory_space<vmem>>, vector<1x128xf32>
    %c0_37 = arith.constant 0 : index
    %c0_38 = arith.constant 0 : index
    %101 = vector.load %arg9[%c0_37, %c0_38] : memref<1x128xf32, #tpu.memory_space<vmem>>, vector<1x128xf32>
    %cst_39 = arith.constant dense<0.000000e+00> : vector<128xf32>
    %102 = vector.multi_reduction <add>, %99, %cst_39 [1] : vector<128x128xf32> to vector<128xf32>
    %103 = vector.shape_cast %102 : vector<128xf32> to vector<128x1xf32>
    %cst_40 = arith.constant 3.125000e-02 : f32
    %104 = vector.broadcast %cst_40 : f32 to vector<128x1xf32>
    %105 = arith.mulf %103, %104 : vector<128x1xf32>
    %106 = arith.mulf %99, %99 : vector<128x128xf32>
    %cst_41 = arith.constant dense<0.000000e+00> : vector<128xf32>
    %107 = vector.multi_reduction <add>, %106, %cst_41 [1] : vector<128x128xf32> to vector<128xf32>
    %108 = vector.shape_cast %107 : vector<128xf32> to vector<128x1xf32>
    %cst_42 = arith.constant 3.125000e-02 : f32
    %109 = vector.broadcast %cst_42 : f32 to vector<128x1xf32>
    %110 = arith.mulf %108, %109 : vector<128x1xf32>
    %111 = arith.mulf %105, %105 : vector<128x1xf32>
    %112 = arith.subf %110, %111 : vector<128x1xf32>
    %cst_43 = arith.constant 0.000000e+00 : f32
    %113 = vector.broadcast %cst_43 : f32 to vector<128x1xf32>
    %114 = arith.maximumf %112, %113 : vector<128x1xf32>
    %115 = vector.broadcast %105 : vector<128x1xf32> to vector<128x128xf32>
    %116 = arith.subf %99, %115 : vector<128x128xf32>
    %cst_44 = arith.constant 9.99999974E-6 : f32
    %117 = vector.broadcast %cst_44 : f32 to vector<128x1xf32>
    %118 = arith.addf %114, %117 : vector<128x1xf32>
    %119 = math.rsqrt %118 : vector<128x1xf32>
    %120 = vector.broadcast %119 : vector<128x1xf32> to vector<128x128xf32>
    %121 = arith.mulf %116, %120 : vector<128x128xf32>
    %122 = vector.broadcast %100 : vector<1x128xf32> to vector<128x128xf32>
    %123 = arith.mulf %121, %122 : vector<128x128xf32>
    %124 = vector.broadcast %101 : vector<1x128xf32> to vector<128x128xf32>
    %125 = arith.addf %123, %124 : vector<128x128xf32>
    %126 = arith.truncf %125 : vector<128x128xf32> to vector<128x128xbf16>
    %127 = arith.negf %126 : vector<128x128xbf16>
    %128 = math.exp %127 : vector<128x128xbf16>
    %cst_45 = arith.constant 1.000000e+00 : bf16
    %129 = vector.broadcast %cst_45 : bf16 to vector<128x128xbf16>
    %130 = arith.addf %129, %128 : vector<128x128xbf16>
    %131 = arith.divf %129, %130 : vector<128x128xbf16>
    %132 = arith.extf %131 : vector<128x128xbf16> to vector<128x128xf32>
    %133 = arith.mulf %125, %132 : vector<128x128xf32>
    %134 = arith.truncf %133 : vector<128x128xf32> to vector<128x128xbf16>
    %c0_46 = arith.constant 0 : index
    %c0_47 = arith.constant 0 : index
    %135 = vector.load %arg10[%c0_46, %c0_47] : memref<128x256xbf16, #tpu.memory_space<vmem>>, vector<128x256xbf16>
    %cst_48 = arith.constant dense<0.000000e+00> : vector<128x256xf32>
    %136 = tpu.matmul %134, %135, %cst_48 {dimension_numbers = #tpu.dot_dimension_numbers<[1], [0], [0], [1], [0, 0, 1, 1], [], []>} : vector<128x128xbf16>, vector<128x256xbf16>, vector<128x256xf32> -> vector<128x256xf32>
    %c0_49 = arith.constant 0 : index
    %c0_50 = arith.constant 0 : index
    %137 = vector.load %arg11[%c0_49, %c0_50] : memref<1x256xf32, #tpu.memory_space<vmem>>, vector<1x256xf32>
    %138 = vector.broadcast %137 : vector<1x256xf32> to vector<128x256xf32>
    %139 = arith.addf %136, %138 : vector<128x256xf32>
    %140 = vector.extract_strided_slice %139 {offsets = [0, 0], sizes = [128, 128], strides = [1, 1]} : vector<128x256xf32> to vector<128x128xf32>
    %141 = arith.truncf %140 : vector<128x128xf32> to vector<128x128xbf16>
    %142 = arith.negf %141 : vector<128x128xbf16>
    %143 = math.exp %142 : vector<128x128xbf16>
    %cst_51 = arith.constant 1.000000e+00 : bf16
    %144 = vector.broadcast %cst_51 : bf16 to vector<128x128xbf16>
    %145 = arith.addf %144, %143 : vector<128x128xbf16>
    %146 = arith.divf %144, %145 : vector<128x128xbf16>
    %147 = arith.extf %146 : vector<128x128xbf16> to vector<128x128xf32>
    %148 = vector.extract_strided_slice %139 {offsets = [0, 128], sizes = [128, 128], strides = [1, 1]} : vector<128x256xf32> to vector<128x128xf32>
    %cst_52 = arith.constant 0.000000e+00 : f32
    %149 = vector.broadcast %cst_52 : f32 to vector<128x128xf32>
    %150 = arith.cmpf oge, %148, %149 : vector<128x128xf32>
    %cst_53 = arith.constant 5.000000e-01 : f32
    %151 = vector.broadcast %cst_53 : f32 to vector<128x128xf32>
    %152 = arith.addf %148, %151 : vector<128x128xf32>
    %153 = arith.truncf %148 : vector<128x128xf32> to vector<128x128xbf16>
    %154 = arith.negf %153 : vector<128x128xbf16>
    %155 = math.exp %154 : vector<128x128xbf16>
    %cst_54 = arith.constant 1.000000e+00 : bf16
    %156 = vector.broadcast %cst_54 : bf16 to vector<128x128xbf16>
    %157 = arith.addf %156, %155 : vector<128x128xbf16>
    %158 = arith.divf %156, %157 : vector<128x128xbf16>
    %159 = arith.extf %158 : vector<128x128xbf16> to vector<128x128xf32>
    %160 = arith.select %150, %152, %159 : vector<128x128xi1>, vector<128x128xf32>
    %cst_55 = arith.constant 0.000000e+00 : f32
    %161 = vector.shape_cast %6 : vector<1x128xi1> to vector<1x128xi1>
    %162 = vector.broadcast %161 : vector<1x128xi1> to vector<128x128xi1>
    %163 = vector.broadcast %cst_55 : f32 to vector<128x128xf32>
    %164 = arith.select %162, %160, %163 : vector<128x128xi1>, vector<128x128xf32>
    %cst_56 = arith.constant 1.000000e+00 : f32
    %165 = vector.broadcast %cst_56 : f32 to vector<128x128xf32>
    %166 = arith.subf %165, %147 : vector<128x128xf32>
    %c0_57 = arith.constant 0 : index
    %c0_58 = arith.constant 0 : index
    %167 = vector.load %arg18[%c0_57, %c0_58] : memref<128x128xf32, #tpu.memory_space<vmem>>, vector<128x128xf32>
    tpu.vector_store %arg18[%c0_57, %c0_58], %166 {strides = array<i32>} : memref<128x128xf32, #tpu.memory_space<vmem>>, vector<128x128xf32>,
    %168 = arith.mulf %147, %164 : vector<128x128xf32>
    %c0_59 = arith.constant 0 : index
    %c0_60 = arith.constant 0 : index
    %169 = vector.load %arg19[%c0_59, %c0_60] : memref<128x128xf32, #tpu.memory_space<vmem>>, vector<128x128xf32>
    tpu.vector_store %arg19[%c0_59, %c0_60], %168 {strides = array<i32>} : memref<128x128xf32, #tpu.memory_space<vmem>>, vector<128x128xf32>,
    %170 = vector.shape_cast %6 : vector<1x128xi1> to vector<1x128xi1>
    %171 = vector.broadcast %170 : vector<1x128xi1> to vector<16x128xi1>
    %cst_61 = arith.constant 5.000000e-01 : f32
    %cst_62 = arith.constant 0.000000e+00 : f32
    %172 = vector.broadcast %cst_61 : f32 to vector<16x128xf32>
    %173 = vector.broadcast %cst_62 : f32 to vector<16x128xf32>
    %174 = arith.select %171, %172, %173 : vector<16x128xi1>, vector<16x128xf32>
    %c0_i32 = arith.constant 0 : i32
    %c16_i32_63 = arith.constant 16 : i32
    %175 = arith.muli %c0_i32, %c16_i32_63 : i32
    %176 = tpu.assume_multiple %175, 16 : i32
    %177 = arith.index_cast %176 : i32 to index
    %c0_64 = arith.constant 0 : index
    %178 = vector.load %arg18[%177, %c0_64] : memref<128x128xf32, #tpu.memory_space<vmem>>, vector<16x128xf32>
    %179 = arith.mulf %178, %174 : vector<16x128xf32>
    %180 = arith.index_cast %176 : i32 to index
    %c0_65 = arith.constant 0 : index
    %181 = vector.load %arg19[%180, %c0_65] : memref<128x128xf32, #tpu.memory_space<vmem>>, vector<16x128xf32>
    %182 = arith.addf %179, %181 : vector<16x128xf32>
    %183 = arith.index_cast %176 : i32 to index
    %c0_66 = arith.constant 0 : index
    %184 = vector.load %arg19[%183, %c0_66] : memref<128x128xf32, #tpu.memory_space<vmem>>, vector<16x128xf32>
    tpu.vector_store %arg19[%183, %c0_66], %182 {strides = array<i32>} : memref<128x128xf32, #tpu.memory_space<vmem>>, vector<16x128xf32>,
    %c1_i32 = arith.constant 1 : i32
    %c16_i32_67 = arith.constant 16 : i32
    %185 = arith.muli %c1_i32, %c16_i32_67 : i32
    %186 = tpu.assume_multiple %185, 16 : i32
    %187 = arith.index_cast %186 : i32 to index
    %c0_68 = arith.constant 0 : index
    %188 = vector.load %arg18[%187, %c0_68] : memref<128x128xf32, #tpu.memory_space<vmem>>, vector<16x128xf32>
    %189 = arith.mulf %188, %182 : vector<16x128xf32>
    %190 = arith.index_cast %186 : i32 to index
    %c0_69 = arith.constant 0 : index
    %191 = vector.load %arg19[%190, %c0_69] : memref<128x128xf32, #tpu.memory_space<vmem>>, vector<16x128xf32>
    %192 = arith.addf %189, %191 : vector<16x128xf32>
    %193 = arith.index_cast %186 : i32 to index
    %c0_70 = arith.constant 0 : index
    %194 = vector.load %arg19[%193, %c0_70] : memref<128x128xf32, #tpu.memory_space<vmem>>, vector<16x128xf32>
    tpu.vector_store %arg19[%193, %c0_70], %192 {strides = array<i32>} : memref<128x128xf32, #tpu.memory_space<vmem>>, vector<16x128xf32>,
    %c2_i32 = arith.constant 2 : i32
    %c16_i32_71 = arith.constant 16 : i32
    %195 = arith.muli %c2_i32, %c16_i32_71 : i32
    %196 = tpu.assume_multiple %195, 16 : i32
    %197 = arith.index_cast %196 : i32 to index
    %c0_72 = arith.constant 0 : index
    %198 = vector.load %arg18[%197, %c0_72] : memref<128x128xf32, #tpu.memory_space<vmem>>, vector<16x128xf32>
    %199 = arith.mulf %198, %192 : vector<16x128xf32>
    %200 = arith.index_cast %196 : i32 to index
    %c0_73 = arith.constant 0 : index
    %201 = vector.load %arg19[%200, %c0_73] : memref<128x128xf32, #tpu.memory_space<vmem>>, vector<16x128xf32>
    %202 = arith.addf %199, %201 : vector<16x128xf32>
    %203 = arith.index_cast %196 : i32 to index
    %c0_74 = arith.constant 0 : index
    %204 = vector.load %arg19[%203, %c0_74] : memref<128x128xf32, #tpu.memory_space<vmem>>, vector<16x128xf32>
    tpu.vector_store %arg19[%203, %c0_74], %202 {strides = array<i32>} : memref<128x128xf32, #tpu.memory_space<vmem>>, vector<16x128xf32>,
    %c3_i32 = arith.constant 3 : i32
    %c16_i32_75 = arith.constant 16 : i32
    %205 = arith.muli %c3_i32, %c16_i32_75 : i32
    %206 = tpu.assume_multiple %205, 16 : i32
    %207 = arith.index_cast %206 : i32 to index
    %c0_76 = arith.constant 0 : index
    %208 = vector.load %arg18[%207, %c0_76] : memref<128x128xf32, #tpu.memory_space<vmem>>, vector<16x128xf32>
    %209 = arith.mulf %208, %202 : vector<16x128xf32>
    %210 = arith.index_cast %206 : i32 to index
    %c0_77 = arith.constant 0 : index
    %211 = vector.load %arg19[%210, %c0_77] : memref<128x128xf32, #tpu.memory_space<vmem>>, vector<16x128xf32>
    %212 = arith.addf %209, %211 : vector<16x128xf32>
    %213 = arith.index_cast %206 : i32 to index
    %c0_78 = arith.constant 0 : index
    %214 = vector.load %arg19[%213, %c0_78] : memref<128x128xf32, #tpu.memory_space<vmem>>, vector<16x128xf32>
    tpu.vector_store %arg19[%213, %c0_78], %212 {strides = array<i32>} : memref<128x128xf32, #tpu.memory_space<vmem>>, vector<16x128xf32>,
    %c4_i32 = arith.constant 4 : i32
    %c16_i32_79 = arith.constant 16 : i32
    %215 = arith.muli %c4_i32, %c16_i32_79 : i32
    %216 = tpu.assume_multiple %215, 16 : i32
    %217 = arith.index_cast %216 : i32 to index
    %c0_80 = arith.constant 0 : index
    %218 = vector.load %arg18[%217, %c0_80] : memref<128x128xf32, #tpu.memory_space<vmem>>, vector<16x128xf32>
    %219 = arith.mulf %218, %212 : vector<16x128xf32>
    %220 = arith.index_cast %216 : i32 to index
    %c0_81 = arith.constant 0 : index
    %221 = vector.load %arg19[%220, %c0_81] : memref<128x128xf32, #tpu.memory_space<vmem>>, vector<16x128xf32>
    %222 = arith.addf %219, %221 : vector<16x128xf32>
    %223 = arith.index_cast %216 : i32 to index
    %c0_82 = arith.constant 0 : index
    %224 = vector.load %arg19[%223, %c0_82] : memref<128x128xf32, #tpu.memory_space<vmem>>, vector<16x128xf32>
    tpu.vector_store %arg19[%223, %c0_82], %222 {strides = array<i32>} : memref<128x128xf32, #tpu.memory_space<vmem>>, vector<16x128xf32>,
    %c5_i32 = arith.constant 5 : i32
    %c16_i32_83 = arith.constant 16 : i32
    %225 = arith.muli %c5_i32, %c16_i32_83 : i32
    %226 = tpu.assume_multiple %225, 16 : i32
    %227 = arith.index_cast %226 : i32 to index
    %c0_84 = arith.constant 0 : index
    %228 = vector.load %arg18[%227, %c0_84] : memref<128x128xf32, #tpu.memory_space<vmem>>, vector<16x128xf32>
    %229 = arith.mulf %228, %222 : vector<16x128xf32>
    %230 = arith.index_cast %226 : i32 to index
    %c0_85 = arith.constant 0 : index
    %231 = vector.load %arg19[%230, %c0_85] : memref<128x128xf32, #tpu.memory_space<vmem>>, vector<16x128xf32>
    %232 = arith.addf %229, %231 : vector<16x128xf32>
    %233 = arith.index_cast %226 : i32 to index
    %c0_86 = arith.constant 0 : index
    %234 = vector.load %arg19[%233, %c0_86] : memref<128x128xf32, #tpu.memory_space<vmem>>, vector<16x128xf32>
    tpu.vector_store %arg19[%233, %c0_86], %232 {strides = array<i32>} : memref<128x128xf32, #tpu.memory_space<vmem>>, vector<16x128xf32>,
    %c6_i32 = arith.constant 6 : i32
    %c16_i32_87 = arith.constant 16 : i32
    %235 = arith.muli %c6_i32, %c16_i32_87 : i32
    %236 = tpu.assume_multiple %235, 16 : i32
    %237 = arith.index_cast %236 : i32 to index
    %c0_88 = arith.constant 0 : index
    %238 = vector.load %arg18[%237, %c0_88] : memref<128x128xf32, #tpu.memory_space<vmem>>, vector<16x128xf32>
    %239 = arith.mulf %238, %232 : vector<16x128xf32>
    %240 = arith.index_cast %236 : i32 to index
    %c0_89 = arith.constant 0 : index
    %241 = vector.load %arg19[%240, %c0_89] : memref<128x128xf32, #tpu.memory_space<vmem>>, vector<16x128xf32>
    %242 = arith.addf %239, %241 : vector<16x128xf32>
    %243 = arith.index_cast %236 : i32 to index
    %c0_90 = arith.constant 0 : index
    %244 = vector.load %arg19[%243, %c0_90] : memref<128x128xf32, #tpu.memory_space<vmem>>, vector<16x128xf32>
    tpu.vector_store %arg19[%243, %c0_90], %242 {strides = array<i32>} : memref<128x128xf32, #tpu.memory_space<vmem>>, vector<16x128xf32>,
    %c7_i32 = arith.constant 7 : i32
    %c16_i32_91 = arith.constant 16 : i32
    %245 = arith.muli %c7_i32, %c16_i32_91 : i32
    %246 = tpu.assume_multiple %245, 16 : i32
    %247 = arith.index_cast %246 : i32 to index
    %c0_92 = arith.constant 0 : index
    %248 = vector.load %arg18[%247, %c0_92] : memref<128x128xf32, #tpu.memory_space<vmem>>, vector<16x128xf32>
    %249 = arith.mulf %248, %242 : vector<16x128xf32>
    %250 = arith.index_cast %246 : i32 to index
    %c0_93 = arith.constant 0 : index
    %251 = vector.load %arg19[%250, %c0_93] : memref<128x128xf32, #tpu.memory_space<vmem>>, vector<16x128xf32>
    %252 = arith.addf %249, %251 : vector<16x128xf32>
    %253 = arith.index_cast %246 : i32 to index
    %c0_94 = arith.constant 0 : index
    %254 = vector.load %arg19[%253, %c0_94] : memref<128x128xf32, #tpu.memory_space<vmem>>, vector<16x128xf32>
    tpu.vector_store %arg19[%253, %c0_94], %252 {strides = array<i32>} : memref<128x128xf32, #tpu.memory_space<vmem>>, vector<16x128xf32>,
    %c8_i32 = arith.constant 8 : i32
    %c0_95 = arith.constant 0 : index
    %c0_96 = arith.constant 0 : index
    %255 = vector.load %arg19[%c0_95, %c0_96] : memref<128x128xf32, #tpu.memory_space<vmem>>, vector<128x128xf32>
    %c0_97 = arith.constant 0 : index
    %c0_98 = arith.constant 0 : index
    %256 = vector.load %arg12[%c0_97, %c0_98] : memref<1x128xf32, #tpu.memory_space<vmem>>, vector<1x128xf32>
    %c0_99 = arith.constant 0 : index
    %c0_100 = arith.constant 0 : index
    %257 = vector.load %arg13[%c0_99, %c0_100] : memref<1x128xf32, #tpu.memory_space<vmem>>, vector<1x128xf32>
    %cst_101 = arith.constant dense<0.000000e+00> : vector<128xf32>
    %258 = vector.multi_reduction <add>, %255, %cst_101 [1] : vector<128x128xf32> to vector<128xf32>
    %259 = vector.shape_cast %258 : vector<128xf32> to vector<128x1xf32>
    %cst_102 = arith.constant 3.125000e-02 : f32
    %260 = vector.broadcast %cst_102 : f32 to vector<128x1xf32>
    %261 = arith.mulf %259, %260 : vector<128x1xf32>
    %262 = arith.mulf %255, %255 : vector<128x128xf32>
    %cst_103 = arith.constant dense<0.000000e+00> : vector<128xf32>
    %263 = vector.multi_reduction <add>, %262, %cst_103 [1] : vector<128x128xf32> to vector<128xf32>
    %264 = vector.shape_cast %263 : vector<128xf32> to vector<128x1xf32>
    %cst_104 = arith.constant 3.125000e-02 : f32
    %265 = vector.broadcast %cst_104 : f32 to vector<128x1xf32>
    %266 = arith.mulf %264, %265 : vector<128x1xf32>
    %267 = arith.mulf %261, %261 : vector<128x1xf32>
    %268 = arith.subf %266, %267 : vector<128x1xf32>
    %cst_105 = arith.constant 0.000000e+00 : f32
    %269 = vector.broadcast %cst_105 : f32 to vector<128x1xf32>
    %270 = arith.maximumf %268, %269 : vector<128x1xf32>
    %271 = vector.broadcast %261 : vector<128x1xf32> to vector<128x128xf32>
    %272 = arith.subf %255, %271 : vector<128x128xf32>
    %cst_106 = arith.constant 9.99999974E-6 : f32
    %273 = vector.broadcast %cst_106 : f32 to vector<128x1xf32>
    %274 = arith.addf %270, %273 : vector<128x1xf32>
    %275 = math.rsqrt %274 : vector<128x1xf32>
    %276 = vector.broadcast %275 : vector<128x1xf32> to vector<128x128xf32>
    %277 = arith.mulf %272, %276 : vector<128x128xf32>
    %278 = vector.broadcast %256 : vector<1x128xf32> to vector<128x128xf32>
    %279 = arith.mulf %277, %278 : vector<128x128xf32>
    %280 = vector.broadcast %257 : vector<1x128xf32> to vector<128x128xf32>
    %281 = arith.addf %279, %280 : vector<128x128xf32>
    %282 = arith.mulf %281, %73 : vector<128x128xf32>
    %283 = arith.truncf %282 : vector<128x128xf32> to vector<128x128xbf16>
    %c0_107 = arith.constant 0 : index
    %c0_108 = arith.constant 0 : index
    %284 = vector.load %arg14[%c0_107, %c0_108] : memref<128x128xbf16, #tpu.memory_space<vmem>>, vector<128x128xbf16>
    %cst_109 = arith.constant dense<0.000000e+00> : vector<128x128xf32>
    %285 = tpu.matmul %283, %284, %cst_109 {dimension_numbers = #tpu.dot_dimension_numbers<[1], [0], [0], [1], [0, 0, 1, 1], [], []>} : vector<128x128xbf16>, vector<128x128xbf16>, vector<128x128xf32> -> vector<128x128xf32>
    %c0_110 = arith.constant 0 : index
    %c0_111 = arith.constant 0 : index
    %286 = vector.load %arg15[%c0_110, %c0_111] : memref<1x128xf32, #tpu.memory_space<vmem>>, vector<1x128xf32>
    %287 = vector.broadcast %286 : vector<1x128xf32> to vector<128x128xf32>
    %288 = arith.addf %285, %287 : vector<128x128xf32>
    %289 = arith.addf %288, %2 : vector<128x128xf32>
    %290 = vector.shape_cast %289 : vector<128x128xf32> to vector<8x16x128xf32>
    %291 = tpu.transpose %290, [1, 0, 2] : vector<8x16x128xf32> -> vector<16x8x128xf32>
    %c0_112 = arith.constant 0 : index
    %c0_113 = arith.constant 0 : index
    %c0_114 = arith.constant 0 : index
    %292 = vector.load %arg16[%c0_112, %c0_113, %c0_114] : memref<16x8x128xf32, #tpu.memory_space<vmem>>, vector<16x8x128xf32>
    tpu.vector_store %arg16[%c0_112, %c0_113, %c0_114], %291 {strides = array<i32>} : memref<16x8x128xf32, #tpu.memory_space<vmem>>, vector<16x8x128xf32>,
    %c0_115 = arith.constant 0 : index
    %c0_116 = arith.constant 0 : index
    %293 = vector.load %arg12[%c0_115, %c0_116] : memref<1x128xf32, #tpu.memory_space<vmem>>, vector<1x128xf32>
    %c0_117 = arith.constant 0 : index
    %c0_118 = arith.constant 0 : index
    %294 = vector.load %arg13[%c0_117, %c0_118] : memref<1x128xf32, #tpu.memory_space<vmem>>, vector<1x128xf32>
    %cst_119 = arith.constant dense<0.000000e+00> : vector<16xf32>
    %295 = vector.multi_reduction <add>, %252, %cst_119 [1] : vector<16x128xf32> to vector<16xf32>
    %296 = vector.shape_cast %295 : vector<16xf32> to vector<16x1xf32>
    %cst_120 = arith.constant 3.125000e-02 : f32
    %297 = vector.broadcast %cst_120 : f32 to vector<16x1xf32>
    %298 = arith.mulf %296, %297 : vector<16x1xf32>
    %299 = arith.mulf %252, %252 : vector<16x128xf32>
    %cst_121 = arith.constant dense<0.000000e+00> : vector<16xf32>
    %300 = vector.multi_reduction <add>, %299, %cst_121 [1] : vector<16x128xf32> to vector<16xf32>
    %301 = vector.shape_cast %300 : vector<16xf32> to vector<16x1xf32>
    %cst_122 = arith.constant 3.125000e-02 : f32
    %302 = vector.broadcast %cst_122 : f32 to vector<16x1xf32>
    %303 = arith.mulf %301, %302 : vector<16x1xf32>
    %304 = arith.mulf %298, %298 : vector<16x1xf32>
    %305 = arith.subf %303, %304 : vector<16x1xf32>
    %cst_123 = arith.constant 0.000000e+00 : f32
    %306 = vector.broadcast %cst_123 : f32 to vector<16x1xf32>
    %307 = arith.maximumf %305, %306 : vector<16x1xf32>
    %308 = vector.broadcast %298 : vector<16x1xf32> to vector<16x128xf32>
    %309 = arith.subf %252, %308 : vector<16x128xf32>
    %cst_124 = arith.constant 9.99999974E-6 : f32
    %310 = vector.broadcast %cst_124 : f32 to vector<16x1xf32>
    %311 = arith.addf %307, %310 : vector<16x1xf32>
    %312 = math.rsqrt %311 : vector<16x1xf32>
    %313 = vector.broadcast %312 : vector<16x1xf32> to vector<16x128xf32>
    %314 = arith.mulf %309, %313 : vector<16x128xf32>
    %315 = vector.broadcast %293 : vector<1x128xf32> to vector<16x128xf32>
    %316 = arith.mulf %314, %315 : vector<16x128xf32>
    %317 = vector.broadcast %294 : vector<1x128xf32> to vector<16x128xf32>
    %318 = arith.addf %316, %317 : vector<16x128xf32>
    %c0_125 = arith.constant 0 : index
    %c0_126 = arith.constant 0 : index
    %319 = vector.load %arg17[%c0_125, %c0_126] : memref<16x128xf32, #tpu.memory_space<vmem>>, vector<16x128xf32>
    tpu.vector_store %arg17[%c0_125, %c0_126], %318 {strides = array<i32>} : memref<16x128xf32, #tpu.memory_space<vmem>>, vector<16x128xf32>,
    return
  }
  func.func @transform_0(%arg0: i32) -> (i32, i32, i32) {
    %c0_i32 = arith.constant 0 : i32
    %c0_i32_0 = arith.constant 0 : i32
    %c0_i32_1 = arith.constant 0 : i32
    return %arg0, %c0_i32, %c0_i32_0 : i32, i32, i32
  }
  func.func @transform_1(%arg0: i32) -> (i32, i32) {
    %c0_i32 = arith.constant 0 : i32
    %c0_i32_0 = arith.constant 0 : i32
    %c0_i32_1 = arith.constant 0 : i32
    return %c0_i32, %c0_i32_0 : i32, i32
  }
  func.func @transform_2(%arg0: i32) -> (i32, i32) {
    %c0_i32 = arith.constant 0 : i32
    %c0_i32_0 = arith.constant 0 : i32
    %c0_i32_1 = arith.constant 0 : i32
    return %c0_i32, %c0_i32_0 : i32, i32
  }
  func.func @transform_3(%arg0: i32) -> (i32, i32) {
    %c0_i32 = arith.constant 0 : i32
    %c0_i32_0 = arith.constant 0 : i32
    %c0_i32_1 = arith.constant 0 : i32
    return %c0_i32, %c0_i32_0 : i32, i32
  }
  func.func @transform_4(%arg0: i32) -> (i32, i32) {
    %c0_i32 = arith.constant 0 : i32
    %c0_i32_0 = arith.constant 0 : i32
    %c0_i32_1 = arith.constant 0 : i32
    return %c0_i32, %c0_i32_0 : i32, i32
  }
  func.func @transform_5(%arg0: i32) -> (i32, i32) {
    %c0_i32 = arith.constant 0 : i32
    %c0_i32_0 = arith.constant 0 : i32
    %c0_i32_1 = arith.constant 0 : i32
    return %c0_i32, %c0_i32_0 : i32, i32
  }
  func.func @transform_6(%arg0: i32) -> (i32, i32) {
    %c0_i32 = arith.constant 0 : i32
    %c0_i32_0 = arith.constant 0 : i32
    %c0_i32_1 = arith.constant 0 : i32
    return %c0_i32, %c0_i32_0 : i32, i32
  }
  func.func @transform_7(%arg0: i32) -> (i32, i32) {
    %c0_i32 = arith.constant 0 : i32
    %c0_i32_0 = arith.constant 0 : i32
    %c0_i32_1 = arith.constant 0 : i32
    return %c0_i32, %c0_i32_0 : i32, i32
  }
  func.func @transform_8(%arg0: i32) -> (i32, i32) {
    %c0_i32 = arith.constant 0 : i32
    %c0_i32_0 = arith.constant 0 : i32
    %c0_i32_1 = arith.constant 0 : i32
    return %c0_i32, %c0_i32_0 : i32, i32
  }
  func.func @transform_9(%arg0: i32) -> (i32, i32) {
    %c0_i32 = arith.constant 0 : i32
    %c0_i32_0 = arith.constant 0 : i32
    %c0_i32_1 = arith.constant 0 : i32
    return %c0_i32, %c0_i32_0 : i32, i32
  }
  func.func @transform_10(%arg0: i32) -> (i32, i32) {
    %c0_i32 = arith.constant 0 : i32
    %c0_i32_0 = arith.constant 0 : i32
    %c0_i32_1 = arith.constant 0 : i32
    return %c0_i32, %c0_i32_0 : i32, i32
  }
  func.func @transform_11(%arg0: i32) -> (i32, i32) {
    %c0_i32 = arith.constant 0 : i32
    %c0_i32_0 = arith.constant 0 : i32
    %c0_i32_1 = arith.constant 0 : i32
    return %c0_i32, %c0_i32_0 : i32, i32
  }
  func.func @transform_12(%arg0: i32) -> (i32, i32) {
    %c0_i32 = arith.constant 0 : i32
    %c0_i32_0 = arith.constant 0 : i32
    %c0_i32_1 = arith.constant 0 : i32
    return %c0_i32, %c0_i32_0 : i32, i32
  }
  func.func @transform_13(%arg0: i32) -> (i32, i32) {
    %c0_i32 = arith.constant 0 : i32
    %c0_i32_0 = arith.constant 0 : i32
    %c0_i32_1 = arith.constant 0 : i32
    return %c0_i32, %c0_i32_0 : i32, i32
  }
  func.func @transform_14(%arg0: i32) -> (i32, i32) {
    %c0_i32 = arith.constant 0 : i32
    %c0_i32_0 = arith.constant 0 : i32
    %c0_i32_1 = arith.constant 0 : i32
    return %c0_i32, %c0_i32_0 : i32, i32
  }
  func.func @transform_15(%arg0: i32) -> (i32, i32, i32) {
    %c0_i32 = arith.constant 0 : i32
    %c0_i32_0 = arith.constant 0 : i32
    %c0_i32_1 = arith.constant 0 : i32
    return %arg0, %c0_i32, %c0_i32_0 : i32, i32, i32
  }
  func.func @transform_16(%arg0: i32) -> (i32, i32) {
    %c0_i32 = arith.constant 0 : i32
    %c0_i32_0 = arith.constant 0 : i32
    return %arg0, %c0_i32 : i32, i32
  }
}

</mosaic_0001>

<llo_original>
// kernel: mamba_forward.1
$region0: #{mamba_forward.1}
  #allocation0 [shape = 'u32[]', space=smem, size = 0x4, offset = 0x4, fixed_abs, tag = 'smem constant byte address 0x4 - core index']
  #allocation1 [shape = 'u32[144,128]{1,0:T(1,128)}', space=vmem, size = 0x12000, scoped, tag = 'internal scratch']
  #allocation2 [shape = 'f32[128,128]{1,0:T(8,128)}', space=vmem, size = 0x10000, scoped, tag = 'scratch operand']
  #allocation3 [shape = 'f32[128,128]{1,0:T(8,128)}', space=vmem, size = 0x10000, scoped, tag = 'scratch operand']
  %s0 = inlined_call_operand.vmem [shape: f32[16,8,128], index: 0, kind: input, shape index: {}]
  %s1 = inlined_call_operand.vmem [shape: bf16[128,256], index: 1, kind: input, shape index: {}]
  %s2 = inlined_call_operand.vmem [shape: f32[1,256], index: 2, kind: input, shape index: {}]
  %s3 = inlined_call_operand.vmem [shape: f32[1,256], index: 3, kind: input, shape index: {}]
  %s4 = inlined_call_operand.vmem [shape: f32[1,256], index: 4, kind: input, shape index: {}]
  %s5 = inlined_call_operand.vmem [shape: bf16[128,384], index: 5, kind: input, shape index: {}]
  %s6 = inlined_call_operand.vmem [shape: f32[1,128], index: 6, kind: input, shape index: {}]
  %s7 = inlined_call_operand.vmem [shape: f32[1,128], index: 7, kind: input, shape index: {}]
  %s8 = inlined_call_operand.vmem [shape: f32[1,128], index: 8, kind: input, shape index: {}]
  %s9 = inlined_call_operand.vmem [shape: bf16[128,256], index: 9, kind: input, shape index: {}]
  %s10 = inlined_call_operand.vmem [shape: f32[1,256], index: 10, kind: input, shape index: {}]
  %s11 = inlined_call_operand.vmem [shape: f32[1,128], index: 11, kind: input, shape index: {}]
  %s12 = inlined_call_operand.vmem [shape: f32[1,128], index: 12, kind: input, shape index: {}]
  %s13 = inlined_call_operand.vmem [shape: bf16[128,128], index: 13, kind: input, shape index: {}]
  %s14 = inlined_call_operand.vmem [shape: f32[1,128], index: 14, kind: input, shape index: {}]
  %s15 = inlined_call_operand.hbm [shape: f32[16,8,128], index: 15, kind: output, shape index: {0}]
  %s16 = inlined_call_operand.hbm [shape: f32[16,128], index: 16, kind: output, shape index: {1}]
  %17 = xla_tuple %s15, %s16
  %s18 = sld [smem:[#allocation0]]
  $region78: #{mamba_forward.1} parent=0
    _
  %s20 = ssub.s32 1, %s18
  %s21 = scalar_select 0, %s20, %s18
  $region1: #{mamba_forward.1} parent=0
    #allocation4 [shape = 'u8[65536]{0}', space=vmem, size = 0x10000, scoped, tag = 'output window, operand 0, single buffered']
    #allocation5 [shape = 's32[1]{0}', space=sflag, size = 0x4, scoped, tag = 'scoped memory for mamba_forward.1']
    #allocation6 [shape = 'u8[8192]{0}', space=vmem, size = 0x2000, scoped, tag = 'output window, operand 1, single buffered']
    #allocation7 [shape = 's32[1]{0}', space=sflag, size = 0x4, scoped, tag = 'scoped memory for mamba_forward.1']
    %22 = vsyncpa [#allocation5], 0
    %23 = vsyncpa [#allocation7], 0
    // Predicated region
    $region2: #{mamba_forward.1} parent=1 // pred_check
      _
    $region3: #{mamba_forward.1} parent=1 // pred_check_branch
      %25 = sbr.rel (0) target = $region5
    $region4: #{mamba_forward.1} parent=1 // pred_region
      _
    $region5: #{mamba_forward.1} parent=1 // pred_fallthru
      _
    // Predicated region
    $region6: #{mamba_forward.1} parent=1 // pred_check
      _
    $region7: #{mamba_forward.1} parent=1 // pred_check_branch
      %27 = sbr.rel (0) target = $region9
    $region8: #{mamba_forward.1} parent=1 // pred_region
      _
    $region9: #{mamba_forward.1} parent=1 // pred_fallthru
      _
    // Predicated region
    $region10: #{mamba_forward.1} parent=1 // pred_check
      _
    $region11: #{mamba_forward.1} parent=1 // pred_check_branch
      %29 = sbr.rel (0) target = $region13
    $region12: #{mamba_forward.1} parent=1 // pred_region
      _
    $region13: #{mamba_forward.1} parent=1 // pred_fallthru
      _
    // Predicated region
    $region14: #{mamba_forward.1} parent=1 // pred_check
      _
    $region15: #{mamba_forward.1} parent=1 // pred_check_branch
      %31 = sbr.rel (0) target = $region17
    $region16: #{mamba_forward.1} parent=1 // pred_region
      _
    $region17: #{mamba_forward.1} parent=1 // pred_fallthru
      _
    // Predicated region
    $region18: #{mamba_forward.1} parent=1 // pred_check
      _
    $region19: #{mamba_forward.1} parent=1 // pred_check_branch
      %33 = sbr.rel (0) target = $region21
    $region20: #{mamba_forward.1} parent=1 // pred_region
      _
    $region21: #{mamba_forward.1} parent=1 // pred_fallthru
      _
    // Predicated region
    $region22: #{mamba_forward.1} parent=1 // pred_check
      _
    $region23: #{mamba_forward.1} parent=1 // pred_check_branch
      %35 = sbr.rel (0) target = $region25
    $region24: #{mamba_forward.1} parent=1 // pred_region
      _
    $region25: #{mamba_forward.1} parent=1 // pred_fallthru
      _
    // Predicated region
    $region26: #{mamba_forward.1} parent=1 // pred_check
      _
    $region27: #{mamba_forward.1} parent=1 // pred_check_branch
      %37 = sbr.rel (0) target = $region29
    $region28: #{mamba_forward.1} parent=1 // pred_region
      _
    $region29: #{mamba_forward.1} parent=1 // pred_fallthru
      _
    // Predicated region
    $region30: #{mamba_forward.1} parent=1 // pred_check
      _
    $region31: #{mamba_forward.1} parent=1 // pred_check_branch
      %39 = sbr.rel (0) target = $region33
    $region32: #{mamba_forward.1} parent=1 // pred_region
      _
    $region33: #{mamba_forward.1} parent=1 // pred_fallthru
      _
    // Predicated region
    $region34: #{mamba_forward.1} parent=1 // pred_check
      _
    $region35: #{mamba_forward.1} parent=1 // pred_check_branch
      %41 = sbr.rel (0) target = $region37
    $region36: #{mamba_forward.1} parent=1 // pred_region
      _
    $region37: #{mamba_forward.1} parent=1 // pred_fallthru
      _
    // Predicated region
    $region38: #{mamba_forward.1} parent=1 // pred_check
      _
    $region39: #{mamba_forward.1} parent=1 // pred_check_branch
      %43 = sbr.rel (0) target = $region41
    $region40: #{mamba_forward.1} parent=1 // pred_region
      _
    $region41: #{mamba_forward.1} parent=1 // pred_fallthru
      _
    // Predicated region
    $region42: #{mamba_forward.1} parent=1 // pred_check
      _
    $region43: #{mamba_forward.1} parent=1 // pred_check_branch
      %45 = sbr.rel (0) target = $region45
    $region44: #{mamba_forward.1} parent=1 // pred_region
      _
    $region45: #{mamba_forward.1} parent=1 // pred_fallthru
      _
    // Predicated region
    $region46: #{mamba_forward.1} parent=1 // pred_check
      _
    $region47: #{mamba_forward.1} parent=1 // pred_check_branch
      %47 = sbr.rel (0) target = $region49
    $region48: #{mamba_forward.1} parent=1 // pred_region
      _
    $region49: #{mamba_forward.1} parent=1 // pred_fallthru
      _
    // Predicated region
    $region50: #{mamba_forward.1} parent=1 // pred_check
      _
    $region51: #{mamba_forward.1} parent=1 // pred_check_branch
      %49 = sbr.rel (0) target = $region53
    $region52: #{mamba_forward.1} parent=1 // pred_region
      _
    $region53: #{mamba_forward.1} parent=1 // pred_fallthru
      _
    // Predicated region
    $region54: #{mamba_forward.1} parent=1 // pred_check
      _
    $region55: #{mamba_forward.1} parent=1 // pred_check_branch
      %51 = sbr.rel (0) target = $region57
    $region56: #{mamba_forward.1} parent=1 // pred_region
      _
    $region57: #{mamba_forward.1} parent=1 // pred_fallthru
      _
    // Predicated region
    $region58: #{mamba_forward.1} parent=1 // pred_check
      _
    $region59: #{mamba_forward.1} parent=1 // pred_check_branch
      %53 = sbr.rel (0) target = $region61
    $region60: #{mamba_forward.1} parent=1 // pred_region
      _
    $region61: #{mamba_forward.1} parent=1 // pred_fallthru
      _
    %v56 = vld [vmem:[%s0] sm:$0xff]
    %v57 = vld [vmem:[%s0 + $0x8] sm:$0xff]
    %v58 = vld [vmem:[%s0 + $0x10] sm:$0xff]
    %v59 = vld [vmem:[%s0 + $0x18] sm:$0xff]
    %v60 = vld [vmem:[%s0 + $0x20] sm:$0xff]
    %v61 = vld [vmem:[%s0 + $0x28] sm:$0xff]
    %v62 = vld [vmem:[%s0 + $0x30] sm:$0xff]
    %v63 = vld [vmem:[%s0 + $0x38] sm:$0xff]
    %v64 = vld [vmem:[%s0 + $0x40] sm:$0xff]
    %v65 = vld [vmem:[%s0 + $0x48] sm:$0xff]
    %v66 = vld [vmem:[%s0 + $0x50] sm:$0xff]
    %v67 = vld [vmem:[%s0 + $0x58] sm:$0xff]
    %v68 = vld [vmem:[%s0 + $0x60] sm:$0xff]
    %v69 = vld [vmem:[%s0 + $0x68] sm:$0xff]
    %v70 = vld [vmem:[%s0 + $0x70] sm:$0xff]
    %v71 = vld [vmem:[%s0 + $0x78] sm:$0xff]
    %v72 = vcombine.low %v56, %v58
    %v73 = vcombine.high %v56, %v58
    %v75 = vunpack.c.l.s4 1983009808
    %v76 = vunpack.c.0.s8 %v75
    %v77 = vlaneseq
    %v78 = vshrl.u32 %v77, 7
    %v79 = vsub.s32 %v76, %v78
    %v80 = vrot.slane %v72, %v79
    %v82 = vunpack.c.l.s4 1983009808
    %v83 = vunpack.c.0.s8 %v82
    %v84 = vlaneseq
    %v85 = vshrl.u32 %v84, 7
    %v86 = vsub.s32 %v83, %v85
    %v87 = vrot.slane %v73, %v86
    %v88 = vcombine.low %v57, %v59
    %v89 = vcombine.high %v57, %v59
    %v91 = vunpack.c.l.s4 1983009808
    %v92 = vunpack.c.0.s8 %v91
    %v93 = vlaneseq
    %v94 = vshrl.u32 %v93, 7
    %v95 = vsub.s32 %v92, %v94
    %v96 = vrot.slane %v88, %v95
    %v98 = vunpack.c.l.s4 1983009808
    %v99 = vunpack.c.0.s8 %v98
    %v100 = vlaneseq
    %v101 = vshrl.u32 %v100, 7
    %v102 = vsub.s32 %v99, %v101
    %v103 = vrot.slane %v89, %v102
    %v104 = vcombine.low %v60, %v62
    %v105 = vcombine.high %v60, %v62
    %v107 = vunpack.c.l.s4 1983009808
    %v108 = vunpack.c.0.s8 %v107
    %v109 = vlaneseq
    %v110 = vshrl.u32 %v109, 7
    %v111 = vsub.s32 %v108, %v110
    %v112 = vrot.slane %v104, %v111
    %v114 = vunpack.c.l.s4 1983009808
    %v115 = vunpack.c.0.s8 %v114
    %v116 = vlaneseq
    %v117 = vshrl.u32 %v116, 7
    %v118 = vsub.s32 %v115, %v117
    %v119 = vrot.slane %v105, %v118
    %v120 = vcombine.low %v61, %v63
    %v121 = vcombine.high %v61, %v63
    %v123 = vunpack.c.l.s4 1983009808
    %v124 = vunpack.c.0.s8 %v123
    %v125 = vlaneseq
    %v126 = vshrl.u32 %v125, 7
    %v127 = vsub.s32 %v124, %v126
    %v128 = vrot.slane %v120, %v127
    %v130 = vunpack.c.l.s4 1983009808
    %v131 = vunpack.c.0.s8 %v130
    %v132 = vlaneseq
    %v133 = vshrl.u32 %v132, 7
    %v134 = vsub.s32 %v131, %v133
    %v135 = vrot.slane %v121, %v134
    %v136 = vcombine.low %v80, %v96
    %v137 = vcombine.high %v80, %v96
    %v139 = vunpack.c.l.s4 1934713408
    %v140 = vunpack.c.0.s8 %v139
    %v141 = vlaneseq
    %v142 = vshrl.u32 %v141, 7
    %v143 = vsub.s32 %v140, %v142
    %v144 = vrot.slane %v136, %v143
    %v146 = vunpack.c.l.s4 1934713408
    %v147 = vunpack.c.0.s8 %v146
    %v148 = vlaneseq
    %v149 = vshrl.u32 %v148, 7
    %v150 = vsub.s32 %v147, %v149
    %v151 = vrot.slane %v137, %v150
    %v152 = vcombine.low %v87, %v103
    %v153 = vcombine.high %v87, %v103
    %v155 = vunpack.c.l.s4 1934713408
    %v156 = vunpack.c.0.s8 %v155
    %v157 = vlaneseq
    %v158 = vshrl.u32 %v157, 7
    %v159 = vsub.s32 %v156, %v158
    %v160 = vrot.slane %v152, %v159
    %v162 = vunpack.c.l.s4 1934713408
    %v163 = vunpack.c.0.s8 %v162
    %v164 = vlaneseq
    %v165 = vshrl.u32 %v164, 7
    %v166 = vsub.s32 %v163, %v165
    %v167 = vrot.slane %v153, %v166
    %v168 = vcombine.low %v112, %v128
    %v169 = vcombine.high %v112, %v128
    %v171 = vunpack.c.l.s4 1934713408
    %v172 = vunpack.c.0.s8 %v171
    %v173 = vlaneseq
    %v174 = vshrl.u32 %v173, 7
    %v175 = vsub.s32 %v172, %v174
    %v176 = vrot.slane %v168, %v175
    %v178 = vunpack.c.l.s4 1934713408
    %v179 = vunpack.c.0.s8 %v178
    %v180 = vlaneseq
    %v181 = vshrl.u32 %v180, 7
    %v182 = vsub.s32 %v179, %v181
    %v183 = vrot.slane %v169, %v182
    %v184 = vcombine.low %v119, %v135
    %v185 = vcombine.high %v119, %v135
    %v187 = vunpack.c.l.s4 1934713408
    %v188 = vunpack.c.0.s8 %v187
    %v189 = vlaneseq
    %v190 = vshrl.u32 %v189, 7
    %v191 = vsub.s32 %v188, %v190
    %v192 = vrot.slane %v184, %v191
    %v194 = vunpack.c.l.s4 1934713408
    %v195 = vunpack.c.0.s8 %v194
    %v196 = vlaneseq
    %v197 = vshrl.u32 %v196, 7
    %v198 = vsub.s32 %v195, %v197
    %v199 = vrot.slane %v185, %v198
    %v200 = vcombine.low %v144, %v176
    %v201 = vcombine.high %v144, %v176
    %v202 = vcombine.low %v151, %v183
    %v203 = vcombine.high %v151, %v183
    %v204 = vcombine.low %v160, %v192
    %v205 = vcombine.high %v160, %v192
    %v206 = vcombine.low %v167, %v199
    %v207 = vcombine.high %v167, %v199
    %v208 = vcombine.low %v64, %v66
    %v209 = vcombine.high %v64, %v66
    %v211 = vunpack.c.l.s4 1983009808
    %v212 = vunpack.c.0.s8 %v211
    %v213 = vlaneseq
    %v214 = vshrl.u32 %v213, 7
    %v215 = vsub.s32 %v212, %v214
    %v216 = vrot.slane %v208, %v215
    %v218 = vunpack.c.l.s4 1983009808
    %v219 = vunpack.c.0.s8 %v218
    %v220 = vlaneseq
    %v221 = vshrl.u32 %v220, 7
    %v222 = vsub.s32 %v219, %v221
    %v223 = vrot.slane %v209, %v222
    %v224 = vcombine.low %v65, %v67
    %v225 = vcombine.high %v65, %v67
    %v227 = vunpack.c.l.s4 1983009808
    %v228 = vunpack.c.0.s8 %v227
    %v229 = vlaneseq
    %v230 = vshrl.u32 %v229, 7
    %v231 = vsub.s32 %v228, %v230
    %v232 = vrot.slane %v224, %v231
    %v234 = vunpack.c.l.s4 1983009808
    %v235 = vunpack.c.0.s8 %v234
    %v236 = vlaneseq
    %v237 = vshrl.u32 %v236, 7
    %v238 = vsub.s32 %v235, %v237
    %v239 = vrot.slane %v225, %v238
    %v240 = vcombine.low %v68, %v70
    %v241 = vcombine.high %v68, %v70
    %v243 = vunpack.c.l.s4 1983009808
    %v244 = vunpack.c.0.s8 %v243
    %v245 = vlaneseq
    %v246 = vshrl.u32 %v245, 7
    %v247 = vsub.s32 %v244, %v246
    %v248 = vrot.slane %v240, %v247
    %v250 = vunpack.c.l.s4 1983009808
    %v251 = vunpack.c.0.s8 %v250
    %v252 = vlaneseq
    %v253 = vshrl.u32 %v252, 7
    %v254 = vsub.s32 %v251, %v253
    %v255 = vrot.slane %v241, %v254
    %v256 = vcombine.low %v69, %v71
    %v257 = vcombine.high %v69, %v71
    %v259 = vunpack.c.l.s4 1983009808
    %v260 = vunpack.c.0.s8 %v259
    %v261 = vlaneseq
    %v262 = vshrl.u32 %v261, 7
    %v263 = vsub.s32 %v260, %v262
    %v264 = vrot.slane %v256, %v263
    %v266 = vunpack.c.l.s4 1983009808
    %v267 = vunpack.c.0.s8 %v266
    %v268 = vlaneseq
    %v269 = vshrl.u32 %v268, 7
    %v270 = vsub.s32 %v267, %v269
    %v271 = vrot.slane %v257, %v270
    %v272 = vcombine.low %v216, %v232
    %v273 = vcombine.high %v216, %v232
    %v275 = vunpack.c.l.s4 1934713408
    %v276 = vunpack.c.0.s8 %v275
    %v277 = vlaneseq
    %v278 = vshrl.u32 %v277, 7
    %v279 = vsub.s32 %v276, %v278
    %v280 = vrot.slane %v272, %v279
    %v282 = vunpack.c.l.s4 1934713408
    %v283 = vunpack.c.0.s8 %v282
    %v284 = vlaneseq
    %v285 = vshrl.u32 %v284, 7
    %v286 = vsub.s32 %v283, %v285
    %v287 = vrot.slane %v273, %v286
    %v288 = vcombine.low %v223, %v239
    %v289 = vcombine.high %v223, %v239
    %v291 = vunpack.c.l.s4 1934713408
    %v292 = vunpack.c.0.s8 %v291
    %v293 = vlaneseq
    %v294 = vshrl.u32 %v293, 7
    %v295 = vsub.s32 %v292, %v294
    %v296 = vrot.slane %v288, %v295
    %v298 = vunpack.c.l.s4 1934713408
    %v299 = vunpack.c.0.s8 %v298
    %v300 = vlaneseq
    %v301 = vshrl.u32 %v300, 7
    %v302 = vsub.s32 %v299, %v301
    %v303 = vrot.slane %v289, %v302
    %v304 = vcombine.low %v248, %v264
    %v305 = vcombine.high %v248, %v264
    %v307 = vunpack.c.l.s4 1934713408
    %v308 = vunpack.c.0.s8 %v307
    %v309 = vlaneseq
    %v310 = vshrl.u32 %v309, 7
    %v311 = vsub.s32 %v308, %v310
    %v312 = vrot.slane %v304, %v311
    %v314 = vunpack.c.l.s4 1934713408
    %v315 = vunpack.c.0.s8 %v314
    %v316 = vlaneseq
    %v317 = vshrl.u32 %v316, 7
    %v318 = vsub.s32 %v315, %v317
    %v319 = vrot.slane %v305, %v318
    %v320 = vcombine.low %v255, %v271
    %v321 = vcombine.high %v255, %v271
    %v323 = vunpack.c.l.s4 1934713408
    %v324 = vunpack.c.0.s8 %v323
    %v325 = vlaneseq
    %v326 = vshrl.u32 %v325, 7
    %v327 = vsub.s32 %v324, %v326
    %v328 = vrot.slane %v320, %v327
    %v330 = vunpack.c.l.s4 1934713408
    %v331 = vunpack.c.0.s8 %v330
    %v332 = vlaneseq
    %v333 = vshrl.u32 %v332, 7
    %v334 = vsub.s32 %v331, %v333
    %v335 = vrot.slane %v321, %v334
    %v336 = vcombine.low %v280, %v312
    %v337 = vcombine.high %v280, %v312
    %v338 = vcombine.low %v287, %v319
    %v339 = vcombine.high %v287, %v319
    %v340 = vcombine.low %v296, %v328
    %v341 = vcombine.high %v296, %v328
    %v342 = vcombine.low %v303, %v335
    %v343 = vcombine.high %v303, %v335
    %v344 = vpack.c.bf16 %v336, %v200
    %v345 = vpack.c.bf16 %v337, %v201
    %v346 = vpack.c.bf16 %v338, %v202
    %v347 = vpack.c.bf16 %v339, %v203
    %v348 = vpack.c.bf16 %v340, %v204
    %v349 = vpack.c.bf16 %v341, %v205
    %v350 = vpack.c.bf16 %v342, %v206
    %v351 = vpack.c.bf16 %v343, %v207
    %v352 = vlaneseq
    %v353 = vand.u32 %v352, 127
    %vm354 = vcmp.lt.s32.totalorder %v353, 32
    %v355 = vld [vmem:[%s1] sm:$0xff]
    %v356 = vld [vmem:[%s1 + $0x8] sm:$0xff]
    %v357 = vld [vmem:[%s1 + $0x10] sm:$0xff]
    %v358 = vld [vmem:[%s1 + $0x18] sm:$0xff]
    %v359 = vld [vmem:[%s1 + $0x20] sm:$0xff]
    %v360 = vld [vmem:[%s1 + $0x28] sm:$0xff]
    %v361 = vld [vmem:[%s1 + $0x30] sm:$0xff]
    %v362 = vld [vmem:[%s1 + $0x38] sm:$0xff]
    %v363 = vld [vmem:[%s1 + $0x40] sm:$0xff]
    %v364 = vld [vmem:[%s1 + $0x48] sm:$0xff]
    %v365 = vld [vmem:[%s1 + $0x50] sm:$0xff]
    %v366 = vld [vmem:[%s1 + $0x58] sm:$0xff]
    %v367 = vld [vmem:[%s1 + $0x60] sm:$0xff]
    %v368 = vld [vmem:[%s1 + $0x68] sm:$0xff]
    %v369 = vld [vmem:[%s1 + $0x70] sm:$0xff]
    %v370 = vld [vmem:[%s1 + $0x78] sm:$0xff]
    %v371 = vld [vmem:[%s2] sm:$0x3]
    %v373 = vlaneseq
    %v374 = vshrl.u32 %v373, 7
    %v375 = vsub.s32 0, %v374
    %v376 = vrot.slane %v371, %v375
    %v377 = vlaneseq
    %v378 = vshrl.u32 %v377, 7
    %v379 = vsub.s32 1, %v378
    %v380 = vrot.slane %v371, %v379
    %v399 = vunpack.c.l.b16 %v355
    %v400 = vunpack.c.h.b16 %v355
    %v401 = vunpack.c.l.b16 %v356
    %v402 = vunpack.c.h.b16 %v356
    %v403 = vunpack.c.l.b16 %v357
    %v404 = vunpack.c.h.b16 %v357
    %v405 = vunpack.c.l.b16 %v358
    %v406 = vunpack.c.h.b16 %v358
    %v407 = vunpack.c.l.b16 %v359
    %v408 = vunpack.c.h.b16 %v359
    %v409 = vunpack.c.l.b16 %v360
    %v410 = vunpack.c.h.b16 %v360
    %v411 = vunpack.c.l.b16 %v361
    %v412 = vunpack.c.h.b16 %v361
    %v413 = vunpack.c.l.b16 %v362
    %v414 = vunpack.c.h.b16 %v362
    %v415 = vunpack.c.l.b16 %v363
    %v416 = vunpack.c.h.b16 %v363
    %v417 = vunpack.c.l.b16 %v364
    %v418 = vunpack.c.h.b16 %v364
    %v419 = vunpack.c.l.b16 %v365
    %v420 = vunpack.c.h.b16 %v365
    %v421 = vunpack.c.l.b16 %v366
    %v422 = vunpack.c.h.b16 %v366
    %v423 = vunpack.c.l.b16 %v367
    %v424 = vunpack.c.h.b16 %v367
    %v425 = vunpack.c.l.b16 %v368
    %v426 = vunpack.c.h.b16 %v368
    %v427 = vunpack.c.l.b16 %v369
    %v428 = vunpack.c.h.b16 %v369
    %v429 = vunpack.c.l.b16 %v370
    %v430 = vunpack.c.h.b16 %v370
    %v431 = vpack.c.b16 %v401, %v399
    %v432 = vpack.c.b16 %v402, %v400
    %v433 = vpack.c.b16 %v405, %v403
    %v434 = vpack.c.b16 %v406, %v404
    %v435 = vpack.c.b16 %v409, %v407
    %v436 = vpack.c.b16 %v410, %v408
    %v437 = vpack.c.b16 %v413, %v411
    %v438 = vpack.c.b16 %v414, %v412
    %v439 = vpack.c.b16 %v417, %v415
    %v440 = vpack.c.b16 %v418, %v416
    %v441 = vpack.c.b16 %v421, %v419
    %v442 = vpack.c.b16 %v422, %v420
    %v443 = vpack.c.b16 %v425, %v423
    %v444 = vpack.c.b16 %v426, %v424
    %v445 = vpack.c.b16 %v429, %v427
    %v446 = vpack.c.b16 %v430, %v428
    %463 = vmatprep.subr.bf16.mxu0 %v432
    %464 = vmatpush1.bf16.msra.mxu0 %v431
    %465 = vmatprep.subr.bf16.mxu0 %v434
    %466 = vmatpush1.bf16.msra.mxu0 %v433
    %467 = vmatprep.subr.bf16.mxu0 %v436
    %468 = vmatpush1.bf16.msra.mxu0 %v435
    %469 = vmatprep.subr.bf16.mxu0 %v438
    %470 = vmatpush1.bf16.msra.mxu0 %v437
    %471 = vmatprep.subr.bf16.mxu0 %v440
    %472 = vmatpush1.bf16.msra.mxu0 %v439
    %473 = vmatprep.subr.bf16.mxu0 %v442
    %474 = vmatpush1.bf16.msra.mxu0 %v441
    %475 = vmatprep.subr.bf16.mxu0 %v444
    %476 = vmatpush1.bf16.msra.mxu0 %v443
    %477 = vmatprep.subr.bf16.mxu0 %v446
    %478 = vmatpush1.bf16.msra.mxu0 %v445
    %479 = vmatprep.subr.bf16.mxu0 0
    %480 = vmatpush1.bf16.msra.mxu0 0
    %481 = vmatprep.subr.bf16.mxu0 0
    %482 = vmatpush1.bf16.msra.mxu0 0
    %483 = vmatprep.subr.bf16.mxu0 0
    %484 = vmatpush1.bf16.msra.mxu0 0
    %485 = vmatprep.subr.bf16.mxu0 0
    %486 = vmatpush1.bf16.msra.mxu0 0
    %487 = vmatprep.subr.bf16.mxu0 0
    %488 = vmatpush1.bf16.msra.mxu0 0
    %489 = vmatprep.subr.bf16.mxu0 0
    %490 = vmatpush1.bf16.msra.mxu0 0
    %491 = vmatprep.subr.bf16.mxu0 0
    %492 = vmatpush1.bf16.msra.mxu0 0
    %493 = vmatprep.subr.bf16.mxu0 0
    %494 = vmatpush1.bf16.msra.mxu0 0
    %495 = vmatprep.mubr.bf16.mxu0 0
    %496 = vmatmul.mubr.bf16.gmra.mrb[0].mxu0 %v344
    %v497 = vpop.f32.mrb[0].mxu0
    %v498 = vadd.f32 %v376, %v497
    %v499 = vpop.f32.mrb[0].mxu0
    %v500 = vadd.f32 %v380, %v499
    %v501 = vpop.f32.mrb[0].mxu0
    %v502 = vadd.f32 %v376, %v501
    %v503 = vpop.f32.mrb[0].mxu0
    %v504 = vadd.f32 %v380, %v503
    %505 = vmatprep.mubr.bf16.mxu0 0
    %506 = vmatmul.mubr.bf16.gmra.mrb[0].mxu0 %v345
    %v507 = vpop.f32.mrb[0].mxu0
    %v508 = vadd.f32 %v376, %v507
    %v509 = vpop.f32.mrb[0].mxu0
    %v510 = vadd.f32 %v380, %v509
    %v511 = vpop.f32.mrb[0].mxu0
    %v512 = vadd.f32 %v376, %v511
    %v513 = vpop.f32.mrb[0].mxu0
    %v514 = vadd.f32 %v380, %v513
    %515 = vmatprep.mubr.bf16.mxu0 0
    %516 = vmatmul.mubr.bf16.gmra.mrb[0].mxu0 %v346
    %v517 = vpop.f32.mrb[0].mxu0
    %v518 = vadd.f32 %v376, %v517
    %v519 = vpop.f32.mrb[0].mxu0
    %v520 = vadd.f32 %v380, %v519
    %v521 = vpop.f32.mrb[0].mxu0
    %v522 = vadd.f32 %v376, %v521
    %v523 = vpop.f32.mrb[0].mxu0
    %v524 = vadd.f32 %v380, %v523
    %525 = vmatprep.mubr.bf16.mxu0 0
    %526 = vmatmul.mubr.bf16.gmra.mrb[0].mxu0 %v347
    %v527 = vpop.f32.mrb[0].mxu0
    %v528 = vadd.f32 %v376, %v527
    %v529 = vpop.f32.mrb[0].mxu0
    %v530 = vadd.f32 %v380, %v529
    %v531 = vpop.f32.mrb[0].mxu0
    %v532 = vadd.f32 %v376, %v531
    %v533 = vpop.f32.mrb[0].mxu0
    %v534 = vadd.f32 %v380, %v533
    %535 = vmatprep.mubr.bf16.mxu0 0
    %536 = vmatmul.mubr.bf16.gmra.mrb[0].mxu0 %v348
    %v537 = vpop.f32.mrb[0].mxu0
    %v538 = vadd.f32 %v376, %v537
    %v539 = vpop.f32.mrb[0].mxu0
    %v540 = vadd.f32 %v380, %v539
    %v541 = vpop.f32.mrb[0].mxu0
    %v542 = vadd.f32 %v376, %v541
    %v543 = vpop.f32.mrb[0].mxu0
    %v544 = vadd.f32 %v380, %v543
    %545 = vmatprep.mubr.bf16.mxu0 0
    %546 = vmatmul.mubr.bf16.gmra.mrb[0].mxu0 %v349
    %v547 = vpop.f32.mrb[0].mxu0
    %v548 = vadd.f32 %v376, %v547
    %v549 = vpop.f32.mrb[0].mxu0
    %v550 = vadd.f32 %v380, %v549
    %v551 = vpop.f32.mrb[0].mxu0
    %v552 = vadd.f32 %v376, %v551
    %v553 = vpop.f32.mrb[0].mxu0
    %v554 = vadd.f32 %v380, %v553
    %555 = vmatprep.mubr.bf16.mxu0 0
    %556 = vmatmul.mubr.bf16.gmra.mrb[0].mxu0 %v350
    %v557 = vpop.f32.mrb[0].mxu0
    %v558 = vadd.f32 %v376, %v557
    %v559 = vpop.f32.mrb[0].mxu0
    %v560 = vadd.f32 %v380, %v559
    %v561 = vpop.f32.mrb[0].mxu0
    %v562 = vadd.f32 %v376, %v561
    %v563 = vpop.f32.mrb[0].mxu0
    %v564 = vadd.f32 %v380, %v563
    %565 = vmatprep.mubr.bf16.mxu0 0
    %566 = vmatmul.mubr.bf16.gmra.mrb[0].mxu0 %v351
    %v567 = vpop.f32.mrb[0].mxu0
    %v568 = vadd.f32 %v376, %v567
    %v569 = vpop.f32.mrb[0].mxu0
    %v570 = vadd.f32 %v380, %v569
    %v571 = vpop.f32.mrb[0].mxu0
    %v572 = vadd.f32 %v376, %v571
    %v573 = vpop.f32.mrb[0].mxu0
    %v574 = vadd.f32 %v380, %v573
    %575 = vdwg.mxu0
    %v576 = vld [vmem:[%s3] sm:$0x1]
    %v577 = vld [vmem:[%s4] sm:$0x1]
    %578 = vadd.xlane.f32.xlu0 %v498
    %v579 = vpop.xlane.xlu0 %578
    %580 = vadd.xlane.f32.xlu0 %v502
    %v581 = vpop.xlane.xlu0 %580
    %582 = vadd.xlane.f32.xlu0 %v508
    %v583 = vpop.xlane.xlu0 %582
    %584 = vadd.xlane.f32.xlu0 %v512
    %v585 = vpop.xlane.xlu0 %584
    %586 = vadd.xlane.f32.xlu0 %v518
    %v587 = vpop.xlane.xlu0 %586
    %588 = vadd.xlane.f32.xlu0 %v522
    %v589 = vpop.xlane.xlu0 %588
    %590 = vadd.xlane.f32.xlu0 %v528
    %v591 = vpop.xlane.xlu0 %590
    %592 = vadd.xlane.f32.xlu0 %v532
    %v593 = vpop.xlane.xlu0 %592
    %594 = vadd.xlane.f32.xlu0 %v538
    %v595 = vpop.xlane.xlu0 %594
    %596 = vadd.xlane.f32.xlu0 %v542
    %v597 = vpop.xlane.xlu0 %596
    %598 = vadd.xlane.f32.xlu0 %v548
    %v599 = vpop.xlane.xlu0 %598
    %600 = vadd.xlane.f32.xlu0 %v552
    %v601 = vpop.xlane.xlu0 %600
    %602 = vadd.xlane.f32.xlu0 %v558
    %v603 = vpop.xlane.xlu0 %602
    %604 = vadd.xlane.f32.xlu0 %v562
    %v605 = vpop.xlane.xlu0 %604
    %606 = vadd.xlane.f32.xlu0 %v568
    %v607 = vpop.xlane.xlu0 %606
    %608 = vadd.xlane.f32.xlu0 %v572
    %v609 = vpop.xlane.xlu0 %608
    %v610 = vmul.f32 %v579, 0.03125
    %v611 = vmul.f32 %v581, 0.03125
    %v612 = vmul.f32 %v583, 0.03125
    %v613 = vmul.f32 %v585, 0.03125
    %v614 = vmul.f32 %v587, 0.03125
    %v615 = vmul.f32 %v589, 0.03125
    %v616 = vmul.f32 %v591, 0.03125
    %v617 = vmul.f32 %v593, 0.03125
    %v618 = vmul.f32 %v595, 0.03125
    %v619 = vmul.f32 %v597, 0.03125
    %v620 = vmul.f32 %v599, 0.03125
    %v621 = vmul.f32 %v601, 0.03125
    %v622 = vmul.f32 %v603, 0.03125
    %v623 = vmul.f32 %v605, 0.03125
    %v624 = vmul.f32 %v607, 0.03125
    %v625 = vmul.f32 %v609, 0.03125
    %v626 = vmul.f32 %v498, %v498
    %v627 = vmul.f32 %v502, %v502
    %v628 = vmul.f32 %v508, %v508
    %v629 = vmul.f32 %v512, %v512
    %v630 = vmul.f32 %v518, %v518
    %v631 = vmul.f32 %v522, %v522
    %v632 = vmul.f32 %v528, %v528
    %v633 = vmul.f32 %v532, %v532
    %v634 = vmul.f32 %v538, %v538
    %v635 = vmul.f32 %v542, %v542
    %v636 = vmul.f32 %v548, %v548
    %v637 = vmul.f32 %v552, %v552
    %v638 = vmul.f32 %v558, %v558
    %v639 = vmul.f32 %v562, %v562
    %v640 = vmul.f32 %v568, %v568
    %v641 = vmul.f32 %v572, %v572
    %642 = vadd.xlane.f32.xlu0 %v626
    %v643 = vpop.xlane.xlu0 %642
    %644 = vadd.xlane.f32.xlu0 %v627
    %v645 = vpop.xlane.xlu0 %644
    %646 = vadd.xlane.f32.xlu0 %v628
    %v647 = vpop.xlane.xlu0 %646
    %648 = vadd.xlane.f32.xlu0 %v629
    %v649 = vpop.xlane.xlu0 %648
    %650 = vadd.xlane.f32.xlu0 %v630
    %v651 = vpop.xlane.xlu0 %650
    %652 = vadd.xlane.f32.xlu0 %v631
    %v653 = vpop.xlane.xlu0 %652
    %654 = vadd.xlane.f32.xlu0 %v632
    %v655 = vpop.xlane.xlu0 %654
    %656 = vadd.xlane.f32.xlu0 %v633
    %v657 = vpop.xlane.xlu0 %656
    %658 = vadd.xlane.f32.xlu0 %v634
    %v659 = vpop.xlane.xlu0 %658
    %660 = vadd.xlane.f32.xlu0 %v635
    %v661 = vpop.xlane.xlu0 %660
    %662 = vadd.xlane.f32.xlu0 %v636
    %v663 = vpop.xlane.xlu0 %662
    %664 = vadd.xlane.f32.xlu0 %v637
    %v665 = vpop.xlane.xlu0 %664
    %666 = vadd.xlane.f32.xlu0 %v638
    %v667 = vpop.xlane.xlu0 %666
    %668 = vadd.xlane.f32.xlu0 %v639
    %v669 = vpop.xlane.xlu0 %668
    %670 = vadd.xlane.f32.xlu0 %v640
    %v671 = vpop.xlane.xlu0 %670
    %672 = vadd.xlane.f32.xlu0 %v641
    %v673 = vpop.xlane.xlu0 %672
    %v674 = vmul.f32 %v643, 0.03125
    %v675 = vmul.f32 %v645, 0.03125
    %v676 = vmul.f32 %v647, 0.03125
    %v677 = vmul.f32 %v649, 0.03125
    %v678 = vmul.f32 %v651, 0.03125
    %v679 = vmul.f32 %v653, 0.03125
    %v680 = vmul.f32 %v655, 0.03125
    %v681 = vmul.f32 %v657, 0.03125
    %v682 = vmul.f32 %v659, 0.03125
    %v683 = vmul.f32 %v661, 0.03125
    %v684 = vmul.f32 %v663, 0.03125
    %v685 = vmul.f32 %v665, 0.03125
    %v686 = vmul.f32 %v667, 0.03125
    %v687 = vmul.f32 %v669, 0.03125
    %v688 = vmul.f32 %v671, 0.03125
    %v689 = vmul.f32 %v673, 0.03125
    %v690 = vmul.f32 %v610, %v610
    %v691 = vmul.f32 %v611, %v611
    %v692 = vmul.f32 %v612, %v612
    %v693 = vmul.f32 %v613, %v613
    %v694 = vmul.f32 %v614, %v614
    %v695 = vmul.f32 %v615, %v615
    %v696 = vmul.f32 %v616, %v616
    %v697 = vmul.f32 %v617, %v617
    %v698 = vmul.f32 %v618, %v618
    %v699 = vmul.f32 %v619, %v619
    %v700 = vmul.f32 %v620, %v620
    %v701 = vmul.f32 %v621, %v621
    %v702 = vmul.f32 %v622, %v622
    %v703 = vmul.f32 %v623, %v623
    %v704 = vmul.f32 %v624, %v624
    %v705 = vmul.f32 %v625, %v625
    %v706 = vsub.f32 %v674, %v690
    %v707 = vsub.f32 %v675, %v691
    %v708 = vsub.f32 %v676, %v692
    %v709 = vsub.f32 %v677, %v693
    %v710 = vsub.f32 %v678, %v694
    %v711 = vsub.f32 %v679, %v695
    %v712 = vsub.f32 %v680, %v696
    %v713 = vsub.f32 %v681, %v697
    %v714 = vsub.f32 %v682, %v698
    %v715 = vsub.f32 %v683, %v699
    %v716 = vsub.f32 %v684, %v700
    %v717 = vsub.f32 %v685, %v701
    %v718 = vsub.f32 %v686, %v702
    %v719 = vsub.f32 %v687, %v703
    %v720 = vsub.f32 %v688, %v704
    %v721 = vsub.f32 %v689, %v705
    %v722 = vmax.f32 %v706, 0.0
    %v723 = vmax.f32 %v707, 0.0
    %v724 = vmax.f32 %v708, 0.0
    %v725 = vmax.f32 %v709, 0.0
    %v726 = vmax.f32 %v710, 0.0
    %v727 = vmax.f32 %v711, 0.0
    %v728 = vmax.f32 %v712, 0.0
    %v729 = vmax.f32 %v713, 0.0
    %v730 = vmax.f32 %v714, 0.0
    %v731 = vmax.f32 %v715, 0.0
    %v732 = vmax.f32 %v716, 0.0
    %v733 = vmax.f32 %v717, 0.0
    %v734 = vmax.f32 %v718, 0.0
    %v735 = vmax.f32 %v719, 0.0
    %v736 = vmax.f32 %v720, 0.0
    %v737 = vmax.f32 %v721, 0.0
    %v738 = vsub.f32 %v498, %v610
    %v739 = vsub.f32 %v502, %v611
    %v740 = vsub.f32 %v508, %v612
    %v741 = vsub.f32 %v512, %v613
    %v742 = vsub.f32 %v518, %v614
    %v743 = vsub.f32 %v522, %v615
    %v744 = vsub.f32 %v528, %v616
    %v745 = vsub.f32 %v532, %v617
    %v746 = vsub.f32 %v538, %v618
    %v747 = vsub.f32 %v542, %v619
    %v748 = vsub.f32 %v548, %v620
    %v749 = vsub.f32 %v552, %v621
    %v750 = vsub.f32 %v558, %v622
    %v751 = vsub.f32 %v562, %v623
    %v752 = vsub.f32 %v568, %v624
    %v753 = vsub.f32 %v572, %v625
    %v754 = vadd.f32 %v722, 1e-05
    %v755 = vadd.f32 %v723, 1e-05
    %v756 = vadd.f32 %v724, 1e-05
    %v757 = vadd.f32 %v725, 1e-05
    %v758 = vadd.f32 %v726, 1e-05
    %v759 = vadd.f32 %v727, 1e-05
    %v760 = vadd.f32 %v728, 1e-05
    %v761 = vadd.f32 %v729, 1e-05
    %v762 = vadd.f32 %v730, 1e-05
    %v763 = vadd.f32 %v731, 1e-05
    %v764 = vadd.f32 %v732, 1e-05
    %v765 = vadd.f32 %v733, 1e-05
    %v766 = vadd.f32 %v734, 1e-05
    %v767 = vadd.f32 %v735, 1e-05
    %v768 = vadd.f32 %v736, 1e-05
    %v769 = vadd.f32 %v737, 1e-05
    %v770 = vrsqrt.pop %v754
    %v771 = vrsqrt.pop %v755
    %v772 = vrsqrt.pop %v756
    %v773 = vrsqrt.pop %v757
    %v774 = vrsqrt.pop %v758
    %v775 = vrsqrt.pop %v759
    %v776 = vrsqrt.pop %v760
    %v777 = vrsqrt.pop %v761
    %v778 = vrsqrt.pop %v762
    %v779 = vrsqrt.pop %v763
    %v780 = vrsqrt.pop %v764
    %v781 = vrsqrt.pop %v765
    %v782 = vrsqrt.pop %v766
    %v783 = vrsqrt.pop %v767
    %v784 = vrsqrt.pop %v768
    %v785 = vrsqrt.pop %v769
    %v786 = vmul.f32 %v738, %v770
    %v787 = vmul.f32 %v739, %v771
    %v788 = vmul.f32 %v740, %v772
    %v789 = vmul.f32 %v741, %v773
    %v790 = vmul.f32 %v742, %v774
    %v791 = vmul.f32 %v743, %v775
    %v792 = vmul.f32 %v744, %v776
    %v793 = vmul.f32 %v745, %v777
    %v794 = vmul.f32 %v746, %v778
    %v795 = vmul.f32 %v747, %v779
    %v796 = vmul.f32 %v748, %v780
    %v797 = vmul.f32 %v749, %v781
    %v798 = vmul.f32 %v750, %v782
    %v799 = vmul.f32 %v751, %v783
    %v800 = vmul.f32 %v752, %v784
    %v801 = vmul.f32 %v753, %v785
    %v803 = vlaneseq
    %v804 = vshrl.u32 %v803, 7
    %v805 = vsub.s32 0, %v804
    %v806 = vrot.slane %v576, %v805
    %v808 = vmul.f32 %v786, %v806
    %v809 = vmul.f32 %v787, %v806
    %v810 = vmul.f32 %v788, %v806
    %v811 = vmul.f32 %v789, %v806
    %v812 = vmul.f32 %v790, %v806
    %v813 = vmul.f32 %v791, %v806
    %v814 = vmul.f32 %v792, %v806
    %v815 = vmul.f32 %v793, %v806
    %v816 = vmul.f32 %v794, %v806
    %v817 = vmul.f32 %v795, %v806
    %v818 = vmul.f32 %v796, %v806
    %v819 = vmul.f32 %v797, %v806
    %v820 = vmul.f32 %v798, %v806
    %v821 = vmul.f32 %v799, %v806
    %v822 = vmul.f32 %v800, %v806
    %v823 = vmul.f32 %v801, %v806
    %v825 = vlaneseq
    %v826 = vshrl.u32 %v825, 7
    %v827 = vsub.s32 0, %v826
    %v828 = vrot.slane %v577, %v827
    %v830 = vadd.f32 %v808, %v828
    %v831 = vadd.f32 %v809, %v828
    %v832 = vadd.f32 %v810, %v828
    %v833 = vadd.f32 %v811, %v828
    %v834 = vadd.f32 %v812, %v828
    %v835 = vadd.f32 %v813, %v828
    %v836 = vadd.f32 %v814, %v828
    %v837 = vadd.f32 %v815, %v828
    %v838 = vadd.f32 %v816, %v828
    %v839 = vadd.f32 %v817, %v828
    %v840 = vadd.f32 %v818, %v828
    %v841 = vadd.f32 %v819, %v828
    %v842 = vadd.f32 %v820, %v828
    %v843 = vadd.f32 %v821, %v828
    %v844 = vadd.f32 %v822, %v828
    %v845 = vadd.f32 %v823, %v828
    %v846 = vld [vmem:[%s3 + $0x1] sm:$0x1]
    %v847 = vld [vmem:[%s4 + $0x1] sm:$0x1]
    %848 = vadd.xlane.f32.xlu0 %v500
    %v849 = vpop.xlane.xlu0 %848
    %850 = vadd.xlane.f32.xlu0 %v504
    %v851 = vpop.xlane.xlu0 %850
    %852 = vadd.xlane.f32.xlu0 %v510
    %v853 = vpop.xlane.xlu0 %852
    %854 = vadd.xlane.f32.xlu0 %v514
    %v855 = vpop.xlane.xlu0 %854
    %856 = vadd.xlane.f32.xlu0 %v520
    %v857 = vpop.xlane.xlu0 %856
    %858 = vadd.xlane.f32.xlu0 %v524
    %v859 = vpop.xlane.xlu0 %858
    %860 = vadd.xlane.f32.xlu0 %v530
    %v861 = vpop.xlane.xlu0 %860
    %862 = vadd.xlane.f32.xlu0 %v534
    %v863 = vpop.xlane.xlu0 %862
    %864 = vadd.xlane.f32.xlu0 %v540
    %v865 = vpop.xlane.xlu0 %864
    %866 = vadd.xlane.f32.xlu0 %v544
    %v867 = vpop.xlane.xlu0 %866
    %868 = vadd.xlane.f32.xlu0 %v550
    %v869 = vpop.xlane.xlu0 %868
    %870 = vadd.xlane.f32.xlu0 %v554
    %v871 = vpop.xlane.xlu0 %870
    %872 = vadd.xlane.f32.xlu0 %v560
    %v873 = vpop.xlane.xlu0 %872
    %874 = vadd.xlane.f32.xlu0 %v564
    %v875 = vpop.xlane.xlu0 %874
    %876 = vadd.xlane.f32.xlu0 %v570
    %v877 = vpop.xlane.xlu0 %876
    %878 = vadd.xlane.f32.xlu0 %v574
    %v879 = vpop.xlane.xlu0 %878
    %v880 = vmul.f32 %v849, 0.03125
    %v881 = vmul.f32 %v851, 0.03125
    %v882 = vmul.f32 %v853, 0.03125
    %v883 = vmul.f32 %v855, 0.03125
    %v884 = vmul.f32 %v857, 0.03125
    %v885 = vmul.f32 %v859, 0.03125
    %v886 = vmul.f32 %v861, 0.03125
    %v887 = vmul.f32 %v863, 0.03125
    %v888 = vmul.f32 %v865, 0.03125
    %v889 = vmul.f32 %v867, 0.03125
    %v890 = vmul.f32 %v869, 0.03125
    %v891 = vmul.f32 %v871, 0.03125
    %v892 = vmul.f32 %v873, 0.03125
    %v893 = vmul.f32 %v875, 0.03125
    %v894 = vmul.f32 %v877, 0.03125
    %v895 = vmul.f32 %v879, 0.03125
    %v896 = vmul.f32 %v500, %v500
    %v897 = vmul.f32 %v504, %v504
    %v898 = vmul.f32 %v510, %v510
    %v899 = vmul.f32 %v514, %v514
    %v900 = vmul.f32 %v520, %v520
    %v901 = vmul.f32 %v524, %v524
    %v902 = vmul.f32 %v530, %v530
    %v903 = vmul.f32 %v534, %v534
    %v904 = vmul.f32 %v540, %v540
    %v905 = vmul.f32 %v544, %v544
    %v906 = vmul.f32 %v550, %v550
    %v907 = vmul.f32 %v554, %v554
    %v908 = vmul.f32 %v560, %v560
    %v909 = vmul.f32 %v564, %v564
    %v910 = vmul.f32 %v570, %v570
    %v911 = vmul.f32 %v574, %v574
    %912 = vadd.xlane.f32.xlu0 %v896
    %v913 = vpop.xlane.xlu0 %912
    %914 = vadd.xlane.f32.xlu0 %v897
    %v915 = vpop.xlane.xlu0 %914
    %916 = vadd.xlane.f32.xlu0 %v898
    %v917 = vpop.xlane.xlu0 %916
    %918 = vadd.xlane.f32.xlu0 %v899
    %v919 = vpop.xlane.xlu0 %918
    %920 = vadd.xlane.f32.xlu0 %v900
    %v921 = vpop.xlane.xlu0 %920
    %922 = vadd.xlane.f32.xlu0 %v901
    %v923 = vpop.xlane.xlu0 %922
    %924 = vadd.xlane.f32.xlu0 %v902
    %v925 = vpop.xlane.xlu0 %924
    %926 = vadd.xlane.f32.xlu0 %v903
    %v927 = vpop.xlane.xlu0 %926
    %928 = vadd.xlane.f32.xlu0 %v904
    %v929 = vpop.xlane.xlu0 %928
    %930 = vadd.xlane.f32.xlu0 %v905
    %v931 = vpop.xlane.xlu0 %930
    %932 = vadd.xlane.f32.xlu0 %v906
    %v933 = vpop.xlane.xlu0 %932
    %934 = vadd.xlane.f32.xlu0 %v907
    %v935 = vpop.xlane.xlu0 %934
    %936 = vadd.xlane.f32.xlu0 %v908
    %v937 = vpop.xlane.xlu0 %936
    %938 = vadd.xlane.f32.xlu0 %v909
    %v939 = vpop.xlane.xlu0 %938
    %940 = vadd.xlane.f32.xlu0 %v910
    %v941 = vpop.xlane.xlu0 %940
    %942 = vadd.xlane.f32.xlu0 %v911
    %v943 = vpop.xlane.xlu0 %942
    %v944 = vmul.f32 %v913, 0.03125
    %v945 = vmul.f32 %v915, 0.03125
    %v946 = vmul.f32 %v917, 0.03125
    %v947 = vmul.f32 %v919, 0.03125
    %v948 = vmul.f32 %v921, 0.03125
    %v949 = vmul.f32 %v923, 0.03125
    %v950 = vmul.f32 %v925, 0.03125
    %v951 = vmul.f32 %v927, 0.03125
    %v952 = vmul.f32 %v929, 0.03125
    %v953 = vmul.f32 %v931, 0.03125
    %v954 = vmul.f32 %v933, 0.03125
    %v955 = vmul.f32 %v935, 0.03125
    %v956 = vmul.f32 %v937, 0.03125
    %v957 = vmul.f32 %v939, 0.03125
    %v958 = vmul.f32 %v941, 0.03125
    %v959 = vmul.f32 %v943, 0.03125
    %v960 = vmul.f32 %v880, %v880
    %v961 = vmul.f32 %v881, %v881
    %v962 = vmul.f32 %v882, %v882
    %v963 = vmul.f32 %v883, %v883
    %v964 = vmul.f32 %v884, %v884
    %v965 = vmul.f32 %v885, %v885
    %v966 = vmul.f32 %v886, %v886
    %v967 = vmul.f32 %v887, %v887
    %v968 = vmul.f32 %v888, %v888
    %v969 = vmul.f32 %v889, %v889
    %v970 = vmul.f32 %v890, %v890
    %v971 = vmul.f32 %v891, %v891
    %v972 = vmul.f32 %v892, %v892
    %v973 = vmul.f32 %v893, %v893
    %v974 = vmul.f32 %v894, %v894
    %v975 = vmul.f32 %v895, %v895
    %v976 = vsub.f32 %v944, %v960
    %v977 = vsub.f32 %v945, %v961
    %v978 = vsub.f32 %v946, %v962
    %v979 = vsub.f32 %v947, %v963
    %v980 = vsub.f32 %v948, %v964
    %v981 = vsub.f32 %v949, %v965
    %v982 = vsub.f32 %v950, %v966
    %v983 = vsub.f32 %v951, %v967
    %v984 = vsub.f32 %v952, %v968
    %v985 = vsub.f32 %v953, %v969
    %v986 = vsub.f32 %v954, %v970
    %v987 = vsub.f32 %v955, %v971
    %v988 = vsub.f32 %v956, %v972
    %v989 = vsub.f32 %v957, %v973
    %v990 = vsub.f32 %v958, %v974
    %v991 = vsub.f32 %v959, %v975
    %v992 = vmax.f32 %v976, 0.0
    %v993 = vmax.f32 %v977, 0.0
    %v994 = vmax.f32 %v978, 0.0
    %v995 = vmax.f32 %v979, 0.0
    %v996 = vmax.f32 %v980, 0.0
    %v997 = vmax.f32 %v981, 0.0
    %v998 = vmax.f32 %v982, 0.0
    %v999 = vmax.f32 %v983, 0.0
    %v1000 = vmax.f32 %v984, 0.0
    %v1001 = vmax.f32 %v985, 0.0
    %v1002 = vmax.f32 %v986, 0.0
    %v1003 = vmax.f32 %v987, 0.0
    %v1004 = vmax.f32 %v988, 0.0
    %v1005 = vmax.f32 %v989, 0.0
    %v1006 = vmax.f32 %v990, 0.0
    %v1007 = vmax.f32 %v991, 0.0
    %v1008 = vsub.f32 %v500, %v880
    %v1009 = vsub.f32 %v504, %v881
    %v1010 = vsub.f32 %v510, %v882
    %v1011 = vsub.f32 %v514, %v883
    %v1012 = vsub.f32 %v520, %v884
    %v1013 = vsub.f32 %v524, %v885
    %v1014 = vsub.f32 %v530, %v886
    %v1015 = vsub.f32 %v534, %v887
    %v1016 = vsub.f32 %v540, %v888
    %v1017 = vsub.f32 %v544, %v889
    %v1018 = vsub.f32 %v550, %v890
    %v1019 = vsub.f32 %v554, %v891
    %v1020 = vsub.f32 %v560, %v892
    %v1021 = vsub.f32 %v564, %v893
    %v1022 = vsub.f32 %v570, %v894
    %v1023 = vsub.f32 %v574, %v895
    %v1024 = vadd.f32 %v992, 1e-05
    %v1025 = vadd.f32 %v993, 1e-05
    %v1026 = vadd.f32 %v994, 1e-05
    %v1027 = vadd.f32 %v995, 1e-05
    %v1028 = vadd.f32 %v996, 1e-05
    %v1029 = vadd.f32 %v997, 1e-05
    %v1030 = vadd.f32 %v998, 1e-05
    %v1031 = vadd.f32 %v999, 1e-05
    %v1032 = vadd.f32 %v1000, 1e-05
    %v1033 = vadd.f32 %v1001, 1e-05
    %v1034 = vadd.f32 %v1002, 1e-05
    %v1035 = vadd.f32 %v1003, 1e-05
    %v1036 = vadd.f32 %v1004, 1e-05
    %v1037 = vadd.f32 %v1005, 1e-05
    %v1038 = vadd.f32 %v1006, 1e-05
    %v1039 = vadd.f32 %v1007, 1e-05
    %v1040 = vrsqrt.pop %v1024
    %v1041 = vrsqrt.pop %v1025
    %v1042 = vrsqrt.pop %v1026
    %v1043 = vrsqrt.pop %v1027
    %v1044 = vrsqrt.pop %v1028
    %v1045 = vrsqrt.pop %v1029
    %v1046 = vrsqrt.pop %v1030
    %v1047 = vrsqrt.pop %v1031
    %v1048 = vrsqrt.pop %v1032
    %v1049 = vrsqrt.pop %v1033
    %v1050 = vrsqrt.pop %v1034
    %v1051 = vrsqrt.pop %v1035
    %v1052 = vrsqrt.pop %v1036
    %v1053 = vrsqrt.pop %v1037
    %v1054 = vrsqrt.pop %v1038
    %v1055 = vrsqrt.pop %v1039
    %v1056 = vmul.f32 %v1008, %v1040
    %v1057 = vmul.f32 %v1009, %v1041
    %v1058 = vmul.f32 %v1010, %v1042
    %v1059 = vmul.f32 %v1011, %v1043
    %v1060 = vmul.f32 %v1012, %v1044
    %v1061 = vmul.f32 %v1013, %v1045
    %v1062 = vmul.f32 %v1014, %v1046
    %v1063 = vmul.f32 %v1015, %v1047
    %v1064 = vmul.f32 %v1016, %v1048
    %v1065 = vmul.f32 %v1017, %v1049
    %v1066 = vmul.f32 %v1018, %v1050
    %v1067 = vmul.f32 %v1019, %v1051
    %v1068 = vmul.f32 %v1020, %v1052
    %v1069 = vmul.f32 %v1021, %v1053
    %v1070 = vmul.f32 %v1022, %v1054
    %v1071 = vmul.f32 %v1023, %v1055
    %v1073 = vlaneseq
    %v1074 = vshrl.u32 %v1073, 7
    %v1075 = vsub.s32 0, %v1074
    %v1076 = vrot.slane %v846, %v1075
    %v1078 = vmul.f32 %v1056, %v1076
    %v1079 = vmul.f32 %v1057, %v1076
    %v1080 = vmul.f32 %v1058, %v1076
    %v1081 = vmul.f32 %v1059, %v1076
    %v1082 = vmul.f32 %v1060, %v1076
    %v1083 = vmul.f32 %v1061, %v1076
    %v1084 = vmul.f32 %v1062, %v1076
    %v1085 = vmul.f32 %v1063, %v1076
    %v1086 = vmul.f32 %v1064, %v1076
    %v1087 = vmul.f32 %v1065, %v1076
    %v1088 = vmul.f32 %v1066, %v1076
    %v1089 = vmul.f32 %v1067, %v1076
    %v1090 = vmul.f32 %v1068, %v1076
    %v1091 = vmul.f32 %v1069, %v1076
    %v1092 = vmul.f32 %v1070, %v1076
    %v1093 = vmul.f32 %v1071, %v1076
    %v1095 = vlaneseq
    %v1096 = vshrl.u32 %v1095, 7
    %v1097 = vsub.s32 0, %v1096
    %v1098 = vrot.slane %v847, %v1097
    %v1100 = vadd.f32 %v1078, %v1098
    %v1101 = vadd.f32 %v1079, %v1098
    %v1102 = vadd.f32 %v1080, %v1098
    %v1103 = vadd.f32 %v1081, %v1098
    %v1104 = vadd.f32 %v1082, %v1098
    %v1105 = vadd.f32 %v1083, %v1098
    %v1106 = vadd.f32 %v1084, %v1098
    %v1107 = vadd.f32 %v1085, %v1098
    %v1108 = vadd.f32 %v1086, %v1098
    %v1109 = vadd.f32 %v1087, %v1098
    %v1110 = vadd.f32 %v1088, %v1098
    %v1111 = vadd.f32 %v1089, %v1098
    %v1112 = vadd.f32 %v1090, %v1098
    %v1113 = vadd.f32 %v1091, %v1098
    %v1114 = vadd.f32 %v1092, %v1098
    %v1115 = vadd.f32 %v1093, %v1098
    %v1116 = vpack.c.bf16 %v1101, %v1100
    %v1117 = vpack.c.bf16 %v1103, %v1102
    %v1118 = vpack.c.bf16 %v1105, %v1104
    %v1119 = vpack.c.bf16 %v1107, %v1106
    %v1120 = vpack.c.bf16 %v1109, %v1108
    %v1121 = vpack.c.bf16 %v1111, %v1110
    %v1122 = vpack.c.bf16 %v1113, %v1112
    %v1123 = vpack.c.bf16 %v1115, %v1114
    %v1124 = vxor.u32 %v1116, 2147516416
    %v1125 = vxor.u32 %v1117, 2147516416
    %v1126 = vxor.u32 %v1118, 2147516416
    %v1127 = vxor.u32 %v1119, 2147516416
    %v1128 = vxor.u32 %v1120, 2147516416
    %v1129 = vxor.u32 %v1121, 2147516416
    %v1130 = vxor.u32 %v1122, 2147516416
    %v1131 = vxor.u32 %v1123, 2147516416
    %v1133 = vmul.bf16 %v1124, 1069105081
    %v1134 = vpow.bf16.pop %v1133
    %v1136 = vmul.bf16 %v1125, 1069105081
    %v1137 = vpow.bf16.pop %v1136
    %v1139 = vmul.bf16 %v1126, 1069105081
    %v1140 = vpow.bf16.pop %v1139
    %v1142 = vmul.bf16 %v1127, 1069105081
    %v1143 = vpow.bf16.pop %v1142
    %v1145 = vmul.bf16 %v1128, 1069105081
    %v1146 = vpow.bf16.pop %v1145
    %v1148 = vmul.bf16 %v1129, 1069105081
    %v1149 = vpow.bf16.pop %v1148
    %v1151 = vmul.bf16 %v1130, 1069105081
    %v1152 = vpow.bf16.pop %v1151
    %v1154 = vmul.bf16 %v1131, 1069105081
    %v1155 = vpow.bf16.pop %v1154
    %v1156 = vadd.bf16 %v1134, 1065369472
    %v1157 = vadd.bf16 %v1137, 1065369472
    %v1158 = vadd.bf16 %v1140, 1065369472
    %v1159 = vadd.bf16 %v1143, 1065369472
    %v1160 = vadd.bf16 %v1146, 1065369472
    %v1161 = vadd.bf16 %v1149, 1065369472
    %v1162 = vadd.bf16 %v1152, 1065369472
    %v1163 = vadd.bf16 %v1155, 1065369472
    %v1164 = vrcp.bf16.pop %v1156
    %v1165 = vmul.bf16 1065369472, %v1164
    %v1166 = vrcp.bf16.pop %v1157
    %v1167 = vmul.bf16 1065369472, %v1166
    %v1168 = vrcp.bf16.pop %v1158
    %v1169 = vmul.bf16 1065369472, %v1168
    %v1170 = vrcp.bf16.pop %v1159
    %v1171 = vmul.bf16 1065369472, %v1170
    %v1172 = vrcp.bf16.pop %v1160
    %v1173 = vmul.bf16 1065369472, %v1172
    %v1174 = vrcp.bf16.pop %v1161
    %v1175 = vmul.bf16 1065369472, %v1174
    %v1176 = vrcp.bf16.pop %v1162
    %v1177 = vmul.bf16 1065369472, %v1176
    %v1178 = vrcp.bf16.pop %v1163
    %v1179 = vmul.bf16 1065369472, %v1178
    %v1180 = vunpack.c.l.bf16 %v1165
    %v1181 = vunpack.c.h.bf16 %v1165
    %v1182 = vunpack.c.l.bf16 %v1167
    %v1183 = vunpack.c.h.bf16 %v1167
    %v1184 = vunpack.c.l.bf16 %v1169
    %v1185 = vunpack.c.h.bf16 %v1169
    %v1186 = vunpack.c.l.bf16 %v1171
    %v1187 = vunpack.c.h.bf16 %v1171
    %v1188 = vunpack.c.l.bf16 %v1173
    %v1189 = vunpack.c.h.bf16 %v1173
    %v1190 = vunpack.c.l.bf16 %v1175
    %v1191 = vunpack.c.h.bf16 %v1175
    %v1192 = vunpack.c.l.bf16 %v1177
    %v1193 = vunpack.c.h.bf16 %v1177
    %v1194 = vunpack.c.l.bf16 %v1179
    %v1195 = vunpack.c.h.bf16 %v1179
    %v1196 = vmul.f32 %v1100, %v1180
    %v1197 = vmul.f32 %v1101, %v1181
    %v1198 = vmul.f32 %v1102, %v1182
    %v1199 = vmul.f32 %v1103, %v1183
    %v1200 = vmul.f32 %v1104, %v1184
    %v1201 = vmul.f32 %v1105, %v1185
    %v1202 = vmul.f32 %v1106, %v1186
    %v1203 = vmul.f32 %v1107, %v1187
    %v1204 = vmul.f32 %v1108, %v1188
    %v1205 = vmul.f32 %v1109, %v1189
    %v1206 = vmul.f32 %v1110, %v1190
    %v1207 = vmul.f32 %v1111, %v1191
    %v1208 = vmul.f32 %v1112, %v1192
    %v1209 = vmul.f32 %v1113, %v1193
    %v1210 = vmul.f32 %v1114, %v1194
    %v1211 = vmul.f32 %v1115, %v1195
    %v1212 = vpack.c.bf16 %v831, %v830
    %v1213 = vpack.c.bf16 %v833, %v832
    %v1214 = vpack.c.bf16 %v835, %v834
    %v1215 = vpack.c.bf16 %v837, %v836
    %v1216 = vpack.c.bf16 %v839, %v838
    %v1217 = vpack.c.bf16 %v841, %v840
    %v1218 = vpack.c.bf16 %v843, %v842
    %v1219 = vpack.c.bf16 %v845, %v844
    %v1220 = vld [vmem:[%s5] sm:$0xff]
    %v1221 = vld [vmem:[%s5 + $0x8] sm:$0xf]
    %v1222 = vld [vmem:[%s5 + $0xc] sm:$0xff]
    %v1223 = vld [vmem:[%s5 + $0x14] sm:$0xf]
    %v1224 = vld [vmem:[%s5 + $0x18] sm:$0xff]
    %v1225 = vld [vmem:[%s5 + $0x20] sm:$0xf]
    %v1226 = vld [vmem:[%s5 + $0x24] sm:$0xff]
    %v1227 = vld [vmem:[%s5 + $0x2c] sm:$0xf]
    %v1228 = vld [vmem:[%s5 + $0x30] sm:$0xff]
    %v1229 = vld [vmem:[%s5 + $0x38] sm:$0xf]
    %v1230 = vld [vmem:[%s5 + $0x3c] sm:$0xff]
    %v1231 = vld [vmem:[%s5 + $0x44] sm:$0xf]
    %v1232 = vld [vmem:[%s5 + $0x48] sm:$0xff]
    %v1233 = vld [vmem:[%s5 + $0x50] sm:$0xf]
    %v1234 = vld [vmem:[%s5 + $0x54] sm:$0xff]
    %v1235 = vld [vmem:[%s5 + $0x5c] sm:$0xf]
    %v1236 = vld [vmem:[%s5 + $0x60] sm:$0xff]
    %v1237 = vld [vmem:[%s5 + $0x68] sm:$0xf]
    %v1238 = vld [vmem:[%s5 + $0x6c] sm:$0xff]
    %v1239 = vld [vmem:[%s5 + $0x74] sm:$0xf]
    %v1240 = vld [vmem:[%s5 + $0x78] sm:$0xff]
    %v1241 = vld [vmem:[%s5 + $0x80] sm:$0xf]
    %v1242 = vld [vmem:[%s5 + $0x84] sm:$0xff]
    %v1243 = vld [vmem:[%s5 + $0x8c] sm:$0xf]
    %v1244 = vld [vmem:[%s5 + $0x90] sm:$0xff]
    %v1245 = vld [vmem:[%s5 + $0x98] sm:$0xf]
    %v1246 = vld [vmem:[%s5 + $0x9c] sm:$0xff]
    %v1247 = vld [vmem:[%s5 + $0xa4] sm:$0xf]
    %v1248 = vld [vmem:[%s5 + $0xa8] sm:$0xff]
    %v1249 = vld [vmem:[%s5 + $0xb0] sm:$0xf]
    %v1250 = vld [vmem:[%s5 + $0xb4] sm:$0xff]
    %v1251 = vld [vmem:[%s5 + $0xbc] sm:$0xf]
    %v1284 = vunpack.c.l.b16 %v1220
    %v1285 = vunpack.c.h.b16 %v1220
    %v1286 = vunpack.c.l.b16 %v1221
    %v1287 = vunpack.c.l.b16 %v1222
    %v1288 = vunpack.c.h.b16 %v1222
    %v1289 = vunpack.c.l.b16 %v1223
    %v1290 = vunpack.c.l.b16 %v1224
    %v1291 = vunpack.c.h.b16 %v1224
    %v1292 = vunpack.c.l.b16 %v1225
    %v1293 = vunpack.c.l.b16 %v1226
    %v1294 = vunpack.c.h.b16 %v1226
    %v1295 = vunpack.c.l.b16 %v1227
    %v1296 = vunpack.c.l.b16 %v1228
    %v1297 = vunpack.c.h.b16 %v1228
    %v1298 = vunpack.c.l.b16 %v1229
    %v1299 = vunpack.c.l.b16 %v1230
    %v1300 = vunpack.c.h.b16 %v1230
    %v1301 = vunpack.c.l.b16 %v1231
    %v1302 = vunpack.c.l.b16 %v1232
    %v1303 = vunpack.c.h.b16 %v1232
    %v1304 = vunpack.c.l.b16 %v1233
    %v1305 = vunpack.c.l.b16 %v1234
    %v1306 = vunpack.c.h.b16 %v1234
    %v1307 = vunpack.c.l.b16 %v1235
    %v1308 = vunpack.c.l.b16 %v1236
    %v1309 = vunpack.c.h.b16 %v1236
    %v1310 = vunpack.c.l.b16 %v1237
    %v1311 = vunpack.c.l.b16 %v1238
    %v1312 = vunpack.c.h.b16 %v1238
    %v1313 = vunpack.c.l.b16 %v1239
    %v1314 = vunpack.c.l.b16 %v1240
    %v1315 = vunpack.c.h.b16 %v1240
    %v1316 = vunpack.c.l.b16 %v1241
    %v1317 = vunpack.c.l.b16 %v1242
    %v1318 = vunpack.c.h.b16 %v1242
    %v1319 = vunpack.c.l.b16 %v1243
    %v1320 = vunpack.c.l.b16 %v1244
    %v1321 = vunpack.c.h.b16 %v1244
    %v1322 = vunpack.c.l.b16 %v1245
    %v1323 = vunpack.c.l.b16 %v1246
    %v1324 = vunpack.c.h.b16 %v1246
    %v1325 = vunpack.c.l.b16 %v1247
    %v1326 = vunpack.c.l.b16 %v1248
    %v1327 = vunpack.c.h.b16 %v1248
    %v1328 = vunpack.c.l.b16 %v1249
    %v1329 = vunpack.c.l.b16 %v1250
    %v1330 = vunpack.c.h.b16 %v1250
    %v1331 = vunpack.c.l.b16 %v1251
    %v1332 = vpack.c.b16 %v1287, %v1284
    %v1333 = vpack.c.b16 %v1288, %v1285
    %v1334 = vpack.c.b16 %v1289, %v1286
    %v1335 = vpack.c.b16 %v1293, %v1290
    %v1336 = vpack.c.b16 %v1294, %v1291
    %v1337 = vpack.c.b16 %v1295, %v1292
    %v1338 = vpack.c.b16 %v1299, %v1296
    %v1339 = vpack.c.b16 %v1300, %v1297
    %v1340 = vpack.c.b16 %v1301, %v1298
    %v1341 = vpack.c.b16 %v1305, %v1302
    %v1342 = vpack.c.b16 %v1306, %v1303
    %v1343 = vpack.c.b16 %v1307, %v1304
    %v1344 = vpack.c.b16 %v1311, %v1308
    %v1345 = vpack.c.b16 %v1312, %v1309
    %v1346 = vpack.c.b16 %v1313, %v1310
    %v1347 = vpack.c.b16 %v1317, %v1314
    %v1348 = vpack.c.b16 %v1318, %v1315
    %v1349 = vpack.c.b16 %v1319, %v1316
    %v1350 = vpack.c.b16 %v1323, %v1320
    %v1351 = vpack.c.b16 %v1324, %v1321
    %v1352 = vpack.c.b16 %v1325, %v1322
    %v1353 = vpack.c.b16 %v1329, %v1326
    %v1354 = vpack.c.b16 %v1330, %v1327
    %v1355 = vpack.c.b16 %v1331, %v1328
    %1380 = vmatprep.subr.bf16.mxu0 %v1333
    %1381 = vmatpush1.bf16.msra.mxu0 %v1332
    %1382 = vmatprep.subr.bf16.mxu0 %v1336
    %1383 = vmatpush1.bf16.msra.mxu0 %v1335
    %1384 = vmatprep.subr.bf16.mxu0 %v1339
    %1385 = vmatpush1.bf16.msra.mxu0 %v1338
    %1386 = vmatprep.subr.bf16.mxu0 %v1342
    %1387 = vmatpush1.bf16.msra.mxu0 %v1341
    %1388 = vmatprep.subr.bf16.mxu0 %v1345
    %1389 = vmatpush1.bf16.msra.mxu0 %v1344
    %1390 = vmatprep.subr.bf16.mxu0 %v1348
    %1391 = vmatpush1.bf16.msra.mxu0 %v1347
    %1392 = vmatprep.subr.bf16.mxu0 %v1351
    %1393 = vmatpush1.bf16.msra.mxu0 %v1350
    %1394 = vmatprep.subr.bf16.mxu0 %v1354
    %1395 = vmatpush1.bf16.msra.mxu0 %v1353
    %1396 = vmatprep.subr.bf16.mxu0 0
    %1397 = vmatpush1.bf16.msra.mxu0 0
    %1398 = vmatprep.subr.bf16.mxu0 0
    %1399 = vmatpush1.bf16.msra.mxu0 0
    %1400 = vmatprep.subr.bf16.mxu0 0
    %1401 = vmatpush1.bf16.msra.mxu0 0
    %1402 = vmatprep.subr.bf16.mxu0 0
    %1403 = vmatpush1.bf16.msra.mxu0 0
    %1404 = vmatprep.subr.bf16.mxu0 0
    %1405 = vmatpush1.bf16.msra.mxu0 0
    %1406 = vmatprep.subr.bf16.mxu0 0
    %1407 = vmatpush1.bf16.msra.mxu0 0
    %1408 = vmatprep.subr.bf16.mxu0 0
    %1409 = vmatpush1.bf16.msra.mxu0 0
    %1410 = vmatprep.subr.bf16.mxu0 0
    %1411 = vmatpush1.bf16.msra.mxu0 0
    %1412 = vmatprep.mubr.bf16.mxu0 0
    %1413 = vmatmul.mubr.bf16.gmra.mrb[0].mxu0 %v1212
    %v1414 = vpop.f32.mrb[0].mxu0
    %v1415 = vadd.f32 0.0, %v1414
    %v1416 = vpop.f32.mrb[0].mxu0
    %v1417 = vadd.f32 0.0, %v1416
    %v1418 = vpop.f32.mrb[0].mxu0
    %v1419 = vadd.f32 0.0, %v1418
    %v1420 = vpop.f32.mrb[0].mxu0
    %v1421 = vadd.f32 0.0, %v1420
    %1422 = vmatprep.mubr.bf16.mxu0 0
    %1423 = vmatmul.mubr.bf16.gmra.mrb[0].mxu0 %v1213
    %v1424 = vpop.f32.mrb[0].mxu0
    %v1425 = vadd.f32 0.0, %v1424
    %v1426 = vpop.f32.mrb[0].mxu0
    %v1427 = vadd.f32 0.0, %v1426
    %v1428 = vpop.f32.mrb[0].mxu0
    %v1429 = vadd.f32 0.0, %v1428
    %v1430 = vpop.f32.mrb[0].mxu0
    %v1431 = vadd.f32 0.0, %v1430
    %1432 = vmatprep.mubr.bf16.mxu0 0
    %1433 = vmatmul.mubr.bf16.gmra.mrb[0].mxu0 %v1214
    %v1434 = vpop.f32.mrb[0].mxu0
    %v1435 = vadd.f32 0.0, %v1434
    %v1436 = vpop.f32.mrb[0].mxu0
    %v1437 = vadd.f32 0.0, %v1436
    %v1438 = vpop.f32.mrb[0].mxu0
    %v1439 = vadd.f32 0.0, %v1438
    %v1440 = vpop.f32.mrb[0].mxu0
    %v1441 = vadd.f32 0.0, %v1440
    %1442 = vmatprep.mubr.bf16.mxu0 0
    %1443 = vmatmul.mubr.bf16.gmra.mrb[0].mxu0 %v1215
    %v1444 = vpop.f32.mrb[0].mxu0
    %v1445 = vadd.f32 0.0, %v1444
    %v1446 = vpop.f32.mrb[0].mxu0
    %v1447 = vadd.f32 0.0, %v1446
    %v1448 = vpop.f32.mrb[0].mxu0
    %v1449 = vadd.f32 0.0, %v1448
    %v1450 = vpop.f32.mrb[0].mxu0
    %v1451 = vadd.f32 0.0, %v1450
    %1452 = vmatprep.mubr.bf16.mxu0 0
    %1453 = vmatmul.mubr.bf16.gmra.mrb[0].mxu0 %v1216
    %v1454 = vpop.f32.mrb[0].mxu0
    %v1455 = vadd.f32 0.0, %v1454
    %v1456 = vpop.f32.mrb[0].mxu0
    %v1457 = vadd.f32 0.0, %v1456
    %v1458 = vpop.f32.mrb[0].mxu0
    %v1459 = vadd.f32 0.0, %v1458
    %v1460 = vpop.f32.mrb[0].mxu0
    %v1461 = vadd.f32 0.0, %v1460
    %1462 = vmatprep.mubr.bf16.mxu0 0
    %1463 = vmatmul.mubr.bf16.gmra.mrb[0].mxu0 %v1217
    %v1464 = vpop.f32.mrb[0].mxu0
    %v1465 = vadd.f32 0.0, %v1464
    %v1466 = vpop.f32.mrb[0].mxu0
    %v1467 = vadd.f32 0.0, %v1466
    %v1468 = vpop.f32.mrb[0].mxu0
    %v1469 = vadd.f32 0.0, %v1468
    %v1470 = vpop.f32.mrb[0].mxu0
    %v1471 = vadd.f32 0.0, %v1470
    %1472 = vmatprep.mubr.bf16.mxu0 0
    %1473 = vmatmul.mubr.bf16.gmra.mrb[0].mxu0 %v1218
    %v1474 = vpop.f32.mrb[0].mxu0
    %v1475 = vadd.f32 0.0, %v1474
    %v1476 = vpop.f32.mrb[0].mxu0
    %v1477 = vadd.f32 0.0, %v1476
    %v1478 = vpop.f32.mrb[0].mxu0
    %v1479 = vadd.f32 0.0, %v1478
    %v1480 = vpop.f32.mrb[0].mxu0
    %v1481 = vadd.f32 0.0, %v1480
    %1482 = vmatprep.mubr.bf16.mxu0 0
    %1483 = vmatmul.mubr.bf16.gmra.mrb[0].mxu0 %v1219
    %v1484 = vpop.f32.mrb[0].mxu0
    %v1485 = vadd.f32 0.0, %v1484
    %v1486 = vpop.f32.mrb[0].mxu0
    %v1487 = vadd.f32 0.0, %v1486
    %v1488 = vpop.f32.mrb[0].mxu0
    %v1489 = vadd.f32 0.0, %v1488
    %v1490 = vpop.f32.mrb[0].mxu0
    %v1491 = vadd.f32 0.0, %v1490
    %1492 = vdwg.mxu0
    %1493 = vmatprep.subr.bf16.mxu0 0
    %1494 = vmatpush1.bf16.msra.mxu0 %v1334
    %1495 = vmatprep.subr.bf16.mxu0 0
    %1496 = vmatpush1.bf16.msra.mxu0 %v1337
    %1497 = vmatprep.subr.bf16.mxu0 0
    %1498 = vmatpush1.bf16.msra.mxu0 %v1340
    %1499 = vmatprep.subr.bf16.mxu0 0
    %1500 = vmatpush1.bf16.msra.mxu0 %v1343
    %1501 = vmatprep.subr.bf16.mxu0 0
    %1502 = vmatpush1.bf16.msra.mxu0 %v1346
    %1503 = vmatprep.subr.bf16.mxu0 0
    %1504 = vmatpush1.bf16.msra.mxu0 %v1349
    %1505 = vmatprep.subr.bf16.mxu0 0
    %1506 = vmatpush1.bf16.msra.mxu0 %v1352
    %1507 = vmatprep.subr.bf16.mxu0 0
    %1508 = vmatpush1.bf16.msra.mxu0 %v1355
    %1509 = vmatprep.subr.bf16.mxu0 0
    %1510 = vmatpush1.bf16.msra.mxu0 0
    %1511 = vmatprep.subr.bf16.mxu0 0
    %1512 = vmatpush1.bf16.msra.mxu0 0
    %1513 = vmatprep.subr.bf16.mxu0 0
    %1514 = vmatpush1.bf16.msra.mxu0 0
    %1515 = vmatprep.subr.bf16.mxu0 0
    %1516 = vmatpush1.bf16.msra.mxu0 0
    %1517 = vmatprep.subr.bf16.mxu0 0
    %1518 = vmatpush1.bf16.msra.mxu0 0
    %1519 = vmatprep.subr.bf16.mxu0 0
    %1520 = vmatpush1.bf16.msra.mxu0 0
    %1521 = vmatprep.subr.bf16.mxu0 0
    %1522 = vmatpush1.bf16.msra.mxu0 0
    %1523 = vmatprep.subr.bf16.mxu0 0
    %1524 = vmatpush1.bf16.msra.mxu0 0
    %1525 = vmatprep.mubr.bf16.mxu0 0
    %1526 = vmatmul.mubr.bf16.gmra.mrb[0].mxu0 %v1212
    %v1527 = vpop.f32.mrb[0].mxu0
    %v1528 = vadd.f32 0.0, %v1527
    %v1529 = vpop.f32.mrb[0].mxu0
    %v1530 = vpop.f32.mrb[0].mxu0
    %v1531 = vadd.f32 0.0, %v1530
    %v1532 = vpop.f32.mrb[0].mxu0
    %1533 = vmatprep.mubr.bf16.mxu0 0
    %1534 = vmatmul.mubr.bf16.gmra.mrb[0].mxu0 %v1213
    %v1535 = vpop.f32.mrb[0].mxu0
    %v1536 = vadd.f32 0.0, %v1535
    %v1537 = vpop.f32.mrb[0].mxu0
    %v1538 = vpop.f32.mrb[0].mxu0
    %v1539 = vadd.f32 0.0, %v1538
    %v1540 = vpop.f32.mrb[0].mxu0
    %1541 = vmatprep.mubr.bf16.mxu0 0
    %1542 = vmatmul.mubr.bf16.gmra.mrb[0].mxu0 %v1214
    %v1543 = vpop.f32.mrb[0].mxu0
    %v1544 = vadd.f32 0.0, %v1543
    %v1545 = vpop.f32.mrb[0].mxu0
    %v1546 = vpop.f32.mrb[0].mxu0
    %v1547 = vadd.f32 0.0, %v1546
    %v1548 = vpop.f32.mrb[0].mxu0
    %1549 = vmatprep.mubr.bf16.mxu0 0
    %1550 = vmatmul.mubr.bf16.gmra.mrb[0].mxu0 %v1215
    %v1551 = vpop.f32.mrb[0].mxu0
    %v1552 = vadd.f32 0.0, %v1551
    %v1553 = vpop.f32.mrb[0].mxu0
    %v1554 = vpop.f32.mrb[0].mxu0
    %v1555 = vadd.f32 0.0, %v1554
    %v1556 = vpop.f32.mrb[0].mxu0
    %1557 = vmatprep.mubr.bf16.mxu0 0
    %1558 = vmatmul.mubr.bf16.gmra.mrb[0].mxu0 %v1216
    %v1559 = vpop.f32.mrb[0].mxu0
    %v1560 = vadd.f32 0.0, %v1559
    %v1561 = vpop.f32.mrb[0].mxu0
    %v1562 = vpop.f32.mrb[0].mxu0
    %v1563 = vadd.f32 0.0, %v1562
    %v1564 = vpop.f32.mrb[0].mxu0
    %1565 = vmatprep.mubr.bf16.mxu0 0
    %1566 = vmatmul.mubr.bf16.gmra.mrb[0].mxu0 %v1217
    %v1567 = vpop.f32.mrb[0].mxu0
    %v1568 = vadd.f32 0.0, %v1567
    %v1569 = vpop.f32.mrb[0].mxu0
    %v1570 = vpop.f32.mrb[0].mxu0
    %v1571 = vadd.f32 0.0, %v1570
    %v1572 = vpop.f32.mrb[0].mxu0
    %1573 = vmatprep.mubr.bf16.mxu0 0
    %1574 = vmatmul.mubr.bf16.gmra.mrb[0].mxu0 %v1218
    %v1575 = vpop.f32.mrb[0].mxu0
    %v1576 = vadd.f32 0.0, %v1575
    %v1577 = vpop.f32.mrb[0].mxu0
    %v1578 = vpop.f32.mrb[0].mxu0
    %v1579 = vadd.f32 0.0, %v1578
    %v1580 = vpop.f32.mrb[0].mxu0
    %1581 = vmatprep.mubr.bf16.mxu0 0
    %1582 = vmatmul.mubr.bf16.gmra.mrb[0].mxu0 %v1219
    %v1583 = vpop.f32.mrb[0].mxu0
    %v1584 = vadd.f32 0.0, %v1583
    %v1585 = vpop.f32.mrb[0].mxu0
    %v1586 = vpop.f32.mrb[0].mxu0
    %v1587 = vadd.f32 0.0, %v1586
    %v1588 = vpop.f32.mrb[0].mxu0
    %1589 = vdwg.mxu0
    %v1590 = vlaneseq
    %v1591 = vshrl.u32 %v1590, 7
    %v1592 = vadd.s32 %v1591, 8
    %v1593 = vadd.s32 %v1591, 16
    %v1594 = vadd.s32 %v1591, 24
    %v1595 = vadd.s32 %v1591, 32
    %v1596 = vadd.s32 %v1591, 40
    %v1597 = vadd.s32 %v1591, 48
    %v1598 = vadd.s32 %v1591, 56
    %v1599 = vadd.s32 %v1591, 64
    %v1600 = vadd.s32 %v1591, 72
    %v1601 = vadd.s32 %v1591, 80
    %v1602 = vadd.s32 %v1591, 88
    %v1603 = vadd.s32 %v1591, 96
    %v1604 = vadd.s32 %v1591, 104
    %v1605 = vadd.s32 %v1591, 112
    %v1606 = vadd.s32 %v1591, 120
    %vm1607 = vcmp.ge.s32.totalorder %v1591, 16
    %vm1608 = vcmp.ge.s32.totalorder %v1592, 16
    %vm1609 = vcmp.ge.s32.totalorder %v1593, 16
    %vm1610 = vcmp.ge.s32.totalorder %v1594, 16
    %vm1611 = vcmp.ge.s32.totalorder %v1595, 16
    %vm1612 = vcmp.ge.s32.totalorder %v1596, 16
    %vm1613 = vcmp.ge.s32.totalorder %v1597, 16
    %vm1614 = vcmp.ge.s32.totalorder %v1598, 16
    %vm1615 = vcmp.ge.s32.totalorder %v1599, 16
    %vm1616 = vcmp.ge.s32.totalorder %v1600, 16
    %vm1617 = vcmp.ge.s32.totalorder %v1601, 16
    %vm1618 = vcmp.ge.s32.totalorder %v1602, 16
    %vm1619 = vcmp.ge.s32.totalorder %v1603, 16
    %vm1620 = vcmp.ge.s32.totalorder %v1604, 16
    %vm1621 = vcmp.ge.s32.totalorder %v1605, 16
    %vm1622 = vcmp.ge.s32.totalorder %v1606, 16
    %v1623 = vsel %vm1607, 1, 0
    %v1624 = vsel %vm1608, 1, 0
    %v1625 = vsel %vm1609, 1, 0
    %v1626 = vsel %vm1610, 1, 0
    %v1627 = vsel %vm1611, 1, 0
    %v1628 = vsel %vm1612, 1, 0
    %v1629 = vsel %vm1613, 1, 0
    %v1630 = vsel %vm1614, 1, 0
    %v1631 = vsel %vm1615, 1, 0
    %v1632 = vsel %vm1616, 1, 0
    %v1633 = vsel %vm1617, 1, 0
    %v1634 = vsel %vm1618, 1, 0
    %v1635 = vsel %vm1619, 1, 0
    %v1636 = vsel %vm1620, 1, 0
    %v1637 = vsel %vm1621, 1, 0
    %v1638 = vsel %vm1622, 1, 0
    %vm1639 = vcmp.eq.s32.totalorder %v1623, 1
    %vm1640 = vcmp.eq.s32.totalorder %v1624, 1
    %vm1641 = vcmp.eq.s32.totalorder %v1625, 1
    %vm1642 = vcmp.eq.s32.totalorder %v1626, 1
    %vm1643 = vcmp.eq.s32.totalorder %v1627, 1
    %vm1644 = vcmp.eq.s32.totalorder %v1628, 1
    %vm1645 = vcmp.eq.s32.totalorder %v1629, 1
    %vm1646 = vcmp.eq.s32.totalorder %v1630, 1
    %vm1647 = vcmp.eq.s32.totalorder %v1631, 1
    %vm1648 = vcmp.eq.s32.totalorder %v1632, 1
    %vm1649 = vcmp.eq.s32.totalorder %v1633, 1
    %vm1650 = vcmp.eq.s32.totalorder %v1634, 1
    %vm1651 = vcmp.eq.s32.totalorder %v1635, 1
    %vm1652 = vcmp.eq.s32.totalorder %v1636, 1
    %vm1653 = vcmp.eq.s32.totalorder %v1637, 1
    %vm1654 = vcmp.eq.s32.totalorder %v1638, 1
    %v1655 = vsel %vm1639, %v1485, 0.0
    %v1656 = vsel %vm1640, %v1489, 0.0
    %v1657 = vsel %vm1641, %v1415, 0.0
    %v1658 = vsel %vm1642, %v1419, 0.0
    %v1659 = vsel %vm1643, %v1425, 0.0
    %v1660 = vsel %vm1644, %v1429, 0.0
    %v1661 = vsel %vm1645, %v1435, 0.0
    %v1662 = vsel %vm1646, %v1439, 0.0
    %v1663 = vsel %vm1647, %v1445, 0.0
    %v1664 = vsel %vm1648, %v1449, 0.0
    %v1665 = vsel %vm1649, %v1455, 0.0
    %v1666 = vsel %vm1650, %v1459, 0.0
    %v1667 = vsel %vm1651, %v1465, 0.0
    %v1668 = vsel %vm1652, %v1469, 0.0
    %v1669 = vsel %vm1653, %v1475, 0.0
    %v1670 = vsel %vm1654, %v1479, 0.0
    %vm1671 = vcmp.lt.s32.totalorder %v1591, 112
    %vm1672 = vcmp.lt.s32.totalorder %v1592, 112
    %vm1673 = vcmp.lt.s32.totalorder %v1593, 112
    %vm1674 = vcmp.lt.s32.totalorder %v1594, 112
    %vm1675 = vcmp.lt.s32.totalorder %v1595, 112
    %vm1676 = vcmp.lt.s32.totalorder %v1596, 112
    %vm1677 = vcmp.lt.s32.totalorder %v1597, 112
    %vm1678 = vcmp.lt.s32.totalorder %v1598, 112
    %vm1679 = vcmp.lt.s32.totalorder %v1599, 112
    %vm1680 = vcmp.lt.s32.totalorder %v1600, 112
    %vm1681 = vcmp.lt.s32.totalorder %v1601, 112
    %vm1682 = vcmp.lt.s32.totalorder %v1602, 112
    %vm1683 = vcmp.lt.s32.totalorder %v1603, 112
    %vm1684 = vcmp.lt.s32.totalorder %v1604, 112
    %vm1685 = vcmp.lt.s32.totalorder %v1605, 112
    %vm1686 = vcmp.lt.s32.totalorder %v1606, 112
    %v1687 = vsel %vm1671, 1, 0
    %v1688 = vsel %vm1672, 1, 0
    %v1689 = vsel %vm1673, 1, 0
    %v1690 = vsel %vm1674, 1, 0
    %v1691 = vsel %vm1675, 1, 0
    %v1692 = vsel %vm1676, 1, 0
    %v1693 = vsel %vm1677, 1, 0
    %v1694 = vsel %vm1678, 1, 0
    %v1695 = vsel %vm1679, 1, 0
    %v1696 = vsel %vm1680, 1, 0
    %v1697 = vsel %vm1681, 1, 0
    %v1698 = vsel %vm1682, 1, 0
    %v1699 = vsel %vm1683, 1, 0
    %v1700 = vsel %vm1684, 1, 0
    %v1701 = vsel %vm1685, 1, 0
    %v1702 = vsel %vm1686, 1, 0
    %vm1703 = vcmp.eq.s32.totalorder %v1687, 1
    %vm1704 = vcmp.eq.s32.totalorder %v1688, 1
    %vm1705 = vcmp.eq.s32.totalorder %v1689, 1
    %vm1706 = vcmp.eq.s32.totalorder %v1690, 1
    %vm1707 = vcmp.eq.s32.totalorder %v1691, 1
    %vm1708 = vcmp.eq.s32.totalorder %v1692, 1
    %vm1709 = vcmp.eq.s32.totalorder %v1693, 1
    %vm1710 = vcmp.eq.s32.totalorder %v1694, 1
    %vm1711 = vcmp.eq.s32.totalorder %v1695, 1
    %vm1712 = vcmp.eq.s32.totalorder %v1696, 1
    %vm1713 = vcmp.eq.s32.totalorder %v1697, 1
    %vm1714 = vcmp.eq.s32.totalorder %v1698, 1
    %vm1715 = vcmp.eq.s32.totalorder %v1699, 1
    %vm1716 = vcmp.eq.s32.totalorder %v1700, 1
    %vm1717 = vcmp.eq.s32.totalorder %v1701, 1
    %vm1718 = vcmp.eq.s32.totalorder %v1702, 1
    %v1719 = vsel %vm1703, %v1536, 0.0
    %v1720 = vsel %vm1704, %v1539, 0.0
    %v1721 = vsel %vm1705, %v1544, 0.0
    %v1722 = vsel %vm1706, %v1547, 0.0
    %v1723 = vsel %vm1707, %v1552, 0.0
    %v1724 = vsel %vm1708, %v1555, 0.0
    %v1725 = vsel %vm1709, %v1560, 0.0
    %v1726 = vsel %vm1710, %v1563, 0.0
    %v1727 = vsel %vm1711, %v1568, 0.0
    %v1728 = vsel %vm1712, %v1571, 0.0
    %v1729 = vsel %vm1713, %v1576, 0.0
    %v1730 = vsel %vm1714, %v1579, 0.0
    %v1731 = vsel %vm1715, %v1584, 0.0
    %v1732 = vsel %vm1716, %v1587, 0.0
    %v1733 = vsel %vm1717, %v1528, 0.0
    %v1734 = vsel %vm1718, %v1531, 0.0
    %v1735 = vadd.f32 %v1655, %v1417
    %v1736 = vadd.f32 %v1656, %v1421
    %v1737 = vadd.f32 %v1657, %v1427
    %v1738 = vadd.f32 %v1658, %v1431
    %v1739 = vadd.f32 %v1659, %v1437
    %v1740 = vadd.f32 %v1660, %v1441
    %v1741 = vadd.f32 %v1661, %v1447
    %v1742 = vadd.f32 %v1662, %v1451
    %v1743 = vadd.f32 %v1663, %v1457
    %v1744 = vadd.f32 %v1664, %v1461
    %v1745 = vadd.f32 %v1665, %v1467
    %v1746 = vadd.f32 %v1666, %v1471
    %v1747 = vadd.f32 %v1667, %v1477
    %v1748 = vadd.f32 %v1668, %v1481
    %v1749 = vadd.f32 %v1669, %v1487
    %v1750 = vadd.f32 %v1670, %v1491
    %v1751 = vadd.f32 %v1735, %v1719
    %v1752 = vadd.f32 %v1736, %v1720
    %v1753 = vadd.f32 %v1737, %v1721
    %v1754 = vadd.f32 %v1738, %v1722
    %v1755 = vadd.f32 %v1739, %v1723
    %v1756 = vadd.f32 %v1740, %v1724
    %v1757 = vadd.f32 %v1741, %v1725
    %v1758 = vadd.f32 %v1742, %v1726
    %v1759 = vadd.f32 %v1743, %v1727
    %v1760 = vadd.f32 %v1744, %v1728
    %v1761 = vadd.f32 %v1745, %v1729
    %v1762 = vadd.f32 %v1746, %v1730
    %v1763 = vadd.f32 %v1747, %v1731
    %v1764 = vadd.f32 %v1748, %v1732
    %v1765 = vadd.f32 %v1749, %v1733
    %v1766 = vadd.f32 %v1750, %v1734
    %v1767 = vld [vmem:[%s6] sm:$0x1]
    %v1769 = vlaneseq
    %v1770 = vshrl.u32 %v1769, 7
    %v1771 = vsub.s32 0, %v1770
    %v1772 = vrot.slane %v1767, %v1771
    %v1774 = vadd.f32 %v1751, %v1772
    %v1775 = vadd.f32 %v1752, %v1772
    %v1776 = vadd.f32 %v1753, %v1772
    %v1777 = vadd.f32 %v1754, %v1772
    %v1778 = vadd.f32 %v1755, %v1772
    %v1779 = vadd.f32 %v1756, %v1772
    %v1780 = vadd.f32 %v1757, %v1772
    %v1781 = vadd.f32 %v1758, %v1772
    %v1782 = vadd.f32 %v1759, %v1772
    %v1783 = vadd.f32 %v1760, %v1772
    %v1784 = vadd.f32 %v1761, %v1772
    %v1785 = vadd.f32 %v1762, %v1772
    %v1786 = vadd.f32 %v1763, %v1772
    %v1787 = vadd.f32 %v1764, %v1772
    %v1788 = vadd.f32 %v1765, %v1772
    %v1789 = vadd.f32 %v1766, %v1772
    %v1790 = vld [vmem:[%s7] sm:$0x1]
    %v1791 = vld [vmem:[%s8] sm:$0x1]
    %1792 = vadd.xlane.f32.xlu0 %v1774
    %v1793 = vpop.xlane.xlu0 %1792
    %1794 = vadd.xlane.f32.xlu0 %v1775
    %v1795 = vpop.xlane.xlu0 %1794
    %1796 = vadd.xlane.f32.xlu0 %v1776
    %v1797 = vpop.xlane.xlu0 %1796
    %1798 = vadd.xlane.f32.xlu0 %v1777
    %v1799 = vpop.xlane.xlu0 %1798
    %1800 = vadd.xlane.f32.xlu0 %v1778
    %v1801 = vpop.xlane.xlu0 %1800
    %1802 = vadd.xlane.f32.xlu0 %v1779
    %v1803 = vpop.xlane.xlu0 %1802
    %1804 = vadd.xlane.f32.xlu0 %v1780
    %v1805 = vpop.xlane.xlu0 %1804
    %1806 = vadd.xlane.f32.xlu0 %v1781
    %v1807 = vpop.xlane.xlu0 %1806
    %1808 = vadd.xlane.f32.xlu0 %v1782
    %v1809 = vpop.xlane.xlu0 %1808
    %1810 = vadd.xlane.f32.xlu0 %v1783
    %v1811 = vpop.xlane.xlu0 %1810
    %1812 = vadd.xlane.f32.xlu0 %v1784
    %v1813 = vpop.xlane.xlu0 %1812
    %1814 = vadd.xlane.f32.xlu0 %v1785
    %v1815 = vpop.xlane.xlu0 %1814
    %1816 = vadd.xlane.f32.xlu0 %v1786
    %v1817 = vpop.xlane.xlu0 %1816
    %1818 = vadd.xlane.f32.xlu0 %v1787
    %v1819 = vpop.xlane.xlu0 %1818
    %1820 = vadd.xlane.f32.xlu0 %v1788
    %v1821 = vpop.xlane.xlu0 %1820
    %1822 = vadd.xlane.f32.xlu0 %v1789
    %v1823 = vpop.xlane.xlu0 %1822
    %v1824 = vmul.f32 %v1793, 0.03125
    %v1825 = vmul.f32 %v1795, 0.03125
    %v1826 = vmul.f32 %v1797, 0.03125
    %v1827 = vmul.f32 %v1799, 0.03125
    %v1828 = vmul.f32 %v1801, 0.03125
    %v1829 = vmul.f32 %v1803, 0.03125
    %v1830 = vmul.f32 %v1805, 0.03125
    %v1831 = vmul.f32 %v1807, 0.03125
    %v1832 = vmul.f32 %v1809, 0.03125
    %v1833 = vmul.f32 %v1811, 0.03125
    %v1834 = vmul.f32 %v1813, 0.03125
    %v1835 = vmul.f32 %v1815, 0.03125
    %v1836 = vmul.f32 %v1817, 0.03125
    %v1837 = vmul.f32 %v1819, 0.03125
    %v1838 = vmul.f32 %v1821, 0.03125
    %v1839 = vmul.f32 %v1823, 0.03125
    %v1840 = vmul.f32 %v1774, %v1774
    %v1841 = vmul.f32 %v1775, %v1775
    %v1842 = vmul.f32 %v1776, %v1776
    %v1843 = vmul.f32 %v1777, %v1777
    %v1844 = vmul.f32 %v1778, %v1778
    %v1845 = vmul.f32 %v1779, %v1779
    %v1846 = vmul.f32 %v1780, %v1780
    %v1847 = vmul.f32 %v1781, %v1781
    %v1848 = vmul.f32 %v1782, %v1782
    %v1849 = vmul.f32 %v1783, %v1783
    %v1850 = vmul.f32 %v1784, %v1784
    %v1851 = vmul.f32 %v1785, %v1785
    %v1852 = vmul.f32 %v1786, %v1786
    %v1853 = vmul.f32 %v1787, %v1787
    %v1854 = vmul.f32 %v1788, %v1788
    %v1855 = vmul.f32 %v1789, %v1789
    %1856 = vadd.xlane.f32.xlu0 %v1840
    %v1857 = vpop.xlane.xlu0 %1856
    %1858 = vadd.xlane.f32.xlu0 %v1841
    %v1859 = vpop.xlane.xlu0 %1858
    %1860 = vadd.xlane.f32.xlu0 %v1842
    %v1861 = vpop.xlane.xlu0 %1860
    %1862 = vadd.xlane.f32.xlu0 %v1843
    %v1863 = vpop.xlane.xlu0 %1862
    %1864 = vadd.xlane.f32.xlu0 %v1844
    %v1865 = vpop.xlane.xlu0 %1864
    %1866 = vadd.xlane.f32.xlu0 %v1845
    %v1867 = vpop.xlane.xlu0 %1866
    %1868 = vadd.xlane.f32.xlu0 %v1846
    %v1869 = vpop.xlane.xlu0 %1868
    %1870 = vadd.xlane.f32.xlu0 %v1847
    %v1871 = vpop.xlane.xlu0 %1870
    %1872 = vadd.xlane.f32.xlu0 %v1848
    %v1873 = vpop.xlane.xlu0 %1872
    %1874 = vadd.xlane.f32.xlu0 %v1849
    %v1875 = vpop.xlane.xlu0 %1874
    %1876 = vadd.xlane.f32.xlu0 %v1850
    %v1877 = vpop.xlane.xlu0 %1876
    %1878 = vadd.xlane.f32.xlu0 %v1851
    %v1879 = vpop.xlane.xlu0 %1878
    %1880 = vadd.xlane.f32.xlu0 %v1852
    %v1881 = vpop.xlane.xlu0 %1880
    %1882 = vadd.xlane.f32.xlu0 %v1853
    %v1883 = vpop.xlane.xlu0 %1882
    %1884 = vadd.xlane.f32.xlu0 %v1854
    %v1885 = vpop.xlane.xlu0 %1884
    %1886 = vadd.xlane.f32.xlu0 %v1855
    %v1887 = vpop.xlane.xlu0 %1886
    %v1888 = vmul.f32 %v1857, 0.03125
    %v1889 = vmul.f32 %v1859, 0.03125
    %v1890 = vmul.f32 %v1861, 0.03125
    %v1891 = vmul.f32 %v1863, 0.03125
    %v1892 = vmul.f32 %v1865, 0.03125
    %v1893 = vmul.f32 %v1867, 0.03125
    %v1894 = vmul.f32 %v1869, 0.03125
    %v1895 = vmul.f32 %v1871, 0.03125
    %v1896 = vmul.f32 %v1873, 0.03125
    %v1897 = vmul.f32 %v1875, 0.03125
    %v1898 = vmul.f32 %v1877, 0.03125
    %v1899 = vmul.f32 %v1879, 0.03125
    %v1900 = vmul.f32 %v1881, 0.03125
    %v1901 = vmul.f32 %v1883, 0.03125
    %v1902 = vmul.f32 %v1885, 0.03125
    %v1903 = vmul.f32 %v1887, 0.03125
    %v1904 = vmul.f32 %v1824, %v1824
    %v1905 = vmul.f32 %v1825, %v1825
    %v1906 = vmul.f32 %v1826, %v1826
    %v1907 = vmul.f32 %v1827, %v1827
    %v1908 = vmul.f32 %v1828, %v1828
    %v1909 = vmul.f32 %v1829, %v1829
    %v1910 = vmul.f32 %v1830, %v1830
    %v1911 = vmul.f32 %v1831, %v1831
    %v1912 = vmul.f32 %v1832, %v1832
    %v1913 = vmul.f32 %v1833, %v1833
    %v1914 = vmul.f32 %v1834, %v1834
    %v1915 = vmul.f32 %v1835, %v1835
    %v1916 = vmul.f32 %v1836, %v1836
    %v1917 = vmul.f32 %v1837, %v1837
    %v1918 = vmul.f32 %v1838, %v1838
    %v1919 = vmul.f32 %v1839, %v1839
    %v1920 = vsub.f32 %v1888, %v1904
    %v1921 = vsub.f32 %v1889, %v1905
    %v1922 = vsub.f32 %v1890, %v1906
    %v1923 = vsub.f32 %v1891, %v1907
    %v1924 = vsub.f32 %v1892, %v1908
    %v1925 = vsub.f32 %v1893, %v1909
    %v1926 = vsub.f32 %v1894, %v1910
    %v1927 = vsub.f32 %v1895, %v1911
    %v1928 = vsub.f32 %v1896, %v1912
    %v1929 = vsub.f32 %v1897, %v1913
    %v1930 = vsub.f32 %v1898, %v1914
    %v1931 = vsub.f32 %v1899, %v1915
    %v1932 = vsub.f32 %v1900, %v1916
    %v1933 = vsub.f32 %v1901, %v1917
    %v1934 = vsub.f32 %v1902, %v1918
    %v1935 = vsub.f32 %v1903, %v1919
    %v1936 = vmax.f32 %v1920, 0.0
    %v1937 = vmax.f32 %v1921, 0.0
    %v1938 = vmax.f32 %v1922, 0.0
    %v1939 = vmax.f32 %v1923, 0.0
    %v1940 = vmax.f32 %v1924, 0.0
    %v1941 = vmax.f32 %v1925, 0.0
    %v1942 = vmax.f32 %v1926, 0.0
    %v1943 = vmax.f32 %v1927, 0.0
    %v1944 = vmax.f32 %v1928, 0.0
    %v1945 = vmax.f32 %v1929, 0.0
    %v1946 = vmax.f32 %v1930, 0.0
    %v1947 = vmax.f32 %v1931, 0.0
    %v1948 = vmax.f32 %v1932, 0.0
    %v1949 = vmax.f32 %v1933, 0.0
    %v1950 = vmax.f32 %v1934, 0.0
    %v1951 = vmax.f32 %v1935, 0.0
    %v1952 = vsub.f32 %v1774, %v1824
    %v1953 = vsub.f32 %v1775, %v1825
    %v1954 = vsub.f32 %v1776, %v1826
    %v1955 = vsub.f32 %v1777, %v1827
    %v1956 = vsub.f32 %v1778, %v1828
    %v1957 = vsub.f32 %v1779, %v1829
    %v1958 = vsub.f32 %v1780, %v1830
    %v1959 = vsub.f32 %v1781, %v1831
    %v1960 = vsub.f32 %v1782, %v1832
    %v1961 = vsub.f32 %v1783, %v1833
    %v1962 = vsub.f32 %v1784, %v1834
    %v1963 = vsub.f32 %v1785, %v1835
    %v1964 = vsub.f32 %v1786, %v1836
    %v1965 = vsub.f32 %v1787, %v1837
    %v1966 = vsub.f32 %v1788, %v1838
    %v1967 = vsub.f32 %v1789, %v1839
    %v1968 = vadd.f32 %v1936, 1e-05
    %v1969 = vadd.f32 %v1937, 1e-05
    %v1970 = vadd.f32 %v1938, 1e-05
    %v1971 = vadd.f32 %v1939, 1e-05
    %v1972 = vadd.f32 %v1940, 1e-05
    %v1973 = vadd.f32 %v1941, 1e-05
    %v1974 = vadd.f32 %v1942, 1e-05
    %v1975 = vadd.f32 %v1943, 1e-05
    %v1976 = vadd.f32 %v1944, 1e-05
    %v1977 = vadd.f32 %v1945, 1e-05
    %v1978 = vadd.f32 %v1946, 1e-05
    %v1979 = vadd.f32 %v1947, 1e-05
    %v1980 = vadd.f32 %v1948, 1e-05
    %v1981 = vadd.f32 %v1949, 1e-05
    %v1982 = vadd.f32 %v1950, 1e-05
    %v1983 = vadd.f32 %v1951, 1e-05
    %v1984 = vrsqrt.pop %v1968
    %v1985 = vrsqrt.pop %v1969
    %v1986 = vrsqrt.pop %v1970
    %v1987 = vrsqrt.pop %v1971
    %v1988 = vrsqrt.pop %v1972
    %v1989 = vrsqrt.pop %v1973
    %v1990 = vrsqrt.pop %v1974
    %v1991 = vrsqrt.pop %v1975
    %v1992 = vrsqrt.pop %v1976
    %v1993 = vrsqrt.pop %v1977
    %v1994 = vrsqrt.pop %v1978
    %v1995 = vrsqrt.pop %v1979
    %v1996 = vrsqrt.pop %v1980
    %v1997 = vrsqrt.pop %v1981
    %v1998 = vrsqrt.pop %v1982
    %v1999 = vrsqrt.pop %v1983
    %v2000 = vmul.f32 %v1952, %v1984
    %v2001 = vmul.f32 %v1953, %v1985
    %v2002 = vmul.f32 %v1954, %v1986
    %v2003 = vmul.f32 %v1955, %v1987
    %v2004 = vmul.f32 %v1956, %v1988
    %v2005 = vmul.f32 %v1957, %v1989
    %v2006 = vmul.f32 %v1958, %v1990
    %v2007 = vmul.f32 %v1959, %v1991
    %v2008 = vmul.f32 %v1960, %v1992
    %v2009 = vmul.f32 %v1961, %v1993
    %v2010 = vmul.f32 %v1962, %v1994
    %v2011 = vmul.f32 %v1963, %v1995
    %v2012 = vmul.f32 %v1964, %v1996
    %v2013 = vmul.f32 %v1965, %v1997
    %v2014 = vmul.f32 %v1966, %v1998
    %v2015 = vmul.f32 %v1967, %v1999
    %v2017 = vlaneseq
    %v2018 = vshrl.u32 %v2017, 7
    %v2019 = vsub.s32 0, %v2018
    %v2020 = vrot.slane %v1790, %v2019
    %v2022 = vmul.f32 %v2000, %v2020
    %v2023 = vmul.f32 %v2001, %v2020
    %v2024 = vmul.f32 %v2002, %v2020
    %v2025 = vmul.f32 %v2003, %v2020
    %v2026 = vmul.f32 %v2004, %v2020
    %v2027 = vmul.f32 %v2005, %v2020
    %v2028 = vmul.f32 %v2006, %v2020
    %v2029 = vmul.f32 %v2007, %v2020
    %v2030 = vmul.f32 %v2008, %v2020
    %v2031 = vmul.f32 %v2009, %v2020
    %v2032 = vmul.f32 %v2010, %v2020
    %v2033 = vmul.f32 %v2011, %v2020
    %v2034 = vmul.f32 %v2012, %v2020
    %v2035 = vmul.f32 %v2013, %v2020
    %v2036 = vmul.f32 %v2014, %v2020
    %v2037 = vmul.f32 %v2015, %v2020
    %v2039 = vlaneseq
    %v2040 = vshrl.u32 %v2039, 7
    %v2041 = vsub.s32 0, %v2040
    %v2042 = vrot.slane %v1791, %v2041
    %v2044 = vadd.f32 %v2022, %v2042
    %v2045 = vadd.f32 %v2023, %v2042
    %v2046 = vadd.f32 %v2024, %v2042
    %v2047 = vadd.f32 %v2025, %v2042
    %v2048 = vadd.f32 %v2026, %v2042
    %v2049 = vadd.f32 %v2027, %v2042
    %v2050 = vadd.f32 %v2028, %v2042
    %v2051 = vadd.f32 %v2029, %v2042
    %v2052 = vadd.f32 %v2030, %v2042
    %v2053 = vadd.f32 %v2031, %v2042
    %v2054 = vadd.f32 %v2032, %v2042
    %v2055 = vadd.f32 %v2033, %v2042
    %v2056 = vadd.f32 %v2034, %v2042
    %v2057 = vadd.f32 %v2035, %v2042
    %v2058 = vadd.f32 %v2036, %v2042
    %v2059 = vadd.f32 %v2037, %v2042
    %v2060 = vpack.c.bf16 %v2045, %v2044
    %v2061 = vpack.c.bf16 %v2047, %v2046
    %v2062 = vpack.c.bf16 %v2049, %v2048
    %v2063 = vpack.c.bf16 %v2051, %v2050
    %v2064 = vpack.c.bf16 %v2053, %v2052
    %v2065 = vpack.c.bf16 %v2055, %v2054
    %v2066 = vpack.c.bf16 %v2057, %v2056
    %v2067 = vpack.c.bf16 %v2059, %v2058
    %v2068 = vxor.u32 %v2060, 2147516416
    %v2069 = vxor.u32 %v2061, 2147516416
    %v2070 = vxor.u32 %v2062, 2147516416
    %v2071 = vxor.u32 %v2063, 2147516416
    %v2072 = vxor.u32 %v2064, 2147516416
    %v2073 = vxor.u32 %v2065, 2147516416
    %v2074 = vxor.u32 %v2066, 2147516416
    %v2075 = vxor.u32 %v2067, 2147516416
    %v2077 = vmul.bf16 %v2068, 1069105081
    %v2078 = vpow.bf16.pop %v2077
    %v2080 = vmul.bf16 %v2069, 1069105081
    %v2081 = vpow.bf16.pop %v2080
    %v2083 = vmul.bf16 %v2070, 1069105081
    %v2084 = vpow.bf16.pop %v2083
    %v2086 = vmul.bf16 %v2071, 1069105081
    %v2087 = vpow.bf16.pop %v2086
    %v2089 = vmul.bf16 %v2072, 1069105081
    %v2090 = vpow.bf16.pop %v2089
    %v2092 = vmul.bf16 %v2073, 1069105081
    %v2093 = vpow.bf16.pop %v2092
    %v2095 = vmul.bf16 %v2074, 1069105081
    %v2096 = vpow.bf16.pop %v2095
    %v2098 = vmul.bf16 %v2075, 1069105081
    %v2099 = vpow.bf16.pop %v2098
    %v2100 = vadd.bf16 %v2078, 1065369472
    %v2101 = vadd.bf16 %v2081, 1065369472
    %v2102 = vadd.bf16 %v2084, 1065369472
    %v2103 = vadd.bf16 %v2087, 1065369472
    %v2104 = vadd.bf16 %v2090, 1065369472
    %v2105 = vadd.bf16 %v2093, 1065369472
    %v2106 = vadd.bf16 %v2096, 1065369472
    %v2107 = vadd.bf16 %v2099, 1065369472
    %v2108 = vrcp.bf16.pop %v2100
    %v2109 = vmul.bf16 1065369472, %v2108
    %v2110 = vrcp.bf16.pop %v2101
    %v2111 = vmul.bf16 1065369472, %v2110
    %v2112 = vrcp.bf16.pop %v2102
    %v2113 = vmul.bf16 1065369472, %v2112
    %v2114 = vrcp.bf16.pop %v2103
    %v2115 = vmul.bf16 1065369472, %v2114
    %v2116 = vrcp.bf16.pop %v2104
    %v2117 = vmul.bf16 1065369472, %v2116
    %v2118 = vrcp.bf16.pop %v2105
    %v2119 = vmul.bf16 1065369472, %v2118
    %v2120 = vrcp.bf16.pop %v2106
    %v2121 = vmul.bf16 1065369472, %v2120
    %v2122 = vrcp.bf16.pop %v2107
    %v2123 = vmul.bf16 1065369472, %v2122
    %v2124 = vunpack.c.l.bf16 %v2109
    %v2125 = vunpack.c.h.bf16 %v2109
    %v2126 = vunpack.c.l.bf16 %v2111
    %v2127 = vunpack.c.h.bf16 %v2111
    %v2128 = vunpack.c.l.bf16 %v2113
    %v2129 = vunpack.c.h.bf16 %v2113
    %v2130 = vunpack.c.l.bf16 %v2115
    %v2131 = vunpack.c.h.bf16 %v2115
    %v2132 = vunpack.c.l.bf16 %v2117
    %v2133 = vunpack.c.h.bf16 %v2117
    %v2134 = vunpack.c.l.bf16 %v2119
    %v2135 = vunpack.c.h.bf16 %v2119
    %v2136 = vunpack.c.l.bf16 %v2121
    %v2137 = vunpack.c.h.bf16 %v2121
    %v2138 = vunpack.c.l.bf16 %v2123
    %v2139 = vunpack.c.h.bf16 %v2123
    %v2140 = vmul.f32 %v2044, %v2124
    %v2141 = vmul.f32 %v2045, %v2125
    %v2142 = vmul.f32 %v2046, %v2126
    %v2143 = vmul.f32 %v2047, %v2127
    %v2144 = vmul.f32 %v2048, %v2128
    %v2145 = vmul.f32 %v2049, %v2129
    %v2146 = vmul.f32 %v2050, %v2130
    %v2147 = vmul.f32 %v2051, %v2131
    %v2148 = vmul.f32 %v2052, %v2132
    %v2149 = vmul.f32 %v2053, %v2133
    %v2150 = vmul.f32 %v2054, %v2134
    %v2151 = vmul.f32 %v2055, %v2135
    %v2152 = vmul.f32 %v2056, %v2136
    %v2153 = vmul.f32 %v2057, %v2137
    %v2154 = vmul.f32 %v2058, %v2138
    %v2155 = vmul.f32 %v2059, %v2139
    %v2156 = vpack.c.bf16 %v2141, %v2140
    %v2157 = vpack.c.bf16 %v2143, %v2142
    %v2158 = vpack.c.bf16 %v2145, %v2144
    %v2159 = vpack.c.bf16 %v2147, %v2146
    %v2160 = vpack.c.bf16 %v2149, %v2148
    %v2161 = vpack.c.bf16 %v2151, %v2150
    %v2162 = vpack.c.bf16 %v2153, %v2152
    %v2163 = vpack.c.bf16 %v2155, %v2154
    %v2164 = vld [vmem:[%s9] sm:$0xff]
    %v2165 = vld [vmem:[%s9 + $0x8] sm:$0xff]
    %v2166 = vld [vmem:[%s9 + $0x10] sm:$0xff]
    %v2167 = vld [vmem:[%s9 + $0x18] sm:$0xff]
    %v2168 = vld [vmem:[%s9 + $0x20] sm:$0xff]
    %v2169 = vld [vmem:[%s9 + $0x28] sm:$0xff]
    %v2170 = vld [vmem:[%s9 + $0x30] sm:$0xff]
    %v2171 = vld [vmem:[%s9 + $0x38] sm:$0xff]
    %v2172 = vld [vmem:[%s9 + $0x40] sm:$0xff]
    %v2173 = vld [vmem:[%s9 + $0x48] sm:$0xff]
    %v2174 = vld [vmem:[%s9 + $0x50] sm:$0xff]
    %v2175 = vld [vmem:[%s9 + $0x58] sm:$0xff]
    %v2176 = vld [vmem:[%s9 + $0x60] sm:$0xff]
    %v2177 = vld [vmem:[%s9 + $0x68] sm:$0xff]
    %v2178 = vld [vmem:[%s9 + $0x70] sm:$0xff]
    %v2179 = vld [vmem:[%s9 + $0x78] sm:$0xff]
    %v2180 = vld [vmem:[%s10] sm:$0x3]
    %v2182 = vlaneseq
    %v2183 = vshrl.u32 %v2182, 7
    %v2184 = vsub.s32 0, %v2183
    %v2185 = vrot.slane %v2180, %v2184
    %v2186 = vlaneseq
    %v2187 = vshrl.u32 %v2186, 7
    %v2188 = vsub.s32 1, %v2187
    %v2189 = vrot.slane %v2180, %v2188
    %v2208 = vunpack.c.l.b16 %v2164
    %v2209 = vunpack.c.h.b16 %v2164
    %v2210 = vunpack.c.l.b16 %v2165
    %v2211 = vunpack.c.h.b16 %v2165
    %v2212 = vunpack.c.l.b16 %v2166
    %v2213 = vunpack.c.h.b16 %v2166
    %v2214 = vunpack.c.l.b16 %v2167
    %v2215 = vunpack.c.h.b16 %v2167
    %v2216 = vunpack.c.l.b16 %v2168
    %v2217 = vunpack.c.h.b16 %v2168
    %v2218 = vunpack.c.l.b16 %v2169
    %v2219 = vunpack.c.h.b16 %v2169
    %v2220 = vunpack.c.l.b16 %v2170
    %v2221 = vunpack.c.h.b16 %v2170
    %v2222 = vunpack.c.l.b16 %v2171
    %v2223 = vunpack.c.h.b16 %v2171
    %v2224 = vunpack.c.l.b16 %v2172
    %v2225 = vunpack.c.h.b16 %v2172
    %v2226 = vunpack.c.l.b16 %v2173
    %v2227 = vunpack.c.h.b16 %v2173
    %v2228 = vunpack.c.l.b16 %v2174
    %v2229 = vunpack.c.h.b16 %v2174
    %v2230 = vunpack.c.l.b16 %v2175
    %v2231 = vunpack.c.h.b16 %v2175
    %v2232 = vunpack.c.l.b16 %v2176
    %v2233 = vunpack.c.h.b16 %v2176
    %v2234 = vunpack.c.l.b16 %v2177
    %v2235 = vunpack.c.h.b16 %v2177
    %v2236 = vunpack.c.l.b16 %v2178
    %v2237 = vunpack.c.h.b16 %v2178
    %v2238 = vunpack.c.l.b16 %v2179
    %v2239 = vunpack.c.h.b16 %v2179
    %v2240 = vpack.c.b16 %v2210, %v2208
    %v2241 = vpack.c.b16 %v2211, %v2209
    %v2242 = vpack.c.b16 %v2214, %v2212
    %v2243 = vpack.c.b16 %v2215, %v2213
    %v2244 = vpack.c.b16 %v2218, %v2216
    %v2245 = vpack.c.b16 %v2219, %v2217
    %v2246 = vpack.c.b16 %v2222, %v2220
    %v2247 = vpack.c.b16 %v2223, %v2221
    %v2248 = vpack.c.b16 %v2226, %v2224
    %v2249 = vpack.c.b16 %v2227, %v2225
    %v2250 = vpack.c.b16 %v2230, %v2228
    %v2251 = vpack.c.b16 %v2231, %v2229
    %v2252 = vpack.c.b16 %v2234, %v2232
    %v2253 = vpack.c.b16 %v2235, %v2233
    %v2254 = vpack.c.b16 %v2238, %v2236
    %v2255 = vpack.c.b16 %v2239, %v2237
    %2272 = vmatprep.subr.bf16.mxu0 %v2241
    %2273 = vmatpush1.bf16.msra.mxu0 %v2240
    %2274 = vmatprep.subr.bf16.mxu0 %v2243
    %2275 = vmatpush1.bf16.msra.mxu0 %v2242
    %2276 = vmatprep.subr.bf16.mxu0 %v2245
    %2277 = vmatpush1.bf16.msra.mxu0 %v2244
    %2278 = vmatprep.subr.bf16.mxu0 %v2247
    %2279 = vmatpush1.bf16.msra.mxu0 %v2246
    %2280 = vmatprep.subr.bf16.mxu0 %v2249
    %2281 = vmatpush1.bf16.msra.mxu0 %v2248
    %2282 = vmatprep.subr.bf16.mxu0 %v2251
    %2283 = vmatpush1.bf16.msra.mxu0 %v2250
    %2284 = vmatprep.subr.bf16.mxu0 %v2253
    %2285 = vmatpush1.bf16.msra.mxu0 %v2252
    %2286 = vmatprep.subr.bf16.mxu0 %v2255
    %2287 = vmatpush1.bf16.msra.mxu0 %v2254
    %2288 = vmatprep.subr.bf16.mxu0 0
    %2289 = vmatpush1.bf16.msra.mxu0 0
    %2290 = vmatprep.subr.bf16.mxu0 0
    %2291 = vmatpush1.bf16.msra.mxu0 0
    %2292 = vmatprep.subr.bf16.mxu0 0
    %2293 = vmatpush1.bf16.msra.mxu0 0
    %2294 = vmatprep.subr.bf16.mxu0 0
    %2295 = vmatpush1.bf16.msra.mxu0 0
    %2296 = vmatprep.subr.bf16.mxu0 0
    %2297 = vmatpush1.bf16.msra.mxu0 0
    %2298 = vmatprep.subr.bf16.mxu0 0
    %2299 = vmatpush1.bf16.msra.mxu0 0
    %2300 = vmatprep.subr.bf16.mxu0 0
    %2301 = vmatpush1.bf16.msra.mxu0 0
    %2302 = vmatprep.subr.bf16.mxu0 0
    %2303 = vmatpush1.bf16.msra.mxu0 0
    %2304 = vmatprep.mubr.bf16.mxu0 0
    %2305 = vmatmul.mubr.bf16.gmra.mrb[0].mxu0 %v2156
    %v2306 = vpop.f32.mrb[0].mxu0
    %v2307 = vadd.f32 %v2185, %v2306
    %v2308 = vpop.f32.mrb[0].mxu0
    %v2309 = vadd.f32 %v2189, %v2308
    %v2310 = vpop.f32.mrb[0].mxu0
    %v2311 = vadd.f32 %v2185, %v2310
    %v2312 = vpop.f32.mrb[0].mxu0
    %v2313 = vadd.f32 %v2189, %v2312
    %2314 = vmatprep.mubr.bf16.mxu0 0
    %2315 = vmatmul.mubr.bf16.gmra.mrb[0].mxu0 %v2157
    %v2316 = vpop.f32.mrb[0].mxu0
    %v2317 = vadd.f32 %v2185, %v2316
    %v2318 = vpop.f32.mrb[0].mxu0
    %v2319 = vadd.f32 %v2189, %v2318
    %v2320 = vpop.f32.mrb[0].mxu0
    %v2321 = vadd.f32 %v2185, %v2320
    %v2322 = vpop.f32.mrb[0].mxu0
    %v2323 = vadd.f32 %v2189, %v2322
    %2324 = vmatprep.mubr.bf16.mxu0 0
    %2325 = vmatmul.mubr.bf16.gmra.mrb[0].mxu0 %v2158
    %v2326 = vpop.f32.mrb[0].mxu0
    %v2327 = vadd.f32 %v2185, %v2326
    %v2328 = vpop.f32.mrb[0].mxu0
    %v2329 = vadd.f32 %v2189, %v2328
    %v2330 = vpop.f32.mrb[0].mxu0
    %v2331 = vadd.f32 %v2185, %v2330
    %v2332 = vpop.f32.mrb[0].mxu0
    %v2333 = vadd.f32 %v2189, %v2332
    %2334 = vmatprep.mubr.bf16.mxu0 0
    %2335 = vmatmul.mubr.bf16.gmra.mrb[0].mxu0 %v2159
    %v2336 = vpop.f32.mrb[0].mxu0
    %v2337 = vadd.f32 %v2185, %v2336
    %v2338 = vpop.f32.mrb[0].mxu0
    %v2339 = vadd.f32 %v2189, %v2338
    %v2340 = vpop.f32.mrb[0].mxu0
    %v2341 = vadd.f32 %v2185, %v2340
    %v2342 = vpop.f32.mrb[0].mxu0
    %v2343 = vadd.f32 %v2189, %v2342
    %2344 = vmatprep.mubr.bf16.mxu0 0
    %2345 = vmatmul.mubr.bf16.gmra.mrb[0].mxu0 %v2160
    %v2346 = vpop.f32.mrb[0].mxu0
    %v2347 = vadd.f32 %v2185, %v2346
    %v2348 = vpop.f32.mrb[0].mxu0
    %v2349 = vadd.f32 %v2189, %v2348
    %v2350 = vpop.f32.mrb[0].mxu0
    %v2351 = vadd.f32 %v2185, %v2350
    %v2352 = vpop.f32.mrb[0].mxu0
    %v2353 = vadd.f32 %v2189, %v2352
    %2354 = vmatprep.mubr.bf16.mxu0 0
    %2355 = vmatmul.mubr.bf16.gmra.mrb[0].mxu0 %v2161
    %v2356 = vpop.f32.mrb[0].mxu0
    %v2357 = vadd.f32 %v2185, %v2356
    %v2358 = vpop.f32.mrb[0].mxu0
    %v2359 = vadd.f32 %v2189, %v2358
    %v2360 = vpop.f32.mrb[0].mxu0
    %v2361 = vadd.f32 %v2185, %v2360
    %v2362 = vpop.f32.mrb[0].mxu0
    %v2363 = vadd.f32 %v2189, %v2362
    %2364 = vmatprep.mubr.bf16.mxu0 0
    %2365 = vmatmul.mubr.bf16.gmra.mrb[0].mxu0 %v2162
    %v2366 = vpop.f32.mrb[0].mxu0
    %v2367 = vadd.f32 %v2185, %v2366
    %v2368 = vpop.f32.mrb[0].mxu0
    %v2369 = vadd.f32 %v2189, %v2368
    %v2370 = vpop.f32.mrb[0].mxu0
    %v2371 = vadd.f32 %v2185, %v2370
    %v2372 = vpop.f32.mrb[0].mxu0
    %v2373 = vadd.f32 %v2189, %v2372
    %2374 = vmatprep.mubr.bf16.mxu0 0
    %2375 = vmatmul.mubr.bf16.gmra.mrb[0].mxu0 %v2163
    %v2376 = vpop.f32.mrb[0].mxu0
    %v2377 = vadd.f32 %v2185, %v2376
    %v2378 = vpop.f32.mrb[0].mxu0
    %v2379 = vadd.f32 %v2189, %v2378
    %v2380 = vpop.f32.mrb[0].mxu0
    %v2381 = vadd.f32 %v2185, %v2380
    %v2382 = vpop.f32.mrb[0].mxu0
    %v2383 = vadd.f32 %v2189, %v2382
    %2384 = vdwg.mxu0
    %v2385 = vpack.c.bf16 %v2311, %v2307
    %v2386 = vpack.c.bf16 %v2321, %v2317
    %v2387 = vpack.c.bf16 %v2331, %v2327
    %v2388 = vpack.c.bf16 %v2341, %v2337
    %v2389 = vpack.c.bf16 %v2351, %v2347
    %v2390 = vpack.c.bf16 %v2361, %v2357
    %v2391 = vpack.c.bf16 %v2371, %v2367
    %v2392 = vpack.c.bf16 %v2381, %v2377
    %v2393 = vxor.u32 %v2385, 2147516416
    %v2394 = vxor.u32 %v2386, 2147516416
    %v2395 = vxor.u32 %v2387, 2147516416
    %v2396 = vxor.u32 %v2388, 2147516416
    %v2397 = vxor.u32 %v2389, 2147516416
    %v2398 = vxor.u32 %v2390, 2147516416
    %v2399 = vxor.u32 %v2391, 2147516416
    %v2400 = vxor.u32 %v2392, 2147516416
    %v2402 = vmul.bf16 %v2393, 1069105081
    %v2403 = vpow.bf16.pop %v2402
    %v2405 = vmul.bf16 %v2394, 1069105081
    %v2406 = vpow.bf16.pop %v2405
    %v2408 = vmul.bf16 %v2395, 1069105081
    %v2409 = vpow.bf16.pop %v2408
    %v2411 = vmul.bf16 %v2396, 1069105081
    %v2412 = vpow.bf16.pop %v2411
    %v2414 = vmul.bf16 %v2397, 1069105081
    %v2415 = vpow.bf16.pop %v2414
    %v2417 = vmul.bf16 %v2398, 1069105081
    %v2418 = vpow.bf16.pop %v2417
    %v2420 = vmul.bf16 %v2399, 1069105081
    %v2421 = vpow.bf16.pop %v2420
    %v2423 = vmul.bf16 %v2400, 1069105081
    %v2424 = vpow.bf16.pop %v2423
    %v2425 = vadd.bf16 %v2403, 1065369472
    %v2426 = vadd.bf16 %v2406, 1065369472
    %v2427 = vadd.bf16 %v2409, 1065369472
    %v2428 = vadd.bf16 %v2412, 1065369472
    %v2429 = vadd.bf16 %v2415, 1065369472
    %v2430 = vadd.bf16 %v2418, 1065369472
    %v2431 = vadd.bf16 %v2421, 1065369472
    %v2432 = vadd.bf16 %v2424, 1065369472
    %v2433 = vrcp.bf16.pop %v2425
    %v2434 = vmul.bf16 1065369472, %v2433
    %v2435 = vrcp.bf16.pop %v2426
    %v2436 = vmul.bf16 1065369472, %v2435
    %v2437 = vrcp.bf16.pop %v2427
    %v2438 = vmul.bf16 1065369472, %v2437
    %v2439 = vrcp.bf16.pop %v2428
    %v2440 = vmul.bf16 1065369472, %v2439
    %v2441 = vrcp.bf16.pop %v2429
    %v2442 = vmul.bf16 1065369472, %v2441
    %v2443 = vrcp.bf16.pop %v2430
    %v2444 = vmul.bf16 1065369472, %v2443
    %v2445 = vrcp.bf16.pop %v2431
    %v2446 = vmul.bf16 1065369472, %v2445
    %v2447 = vrcp.bf16.pop %v2432
    %v2448 = vmul.bf16 1065369472, %v2447
    %v2449 = vunpack.c.l.bf16 %v2434
    %v2450 = vunpack.c.h.bf16 %v2434
    %v2451 = vunpack.c.l.bf16 %v2436
    %v2452 = vunpack.c.h.bf16 %v2436
    %v2453 = vunpack.c.l.bf16 %v2438
    %v2454 = vunpack.c.h.bf16 %v2438
    %v2455 = vunpack.c.l.bf16 %v2440
    %v2456 = vunpack.c.h.bf16 %v2440
    %v2457 = vunpack.c.l.bf16 %v2442
    %v2458 = vunpack.c.h.bf16 %v2442
    %v2459 = vunpack.c.l.bf16 %v2444
    %v2460 = vunpack.c.h.bf16 %v2444
    %v2461 = vunpack.c.l.bf16 %v2446
    %v2462 = vunpack.c.h.bf16 %v2446
    %v2463 = vunpack.c.l.bf16 %v2448
    %v2464 = vunpack.c.h.bf16 %v2448
    %vm2465 = vcmp.ge.f32.partialorder %v2309, 0.0
    %vm2466 = vcmp.ge.f32.partialorder %v2313, 0.0
    %vm2467 = vcmp.ge.f32.partialorder %v2319, 0.0
    %vm2468 = vcmp.ge.f32.partialorder %v2323, 0.0
    %vm2469 = vcmp.ge.f32.partialorder %v2329, 0.0
    %vm2470 = vcmp.ge.f32.partialorder %v2333, 0.0
    %vm2471 = vcmp.ge.f32.partialorder %v2339, 0.0
    %vm2472 = vcmp.ge.f32.partialorder %v2343, 0.0
    %vm2473 = vcmp.ge.f32.partialorder %v2349, 0.0
    %vm2474 = vcmp.ge.f32.partialorder %v2353, 0.0
    %vm2475 = vcmp.ge.f32.partialorder %v2359, 0.0
    %vm2476 = vcmp.ge.f32.partialorder %v2363, 0.0
    %vm2477 = vcmp.ge.f32.partialorder %v2369, 0.0
    %vm2478 = vcmp.ge.f32.partialorder %v2373, 0.0
    %vm2479 = vcmp.ge.f32.partialorder %v2379, 0.0
    %vm2480 = vcmp.ge.f32.partialorder %v2383, 0.0
    %v2481 = vadd.f32 %v2309, 0.5
    %v2482 = vadd.f32 %v2313, 0.5
    %v2483 = vadd.f32 %v2319, 0.5
    %v2484 = vadd.f32 %v2323, 0.5
    %v2485 = vadd.f32 %v2329, 0.5
    %v2486 = vadd.f32 %v2333, 0.5
    %v2487 = vadd.f32 %v2339, 0.5
    %v2488 = vadd.f32 %v2343, 0.5
    %v2489 = vadd.f32 %v2349, 0.5
    %v2490 = vadd.f32 %v2353, 0.5
    %v2491 = vadd.f32 %v2359, 0.5
    %v2492 = vadd.f32 %v2363, 0.5
    %v2493 = vadd.f32 %v2369, 0.5
    %v2494 = vadd.f32 %v2373, 0.5
    %v2495 = vadd.f32 %v2379, 0.5
    %v2496 = vadd.f32 %v2383, 0.5
    %v2497 = vpack.c.bf16 %v2313, %v2309
    %v2498 = vpack.c.bf16 %v2323, %v2319
    %v2499 = vpack.c.bf16 %v2333, %v2329
    %v2500 = vpack.c.bf16 %v2343, %v2339
    %v2501 = vpack.c.bf16 %v2353, %v2349
    %v2502 = vpack.c.bf16 %v2363, %v2359
    %v2503 = vpack.c.bf16 %v2373, %v2369
    %v2504 = vpack.c.bf16 %v2383, %v2379
    %v2505 = vxor.u32 %v2497, 2147516416
    %v2506 = vxor.u32 %v2498, 2147516416
    %v2507 = vxor.u32 %v2499, 2147516416
    %v2508 = vxor.u32 %v2500, 2147516416
    %v2509 = vxor.u32 %v2501, 2147516416
    %v2510 = vxor.u32 %v2502, 2147516416
    %v2511 = vxor.u32 %v2503, 2147516416
    %v2512 = vxor.u32 %v2504, 2147516416
    %v2514 = vmul.bf16 %v2505, 1069105081
    %v2515 = vpow.bf16.pop %v2514
    %v2517 = vmul.bf16 %v2506, 1069105081
    %v2518 = vpow.bf16.pop %v2517
    %v2520 = vmul.bf16 %v2507, 1069105081
    %v2521 = vpow.bf16.pop %v2520
    %v2523 = vmul.bf16 %v2508, 1069105081
    %v2524 = vpow.bf16.pop %v2523
    %v2526 = vmul.bf16 %v2509, 1069105081
    %v2527 = vpow.bf16.pop %v2526
    %v2529 = vmul.bf16 %v2510, 1069105081
    %v2530 = vpow.bf16.pop %v2529
    %v2532 = vmul.bf16 %v2511, 1069105081
    %v2533 = vpow.bf16.pop %v2532
    %v2535 = vmul.bf16 %v2512, 1069105081
    %v2536 = vpow.bf16.pop %v2535
    %v2537 = vadd.bf16 %v2515, 1065369472
    %v2538 = vadd.bf16 %v2518, 1065369472
    %v2539 = vadd.bf16 %v2521, 1065369472
    %v2540 = vadd.bf16 %v2524, 1065369472
    %v2541 = vadd.bf16 %v2527, 1065369472
    %v2542 = vadd.bf16 %v2530, 1065369472
    %v2543 = vadd.bf16 %v2533, 1065369472
    %v2544 = vadd.bf16 %v2536, 1065369472
    %v2545 = vrcp.bf16.pop %v2537
    %v2546 = vmul.bf16 1065369472, %v2545
    %v2547 = vrcp.bf16.pop %v2538
    %v2548 = vmul.bf16 1065369472, %v2547
    %v2549 = vrcp.bf16.pop %v2539
    %v2550 = vmul.bf16 1065369472, %v2549
    %v2551 = vrcp.bf16.pop %v2540
    %v2552 = vmul.bf16 1065369472, %v2551
    %v2553 = vrcp.bf16.pop %v2541
    %v2554 = vmul.bf16 1065369472, %v2553
    %v2555 = vrcp.bf16.pop %v2542
    %v2556 = vmul.bf16 1065369472, %v2555
    %v2557 = vrcp.bf16.pop %v2543
    %v2558 = vmul.bf16 1065369472, %v2557
    %v2559 = vrcp.bf16.pop %v2544
    %v2560 = vmul.bf16 1065369472, %v2559
    %v2561 = vunpack.c.l.bf16 %v2546
    %v2562 = vunpack.c.h.bf16 %v2546
    %v2563 = vunpack.c.l.bf16 %v2548
    %v2564 = vunpack.c.h.bf16 %v2548
    %v2565 = vunpack.c.l.bf16 %v2550
    %v2566 = vunpack.c.h.bf16 %v2550
    %v2567 = vunpack.c.l.bf16 %v2552
    %v2568 = vunpack.c.h.bf16 %v2552
    %v2569 = vunpack.c.l.bf16 %v2554
    %v2570 = vunpack.c.h.bf16 %v2554
    %v2571 = vunpack.c.l.bf16 %v2556
    %v2572 = vunpack.c.h.bf16 %v2556
    %v2573 = vunpack.c.l.bf16 %v2558
    %v2574 = vunpack.c.h.bf16 %v2558
    %v2575 = vunpack.c.l.bf16 %v2560
    %v2576 = vunpack.c.h.bf16 %v2560
    %v2577 = vsel %vm2465, %v2481, %v2561
    %v2578 = vsel %vm2466, %v2482, %v2562
    %v2579 = vsel %vm2467, %v2483, %v2563
    %v2580 = vsel %vm2468, %v2484, %v2564
    %v2581 = vsel %vm2469, %v2485, %v2565
    %v2582 = vsel %vm2470, %v2486, %v2566
    %v2583 = vsel %vm2471, %v2487, %v2567
    %v2584 = vsel %vm2472, %v2488, %v2568
    %v2585 = vsel %vm2473, %v2489, %v2569
    %v2586 = vsel %vm2474, %v2490, %v2570
    %v2587 = vsel %vm2475, %v2491, %v2571
    %v2588 = vsel %vm2476, %v2492, %v2572
    %v2589 = vsel %vm2477, %v2493, %v2573
    %v2590 = vsel %vm2478, %v2494, %v2574
    %v2591 = vsel %vm2479, %v2495, %v2575
    %v2592 = vsel %vm2480, %v2496, %v2576
    %v2593 = vsel %vm354, 1, 0
    %vm2594 = vcmp.eq.s32.totalorder %v2593, 1
    %v2595 = vsel %vm2594, %v2577, 0.0
    %v2596 = vsel %vm2594, %v2578, 0.0
    %v2597 = vsel %vm2594, %v2579, 0.0
    %v2598 = vsel %vm2594, %v2580, 0.0
    %v2599 = vsel %vm2594, %v2581, 0.0
    %v2600 = vsel %vm2594, %v2582, 0.0
    %v2601 = vsel %vm2594, %v2583, 0.0
    %v2602 = vsel %vm2594, %v2584, 0.0
    %v2603 = vsel %vm2594, %v2585, 0.0
    %v2604 = vsel %vm2594, %v2586, 0.0
    %v2605 = vsel %vm2594, %v2587, 0.0
    %v2606 = vsel %vm2594, %v2588, 0.0
    %v2607 = vsel %vm2594, %v2589, 0.0
    %v2608 = vsel %vm2594, %v2590, 0.0
    %v2609 = vsel %vm2594, %v2591, 0.0
    %v2610 = vsel %vm2594, %v2592, 0.0
    %v2611 = vsub.f32 1.0, %v2449
    %v2612 = vsub.f32 1.0, %v2450
    %v2613 = vsub.f32 1.0, %v2451
    %v2614 = vsub.f32 1.0, %v2452
    %v2615 = vsub.f32 1.0, %v2453
    %v2616 = vsub.f32 1.0, %v2454
    %v2617 = vsub.f32 1.0, %v2455
    %v2618 = vsub.f32 1.0, %v2456
    %v2619 = vsub.f32 1.0, %v2457
    %v2620 = vsub.f32 1.0, %v2458
    %v2621 = vsub.f32 1.0, %v2459
    %v2622 = vsub.f32 1.0, %v2460
    %v2623 = vsub.f32 1.0, %v2461
    %v2624 = vsub.f32 1.0, %v2462
    %v2625 = vsub.f32 1.0, %v2463
    %v2626 = vsub.f32 1.0, %v2464
    %2627 = vst [vmem:[#allocation2] sm:$0xff] %v2611
    %2628 = vst [vmem:[#allocation2 + $0x8] sm:$0xff] %v2612
    %2629 = vst [vmem:[#allocation2 + $0x10] sm:$0xff] %v2613
    %2630 = vst [vmem:[#allocation2 + $0x18] sm:$0xff] %v2614
    %2631 = vst [vmem:[#allocation2 + $0x20] sm:$0xff] %v2615
    %2632 = vst [vmem:[#allocation2 + $0x28] sm:$0xff] %v2616
    %2633 = vst [vmem:[#allocation2 + $0x30] sm:$0xff] %v2617
    %2634 = vst [vmem:[#allocation2 + $0x38] sm:$0xff] %v2618
    %2635 = vst [vmem:[#allocation2 + $0x40] sm:$0xff] %v2619
    %2636 = vst [vmem:[#allocation2 + $0x48] sm:$0xff] %v2620
    %2637 = vst [vmem:[#allocation2 + $0x50] sm:$0xff] %v2621
    %2638 = vst [vmem:[#allocation2 + $0x58] sm:$0xff] %v2622
    %2639 = vst [vmem:[#allocation2 + $0x60] sm:$0xff] %v2623
    %2640 = vst [vmem:[#allocation2 + $0x68] sm:$0xff] %v2624
    %2641 = vst [vmem:[#allocation2 + $0x70] sm:$0xff] %v2625
    %2642 = vst [vmem:[#allocation2 + $0x78] sm:$0xff] %v2626
    %v2643 = vmul.f32 %v2449, %v2595
    %v2644 = vmul.f32 %v2450, %v2596
    %v2645 = vmul.f32 %v2451, %v2597
    %v2646 = vmul.f32 %v2452, %v2598
    %v2647 = vmul.f32 %v2453, %v2599
    %v2648 = vmul.f32 %v2454, %v2600
    %v2649 = vmul.f32 %v2455, %v2601
    %v2650 = vmul.f32 %v2456, %v2602
    %v2651 = vmul.f32 %v2457, %v2603
    %v2652 = vmul.f32 %v2458, %v2604
    %v2653 = vmul.f32 %v2459, %v2605
    %v2654 = vmul.f32 %v2460, %v2606
    %v2655 = vmul.f32 %v2461, %v2607
    %v2656 = vmul.f32 %v2462, %v2608
    %v2657 = vmul.f32 %v2463, %v2609
    %v2658 = vmul.f32 %v2464, %v2610
    %2659 = vst [vmem:[#allocation3] sm:$0xff] %v2643
    %2660 = vst [vmem:[#allocation3 + $0x8] sm:$0xff] %v2644
    %2661 = vst [vmem:[#allocation3 + $0x10] sm:$0xff] %v2645
    %2662 = vst [vmem:[#allocation3 + $0x18] sm:$0xff] %v2646
    %2663 = vst [vmem:[#allocation3 + $0x20] sm:$0xff] %v2647
    %2664 = vst [vmem:[#allocation3 + $0x28] sm:$0xff] %v2648
    %2665 = vst [vmem:[#allocation3 + $0x30] sm:$0xff] %v2649
    %2666 = vst [vmem:[#allocation3 + $0x38] sm:$0xff] %v2650
    %2667 = vst [vmem:[#allocation3 + $0x40] sm:$0xff] %v2651
    %2668 = vst [vmem:[#allocation3 + $0x48] sm:$0xff] %v2652
    %2669 = vst [vmem:[#allocation3 + $0x50] sm:$0xff] %v2653
    %2670 = vst [vmem:[#allocation3 + $0x58] sm:$0xff] %v2654
    %2671 = vst [vmem:[#allocation3 + $0x60] sm:$0xff] %v2655
    %2672 = vst [vmem:[#allocation3 + $0x68] sm:$0xff] %v2656
    %2673 = vst [vmem:[#allocation3 + $0x70] sm:$0xff] %v2657
    %2674 = vst [vmem:[#allocation3 + $0x78] sm:$0xff] %v2658
    %v2675 = vsel %vm2594, 0.5, 0.0
    %v2676 = vld [vmem:[#allocation2] sm:$0xff]
    %v2677 = vld [vmem:[#allocation2 + $0x8] sm:$0xff]
    %v2678 = vmul.f32 %v2676, %v2675
    %v2679 = vmul.f32 %v2677, %v2675
    %v2680 = vld [vmem:[#allocation3] sm:$0xff]
    %v2681 = vld [vmem:[#allocation3 + $0x8] sm:$0xff]
    %v2682 = vadd.f32 %v2678, %v2680
    %v2683 = vadd.f32 %v2679, %v2681
    %2684 = vst [vmem:[#allocation3] sm:$0xff] %v2682
    %2685 = vst [vmem:[#allocation3 + $0x8] sm:$0xff] %v2683
    %s2686 = scalar_lea.vmem [#allocation2], 16
    %v2687 = vld [vmem:[%s2686] sm:$0xff]
    %v2688 = vld [vmem:[%s2686 + $0x8] sm:$0xff]
    %v2689 = vmul.f32 %v2687, %v2682
    %v2690 = vmul.f32 %v2688, %v2683
    %s2691 = scalar_lea.vmem [#allocation3], 16
    %v2692 = vld [vmem:[%s2691] sm:$0xff]
    %v2693 = vld [vmem:[%s2691 + $0x8] sm:$0xff]
    %v2694 = vadd.f32 %v2689, %v2692
    %v2695 = vadd.f32 %v2690, %v2693
    %2696 = vst [vmem:[%s2691] sm:$0xff] %v2694
    %2697 = vst [vmem:[%s2691 + $0x8] sm:$0xff] %v2695
    %s2698 = scalar_lea.vmem [#allocation2], 32
    %v2699 = vld [vmem:[%s2698] sm:$0xff]
    %v2700 = vld [vmem:[%s2698 + $0x8] sm:$0xff]
    %v2701 = vmul.f32 %v2699, %v2694
    %v2702 = vmul.f32 %v2700, %v2695
    %s2703 = scalar_lea.vmem [#allocation3], 32
    %v2704 = vld [vmem:[%s2703] sm:$0xff]
    %v2705 = vld [vmem:[%s2703 + $0x8] sm:$0xff]
    %v2706 = vadd.f32 %v2701, %v2704
    %v2707 = vadd.f32 %v2702, %v2705
    %2708 = vst [vmem:[%s2703] sm:$0xff] %v2706
    %2709 = vst [vmem:[%s2703 + $0x8] sm:$0xff] %v2707
    %s2710 = scalar_lea.vmem [#allocation2], 48
    %v2711 = vld [vmem:[%s2710] sm:$0xff]
    %v2712 = vld [vmem:[%s2710 + $0x8] sm:$0xff]
    %v2713 = vmul.f32 %v2711, %v2706
    %v2714 = vmul.f32 %v2712, %v2707
    %s2715 = scalar_lea.vmem [#allocation3], 48
    %v2716 = vld [vmem:[%s2715] sm:$0xff]
    %v2717 = vld [vmem:[%s2715 + $0x8] sm:$0xff]
    %v2718 = vadd.f32 %v2713, %v2716
    %v2719 = vadd.f32 %v2714, %v2717
    %2720 = vst [vmem:[%s2715] sm:$0xff] %v2718
    %2721 = vst [vmem:[%s2715 + $0x8] sm:$0xff] %v2719
    %s2722 = scalar_lea.vmem [#allocation2], 64
    %v2723 = vld [vmem:[%s2722] sm:$0xff]
    %v2724 = vld [vmem:[%s2722 + $0x8] sm:$0xff]
    %v2725 = vmul.f32 %v2723, %v2718
    %v2726 = vmul.f32 %v2724, %v2719
    %s2727 = scalar_lea.vmem [#allocation3], 64
    %v2728 = vld [vmem:[%s2727] sm:$0xff]
    %v2729 = vld [vmem:[%s2727 + $0x8] sm:$0xff]
    %v2730 = vadd.f32 %v2725, %v2728
    %v2731 = vadd.f32 %v2726, %v2729
    %2732 = vst [vmem:[%s2727] sm:$0xff] %v2730
    %2733 = vst [vmem:[%s2727 + $0x8] sm:$0xff] %v2731
    %s2734 = scalar_lea.vmem [#allocation2], 80
    %v2735 = vld [vmem:[%s2734] sm:$0xff]
    %v2736 = vld [vmem:[%s2734 + $0x8] sm:$0xff]
    %v2737 = vmul.f32 %v2735, %v2730
    %v2738 = vmul.f32 %v2736, %v2731
    %s2739 = scalar_lea.vmem [#allocation3], 80
    %v2740 = vld [vmem:[%s2739] sm:$0xff]
    %v2741 = vld [vmem:[%s2739 + $0x8] sm:$0xff]
    %v2742 = vadd.f32 %v2737, %v2740
    %v2743 = vadd.f32 %v2738, %v2741
    %2744 = vst [vmem:[%s2739] sm:$0xff] %v2742
    %2745 = vst [vmem:[%s2739 + $0x8] sm:$0xff] %v2743
    %s2746 = scalar_lea.vmem [#allocation2], 96
    %v2747 = vld [vmem:[%s2746] sm:$0xff]
    %v2748 = vld [vmem:[%s2746 + $0x8] sm:$0xff]
    %v2749 = vmul.f32 %v2747, %v2742
    %v2750 = vmul.f32 %v2748, %v2743
    %s2751 = scalar_lea.vmem [#allocation3], 96
    %v2752 = vld [vmem:[%s2751] sm:$0xff]
    %v2753 = vld [vmem:[%s2751 + $0x8] sm:$0xff]
    %v2754 = vadd.f32 %v2749, %v2752
    %v2755 = vadd.f32 %v2750, %v2753
    %2756 = vst [vmem:[%s2751] sm:$0xff] %v2754
    %2757 = vst [vmem:[%s2751 + $0x8] sm:$0xff] %v2755
    %s2758 = scalar_lea.vmem [#allocation2], 112
    %v2759 = vld [vmem:[%s2758] sm:$0xff]
    %v2760 = vld [vmem:[%s2758 + $0x8] sm:$0xff]
    %v2761 = vmul.f32 %v2759, %v2754
    %v2762 = vmul.f32 %v2760, %v2755
    %s2763 = scalar_lea.vmem [#allocation3], 112
    %v2764 = vld [vmem:[%s2763] sm:$0xff]
    %v2765 = vld [vmem:[%s2763 + $0x8] sm:$0xff]
    %v2766 = vadd.f32 %v2761, %v2764
    %v2767 = vadd.f32 %v2762, %v2765
    %2768 = vst [vmem:[%s2763] sm:$0xff] %v2766
    %2769 = vst [vmem:[%s2763 + $0x8] sm:$0xff] %v2767
    %v2770 = vld [vmem:[#allocation3] sm:$0xff]
    %v2771 = vld [vmem:[#allocation3 + $0x8] sm:$0xff]
    %v2772 = vld [vmem:[#allocation3 + $0x10] sm:$0xff]
    %v2773 = vld [vmem:[#allocation3 + $0x18] sm:$0xff]
    %v2774 = vld [vmem:[#allocation3 + $0x20] sm:$0xff]
    %v2775 = vld [vmem:[#allocation3 + $0x28] sm:$0xff]
    %v2776 = vld [vmem:[#allocation3 + $0x30] sm:$0xff]
    %v2777 = vld [vmem:[#allocation3 + $0x38] sm:$0xff]
    %v2778 = vld [vmem:[#allocation3 + $0x40] sm:$0xff]
    %v2779 = vld [vmem:[#allocation3 + $0x48] sm:$0xff]
    %v2780 = vld [vmem:[#allocation3 + $0x50] sm:$0xff]
    %v2781 = vld [vmem:[#allocation3 + $0x58] sm:$0xff]
    %v2782 = vld [vmem:[#allocation3 + $0x60] sm:$0xff]
    %v2783 = vld [vmem:[#allocation3 + $0x68] sm:$0xff]
    %v2784 = vld [vmem:[#allocation3 + $0x70] sm:$0xff]
    %v2785 = vld [vmem:[#allocation3 + $0x78] sm:$0xff]
    %v2786 = vld [vmem:[%s11] sm:$0x1]
    %v2787 = vld [vmem:[%s12] sm:$0x1]
    %2788 = vadd.xlane.f32.xlu0 %v2770
    %v2789 = vpop.xlane.xlu0 %2788
    %2790 = vadd.xlane.f32.xlu0 %v2771
    %v2791 = vpop.xlane.xlu0 %2790
    %2792 = vadd.xlane.f32.xlu0 %v2772
    %v2793 = vpop.xlane.xlu0 %2792
    %2794 = vadd.xlane.f32.xlu0 %v2773
    %v2795 = vpop.xlane.xlu0 %2794
    %2796 = vadd.xlane.f32.xlu0 %v2774
    %v2797 = vpop.xlane.xlu0 %2796
    %2798 = vadd.xlane.f32.xlu0 %v2775
    %v2799 = vpop.xlane.xlu0 %2798
    %2800 = vadd.xlane.f32.xlu0 %v2776
    %v2801 = vpop.xlane.xlu0 %2800
    %2802 = vadd.xlane.f32.xlu0 %v2777
    %v2803 = vpop.xlane.xlu0 %2802
    %2804 = vadd.xlane.f32.xlu0 %v2778
    %v2805 = vpop.xlane.xlu0 %2804
    %2806 = vadd.xlane.f32.xlu0 %v2779
    %v2807 = vpop.xlane.xlu0 %2806
    %2808 = vadd.xlane.f32.xlu0 %v2780
    %v2809 = vpop.xlane.xlu0 %2808
    %2810 = vadd.xlane.f32.xlu0 %v2781
    %v2811 = vpop.xlane.xlu0 %2810
    %2812 = vadd.xlane.f32.xlu0 %v2782
    %v2813 = vpop.xlane.xlu0 %2812
    %2814 = vadd.xlane.f32.xlu0 %v2783
    %v2815 = vpop.xlane.xlu0 %2814
    %2816 = vadd.xlane.f32.xlu0 %v2784
    %v2817 = vpop.xlane.xlu0 %2816
    %2818 = vadd.xlane.f32.xlu0 %v2785
    %v2819 = vpop.xlane.xlu0 %2818
    %v2820 = vmul.f32 %v2789, 0.03125
    %v2821 = vmul.f32 %v2791, 0.03125
    %v2822 = vmul.f32 %v2793, 0.03125
    %v2823 = vmul.f32 %v2795, 0.03125
    %v2824 = vmul.f32 %v2797, 0.03125
    %v2825 = vmul.f32 %v2799, 0.03125
    %v2826 = vmul.f32 %v2801, 0.03125
    %v2827 = vmul.f32 %v2803, 0.03125
    %v2828 = vmul.f32 %v2805, 0.03125
    %v2829 = vmul.f32 %v2807, 0.03125
    %v2830 = vmul.f32 %v2809, 0.03125
    %v2831 = vmul.f32 %v2811, 0.03125
    %v2832 = vmul.f32 %v2813, 0.03125
    %v2833 = vmul.f32 %v2815, 0.03125
    %v2834 = vmul.f32 %v2817, 0.03125
    %v2835 = vmul.f32 %v2819, 0.03125
    %v2836 = vmul.f32 %v2770, %v2770
    %v2837 = vmul.f32 %v2771, %v2771
    %v2838 = vmul.f32 %v2772, %v2772
    %v2839 = vmul.f32 %v2773, %v2773
    %v2840 = vmul.f32 %v2774, %v2774
    %v2841 = vmul.f32 %v2775, %v2775
    %v2842 = vmul.f32 %v2776, %v2776
    %v2843 = vmul.f32 %v2777, %v2777
    %v2844 = vmul.f32 %v2778, %v2778
    %v2845 = vmul.f32 %v2779, %v2779
    %v2846 = vmul.f32 %v2780, %v2780
    %v2847 = vmul.f32 %v2781, %v2781
    %v2848 = vmul.f32 %v2782, %v2782
    %v2849 = vmul.f32 %v2783, %v2783
    %v2850 = vmul.f32 %v2784, %v2784
    %v2851 = vmul.f32 %v2785, %v2785
    %2852 = vadd.xlane.f32.xlu0 %v2836
    %v2853 = vpop.xlane.xlu0 %2852
    %2854 = vadd.xlane.f32.xlu0 %v2837
    %v2855 = vpop.xlane.xlu0 %2854
    %2856 = vadd.xlane.f32.xlu0 %v2838
    %v2857 = vpop.xlane.xlu0 %2856
    %2858 = vadd.xlane.f32.xlu0 %v2839
    %v2859 = vpop.xlane.xlu0 %2858
    %2860 = vadd.xlane.f32.xlu0 %v2840
    %v2861 = vpop.xlane.xlu0 %2860
    %2862 = vadd.xlane.f32.xlu0 %v2841
    %v2863 = vpop.xlane.xlu0 %2862
    %2864 = vadd.xlane.f32.xlu0 %v2842
    %v2865 = vpop.xlane.xlu0 %2864
    %2866 = vadd.xlane.f32.xlu0 %v2843
    %v2867 = vpop.xlane.xlu0 %2866
    %2868 = vadd.xlane.f32.xlu0 %v2844
    %v2869 = vpop.xlane.xlu0 %2868
    %2870 = vadd.xlane.f32.xlu0 %v2845
    %v2871 = vpop.xlane.xlu0 %2870
    %2872 = vadd.xlane.f32.xlu0 %v2846
    %v2873 = vpop.xlane.xlu0 %2872
    %2874 = vadd.xlane.f32.xlu0 %v2847
    %v2875 = vpop.xlane.xlu0 %2874
    %2876 = vadd.xlane.f32.xlu0 %v2848
    %v2877 = vpop.xlane.xlu0 %2876
    %2878 = vadd.xlane.f32.xlu0 %v2849
    %v2879 = vpop.xlane.xlu0 %2878
    %2880 = vadd.xlane.f32.xlu0 %v2850
    %v2881 = vpop.xlane.xlu0 %2880
    %2882 = vadd.xlane.f32.xlu0 %v2851
    %v2883 = vpop.xlane.xlu0 %2882
    %v2884 = vmul.f32 %v2853, 0.03125
    %v2885 = vmul.f32 %v2855, 0.03125
    %v2886 = vmul.f32 %v2857, 0.03125
    %v2887 = vmul.f32 %v2859, 0.03125
    %v2888 = vmul.f32 %v2861, 0.03125
    %v2889 = vmul.f32 %v2863, 0.03125
    %v2890 = vmul.f32 %v2865, 0.03125
    %v2891 = vmul.f32 %v2867, 0.03125
    %v2892 = vmul.f32 %v2869, 0.03125
    %v2893 = vmul.f32 %v2871, 0.03125
    %v2894 = vmul.f32 %v2873, 0.03125
    %v2895 = vmul.f32 %v2875, 0.03125
    %v2896 = vmul.f32 %v2877, 0.03125
    %v2897 = vmul.f32 %v2879, 0.03125
    %v2898 = vmul.f32 %v2881, 0.03125
    %v2899 = vmul.f32 %v2883, 0.03125
    %v2900 = vmul.f32 %v2820, %v2820
    %v2901 = vmul.f32 %v2821, %v2821
    %v2902 = vmul.f32 %v2822, %v2822
    %v2903 = vmul.f32 %v2823, %v2823
    %v2904 = vmul.f32 %v2824, %v2824
    %v2905 = vmul.f32 %v2825, %v2825
    %v2906 = vmul.f32 %v2826, %v2826
    %v2907 = vmul.f32 %v2827, %v2827
    %v2908 = vmul.f32 %v2828, %v2828
    %v2909 = vmul.f32 %v2829, %v2829
    %v2910 = vmul.f32 %v2830, %v2830
    %v2911 = vmul.f32 %v2831, %v2831
    %v2912 = vmul.f32 %v2832, %v2832
    %v2913 = vmul.f32 %v2833, %v2833
    %v2914 = vmul.f32 %v2834, %v2834
    %v2915 = vmul.f32 %v2835, %v2835
    %v2916 = vsub.f32 %v2884, %v2900
    %v2917 = vsub.f32 %v2885, %v2901
    %v2918 = vsub.f32 %v2886, %v2902
    %v2919 = vsub.f32 %v2887, %v2903
    %v2920 = vsub.f32 %v2888, %v2904
    %v2921 = vsub.f32 %v2889, %v2905
    %v2922 = vsub.f32 %v2890, %v2906
    %v2923 = vsub.f32 %v2891, %v2907
    %v2924 = vsub.f32 %v2892, %v2908
    %v2925 = vsub.f32 %v2893, %v2909
    %v2926 = vsub.f32 %v2894, %v2910
    %v2927 = vsub.f32 %v2895, %v2911
    %v2928 = vsub.f32 %v2896, %v2912
    %v2929 = vsub.f32 %v2897, %v2913
    %v2930 = vsub.f32 %v2898, %v2914
    %v2931 = vsub.f32 %v2899, %v2915
    %v2932 = vmax.f32 %v2916, 0.0
    %v2933 = vmax.f32 %v2917, 0.0
    %v2934 = vmax.f32 %v2918, 0.0
    %v2935 = vmax.f32 %v2919, 0.0
    %v2936 = vmax.f32 %v2920, 0.0
    %v2937 = vmax.f32 %v2921, 0.0
    %v2938 = vmax.f32 %v2922, 0.0
    %v2939 = vmax.f32 %v2923, 0.0
    %v2940 = vmax.f32 %v2924, 0.0
    %v2941 = vmax.f32 %v2925, 0.0
    %v2942 = vmax.f32 %v2926, 0.0
    %v2943 = vmax.f32 %v2927, 0.0
    %v2944 = vmax.f32 %v2928, 0.0
    %v2945 = vmax.f32 %v2929, 0.0
    %v2946 = vmax.f32 %v2930, 0.0
    %v2947 = vmax.f32 %v2931, 0.0
    %v2948 = vsub.f32 %v2770, %v2820
    %v2949 = vsub.f32 %v2771, %v2821
    %v2950 = vsub.f32 %v2772, %v2822
    %v2951 = vsub.f32 %v2773, %v2823
    %v2952 = vsub.f32 %v2774, %v2824
    %v2953 = vsub.f32 %v2775, %v2825
    %v2954 = vsub.f32 %v2776, %v2826
    %v2955 = vsub.f32 %v2777, %v2827
    %v2956 = vsub.f32 %v2778, %v2828
    %v2957 = vsub.f32 %v2779, %v2829
    %v2958 = vsub.f32 %v2780, %v2830
    %v2959 = vsub.f32 %v2781, %v2831
    %v2960 = vsub.f32 %v2782, %v2832
    %v2961 = vsub.f32 %v2783, %v2833
    %v2962 = vsub.f32 %v2784, %v2834
    %v2963 = vsub.f32 %v2785, %v2835
    %v2964 = vadd.f32 %v2932, 1e-05
    %v2965 = vadd.f32 %v2933, 1e-05
    %v2966 = vadd.f32 %v2934, 1e-05
    %v2967 = vadd.f32 %v2935, 1e-05
    %v2968 = vadd.f32 %v2936, 1e-05
    %v2969 = vadd.f32 %v2937, 1e-05
    %v2970 = vadd.f32 %v2938, 1e-05
    %v2971 = vadd.f32 %v2939, 1e-05
    %v2972 = vadd.f32 %v2940, 1e-05
    %v2973 = vadd.f32 %v2941, 1e-05
    %v2974 = vadd.f32 %v2942, 1e-05
    %v2975 = vadd.f32 %v2943, 1e-05
    %v2976 = vadd.f32 %v2944, 1e-05
    %v2977 = vadd.f32 %v2945, 1e-05
    %v2978 = vadd.f32 %v2946, 1e-05
    %v2979 = vadd.f32 %v2947, 1e-05
    %v2980 = vrsqrt.pop %v2964
    %v2981 = vrsqrt.pop %v2965
    %v2982 = vrsqrt.pop %v2966
    %v2983 = vrsqrt.pop %v2967
    %v2984 = vrsqrt.pop %v2968
    %v2985 = vrsqrt.pop %v2969
    %v2986 = vrsqrt.pop %v2970
    %v2987 = vrsqrt.pop %v2971
    %v2988 = vrsqrt.pop %v2972
    %v2989 = vrsqrt.pop %v2973
    %v2990 = vrsqrt.pop %v2974
    %v2991 = vrsqrt.pop %v2975
    %v2992 = vrsqrt.pop %v2976
    %v2993 = vrsqrt.pop %v2977
    %v2994 = vrsqrt.pop %v2978
    %v2995 = vrsqrt.pop %v2979
    %v2996 = vmul.f32 %v2948, %v2980
    %v2997 = vmul.f32 %v2949, %v2981
    %v2998 = vmul.f32 %v2950, %v2982
    %v2999 = vmul.f32 %v2951, %v2983
    %v3000 = vmul.f32 %v2952, %v2984
    %v3001 = vmul.f32 %v2953, %v2985
    %v3002 = vmul.f32 %v2954, %v2986
    %v3003 = vmul.f32 %v2955, %v2987
    %v3004 = vmul.f32 %v2956, %v2988
    %v3005 = vmul.f32 %v2957, %v2989
    %v3006 = vmul.f32 %v2958, %v2990
    %v3007 = vmul.f32 %v2959, %v2991
    %v3008 = vmul.f32 %v2960, %v2992
    %v3009 = vmul.f32 %v2961, %v2993
    %v3010 = vmul.f32 %v2962, %v2994
    %v3011 = vmul.f32 %v2963, %v2995
    %v3013 = vlaneseq
    %v3014 = vshrl.u32 %v3013, 7
    %v3015 = vsub.s32 0, %v3014
    %v3016 = vrot.slane %v2786, %v3015
    %v3018 = vmul.f32 %v2996, %v3016
    %v3019 = vmul.f32 %v2997, %v3016
    %v3020 = vmul.f32 %v2998, %v3016
    %v3021 = vmul.f32 %v2999, %v3016
    %v3022 = vmul.f32 %v3000, %v3016
    %v3023 = vmul.f32 %v3001, %v3016
    %v3024 = vmul.f32 %v3002, %v3016
    %v3025 = vmul.f32 %v3003, %v3016
    %v3026 = vmul.f32 %v3004, %v3016
    %v3027 = vmul.f32 %v3005, %v3016
    %v3028 = vmul.f32 %v3006, %v3016
    %v3029 = vmul.f32 %v3007, %v3016
    %v3030 = vmul.f32 %v3008, %v3016
    %v3031 = vmul.f32 %v3009, %v3016
    %v3032 = vmul.f32 %v3010, %v3016
    %v3033 = vmul.f32 %v3011, %v3016
    %v3035 = vlaneseq
    %v3036 = vshrl.u32 %v3035, 7
    %v3037 = vsub.s32 0, %v3036
    %v3038 = vrot.slane %v2787, %v3037
    %v3040 = vadd.f32 %v3018, %v3038
    %v3041 = vadd.f32 %v3019, %v3038
    %v3042 = vadd.f32 %v3020, %v3038
    %v3043 = vadd.f32 %v3021, %v3038
    %v3044 = vadd.f32 %v3022, %v3038
    %v3045 = vadd.f32 %v3023, %v3038
    %v3046 = vadd.f32 %v3024, %v3038
    %v3047 = vadd.f32 %v3025, %v3038
    %v3048 = vadd.f32 %v3026, %v3038
    %v3049 = vadd.f32 %v3027, %v3038
    %v3050 = vadd.f32 %v3028, %v3038
    %v3051 = vadd.f32 %v3029, %v3038
    %v3052 = vadd.f32 %v3030, %v3038
    %v3053 = vadd.f32 %v3031, %v3038
    %v3054 = vadd.f32 %v3032, %v3038
    %v3055 = vadd.f32 %v3033, %v3038
    %v3056 = vmul.f32 %v3040, %v1196
    %v3057 = vmul.f32 %v3041, %v1197
    %v3058 = vmul.f32 %v3042, %v1198
    %v3059 = vmul.f32 %v3043, %v1199
    %v3060 = vmul.f32 %v3044, %v1200
    %v3061 = vmul.f32 %v3045, %v1201
    %v3062 = vmul.f32 %v3046, %v1202
    %v3063 = vmul.f32 %v3047, %v1203
    %v3064 = vmul.f32 %v3048, %v1204
    %v3065 = vmul.f32 %v3049, %v1205
    %v3066 = vmul.f32 %v3050, %v1206
    %v3067 = vmul.f32 %v3051, %v1207
    %v3068 = vmul.f32 %v3052, %v1208
    %v3069 = vmul.f32 %v3053, %v1209
    %v3070 = vmul.f32 %v3054, %v1210
    %v3071 = vmul.f32 %v3055, %v1211
    %v3072 = vpack.c.bf16 %v3057, %v3056
    %v3073 = vpack.c.bf16 %v3059, %v3058
    %v3074 = vpack.c.bf16 %v3061, %v3060
    %v3075 = vpack.c.bf16 %v3063, %v3062
    %v3076 = vpack.c.bf16 %v3065, %v3064
    %v3077 = vpack.c.bf16 %v3067, %v3066
    %v3078 = vpack.c.bf16 %v3069, %v3068
    %v3079 = vpack.c.bf16 %v3071, %v3070
    %v3080 = vld [vmem:[%s13] sm:$0xf]
    %v3081 = vld [vmem:[%s13 + $0x4] sm:$0xf]
    %v3082 = vld [vmem:[%s13 + $0x8] sm:$0xf]
    %v3083 = vld [vmem:[%s13 + $0xc] sm:$0xf]
    %v3084 = vld [vmem:[%s13 + $0x10] sm:$0xf]
    %v3085 = vld [vmem:[%s13 + $0x14] sm:$0xf]
    %v3086 = vld [vmem:[%s13 + $0x18] sm:$0xf]
    %v3087 = vld [vmem:[%s13 + $0x1c] sm:$0xf]
    %v3088 = vld [vmem:[%s13 + $0x20] sm:$0xf]
    %v3089 = vld [vmem:[%s13 + $0x24] sm:$0xf]
    %v3090 = vld [vmem:[%s13 + $0x28] sm:$0xf]
    %v3091 = vld [vmem:[%s13 + $0x2c] sm:$0xf]
    %v3092 = vld [vmem:[%s13 + $0x30] sm:$0xf]
    %v3093 = vld [vmem:[%s13 + $0x34] sm:$0xf]
    %v3094 = vld [vmem:[%s13 + $0x38] sm:$0xf]
    %v3095 = vld [vmem:[%s13 + $0x3c] sm:$0xf]
    %v3096 = vld [vmem:[%s14] sm:$0x1]
    %v3098 = vlaneseq
    %v3099 = vshrl.u32 %v3098, 7
    %v3100 = vsub.s32 0, %v3099
    %v3101 = vrot.slane %v3096, %v3100
    %v3119 = vunpack.c.l.b16 %v3080
    %v3120 = vunpack.c.l.b16 %v3081
    %v3121 = vunpack.c.l.b16 %v3082
    %v3122 = vunpack.c.l.b16 %v3083
    %v3123 = vunpack.c.l.b16 %v3084
    %v3124 = vunpack.c.l.b16 %v3085
    %v3125 = vunpack.c.l.b16 %v3086
    %v3126 = vunpack.c.l.b16 %v3087
    %v3127 = vunpack.c.l.b16 %v3088
    %v3128 = vunpack.c.l.b16 %v3089
    %v3129 = vunpack.c.l.b16 %v3090
    %v3130 = vunpack.c.l.b16 %v3091
    %v3131 = vunpack.c.l.b16 %v3092
    %v3132 = vunpack.c.l.b16 %v3093
    %v3133 = vunpack.c.l.b16 %v3094
    %v3134 = vunpack.c.l.b16 %v3095
    %v3135 = vpack.c.b16 %v3120, %v3119
    %v3136 = vpack.c.b16 %v3122, %v3121
    %v3137 = vpack.c.b16 %v3124, %v3123
    %v3138 = vpack.c.b16 %v3126, %v3125
    %v3139 = vpack.c.b16 %v3128, %v3127
    %v3140 = vpack.c.b16 %v3130, %v3129
    %v3141 = vpack.c.b16 %v3132, %v3131
    %v3142 = vpack.c.b16 %v3134, %v3133
    %3151 = vmatprep.subr.bf16.mxu0 0
    %3152 = vmatpush1.bf16.msra.mxu0 %v3135
    %3153 = vmatprep.subr.bf16.mxu0 0
    %3154 = vmatpush1.bf16.msra.mxu0 %v3136
    %3155 = vmatprep.subr.bf16.mxu0 0
    %3156 = vmatpush1.bf16.msra.mxu0 %v3137
    %3157 = vmatprep.subr.bf16.mxu0 0
    %3158 = vmatpush1.bf16.msra.mxu0 %v3138
    %3159 = vmatprep.subr.bf16.mxu0 0
    %3160 = vmatpush1.bf16.msra.mxu0 %v3139
    %3161 = vmatprep.subr.bf16.mxu0 0
    %3162 = vmatpush1.bf16.msra.mxu0 %v3140
    %3163 = vmatprep.subr.bf16.mxu0 0
    %3164 = vmatpush1.bf16.msra.mxu0 %v3141
    %3165 = vmatprep.subr.bf16.mxu0 0
    %3166 = vmatpush1.bf16.msra.mxu0 %v3142
    %3167 = vmatprep.subr.bf16.mxu0 0
    %3168 = vmatpush1.bf16.msra.mxu0 0
    %3169 = vmatprep.subr.bf16.mxu0 0
    %3170 = vmatpush1.bf16.msra.mxu0 0
    %3171 = vmatprep.subr.bf16.mxu0 0
    %3172 = vmatpush1.bf16.msra.mxu0 0
    %3173 = vmatprep.subr.bf16.mxu0 0
    %3174 = vmatpush1.bf16.msra.mxu0 0
    %3175 = vmatprep.subr.bf16.mxu0 0
    %3176 = vmatpush1.bf16.msra.mxu0 0
    %3177 = vmatprep.subr.bf16.mxu0 0
    %3178 = vmatpush1.bf16.msra.mxu0 0
    %3179 = vmatprep.subr.bf16.mxu0 0
    %3180 = vmatpush1.bf16.msra.mxu0 0
    %3181 = vmatprep.subr.bf16.mxu0 0
    %3182 = vmatpush1.bf16.msra.mxu0 0
    %3183 = vmatprep.mubr.bf16.mxu0 0
    %3184 = vmatmul.mubr.bf16.gmra.mrb[0].mxu0 %v3072
    %v3185 = vpop.f32.mrb[0].mxu0
    %v3186 = vadd.f32 %v3101, %v3185
    %v3187 = vpop.f32.mrb[0].mxu0
    %v3188 = vpop.f32.mrb[0].mxu0
    %v3189 = vadd.f32 %v3101, %v3188
    %v3190 = vpop.f32.mrb[0].mxu0
    %3191 = vmatprep.mubr.bf16.mxu0 0
    %3192 = vmatmul.mubr.bf16.gmra.mrb[0].mxu0 %v3073
    %v3193 = vpop.f32.mrb[0].mxu0
    %v3194 = vadd.f32 %v3101, %v3193
    %v3195 = vpop.f32.mrb[0].mxu0
    %v3196 = vpop.f32.mrb[0].mxu0
    %v3197 = vadd.f32 %v3101, %v3196
    %v3198 = vpop.f32.mrb[0].mxu0
    %3199 = vmatprep.mubr.bf16.mxu0 0
    %3200 = vmatmul.mubr.bf16.gmra.mrb[0].mxu0 %v3074
    %v3201 = vpop.f32.mrb[0].mxu0
    %v3202 = vadd.f32 %v3101, %v3201
    %v3203 = vpop.f32.mrb[0].mxu0
    %v3204 = vpop.f32.mrb[0].mxu0
    %v3205 = vadd.f32 %v3101, %v3204
    %v3206 = vpop.f32.mrb[0].mxu0
    %3207 = vmatprep.mubr.bf16.mxu0 0
    %3208 = vmatmul.mubr.bf16.gmra.mrb[0].mxu0 %v3075
    %v3209 = vpop.f32.mrb[0].mxu0
    %v3210 = vadd.f32 %v3101, %v3209
    %v3211 = vpop.f32.mrb[0].mxu0
    %v3212 = vpop.f32.mrb[0].mxu0
    %v3213 = vadd.f32 %v3101, %v3212
    %v3214 = vpop.f32.mrb[0].mxu0
    %3215 = vmatprep.mubr.bf16.mxu0 0
    %3216 = vmatmul.mubr.bf16.gmra.mrb[0].mxu0 %v3076
    %v3217 = vpop.f32.mrb[0].mxu0
    %v3218 = vadd.f32 %v3101, %v3217
    %v3219 = vpop.f32.mrb[0].mxu0
    %v3220 = vpop.f32.mrb[0].mxu0
    %v3221 = vadd.f32 %v3101, %v3220
    %v3222 = vpop.f32.mrb[0].mxu0
    %3223 = vmatprep.mubr.bf16.mxu0 0
    %3224 = vmatmul.mubr.bf16.gmra.mrb[0].mxu0 %v3077
    %v3225 = vpop.f32.mrb[0].mxu0
    %v3226 = vadd.f32 %v3101, %v3225
    %v3227 = vpop.f32.mrb[0].mxu0
    %v3228 = vpop.f32.mrb[0].mxu0
    %v3229 = vadd.f32 %v3101, %v3228
    %v3230 = vpop.f32.mrb[0].mxu0
    %3231 = vmatprep.mubr.bf16.mxu0 0
    %3232 = vmatmul.mubr.bf16.gmra.mrb[0].mxu0 %v3078
    %v3233 = vpop.f32.mrb[0].mxu0
    %v3234 = vadd.f32 %v3101, %v3233
    %v3235 = vpop.f32.mrb[0].mxu0
    %v3236 = vpop.f32.mrb[0].mxu0
    %v3237 = vadd.f32 %v3101, %v3236
    %v3238 = vpop.f32.mrb[0].mxu0
    %3239 = vmatprep.mubr.bf16.mxu0 0
    %3240 = vmatmul.mubr.bf16.gmra.mrb[0].mxu0 %v3079
    %v3241 = vpop.f32.mrb[0].mxu0
    %v3242 = vadd.f32 %v3101, %v3241
    %v3243 = vpop.f32.mrb[0].mxu0
    %v3244 = vpop.f32.mrb[0].mxu0
    %v3245 = vadd.f32 %v3101, %v3244
    %v3246 = vpop.f32.mrb[0].mxu0
    %3247 = vdwg.mxu0
    %v3248 = vadd.f32 %v3186, %v200
    %v3249 = vadd.f32 %v3189, %v336
    %v3250 = vadd.f32 %v3194, %v201
    %v3251 = vadd.f32 %v3197, %v337
    %v3252 = vadd.f32 %v3202, %v202
    %v3253 = vadd.f32 %v3205, %v338
    %v3254 = vadd.f32 %v3210, %v203
    %v3255 = vadd.f32 %v3213, %v339
    %v3256 = vadd.f32 %v3218, %v204
    %v3257 = vadd.f32 %v3221, %v340
    %v3258 = vadd.f32 %v3226, %v205
    %v3259 = vadd.f32 %v3229, %v341
    %v3260 = vadd.f32 %v3234, %v206
    %v3261 = vadd.f32 %v3237, %v342
    %v3262 = vadd.f32 %v3242, %v207
    %v3263 = vadd.f32 %v3245, %v343
    %v3264 = vcombine.low %v3248, %v3252
    %v3265 = vcombine.high %v3248, %v3252
    %v3267 = vunpack.c.l.s4 1983009808
    %v3268 = vunpack.c.0.s8 %v3267
    %v3269 = vlaneseq
    %v3270 = vshrl.u32 %v3269, 7
    %v3271 = vsub.s32 %v3268, %v3270
    %v3272 = vrot.slane %v3264, %v3271
    %v3274 = vunpack.c.l.s4 1983009808
    %v3275 = vunpack.c.0.s8 %v3274
    %v3276 = vlaneseq
    %v3277 = vshrl.u32 %v3276, 7
    %v3278 = vsub.s32 %v3275, %v3277
    %v3279 = vrot.slane %v3265, %v3278
    %v3280 = vcombine.low %v3250, %v3254
    %v3281 = vcombine.high %v3250, %v3254
    %v3283 = vunpack.c.l.s4 1983009808
    %v3284 = vunpack.c.0.s8 %v3283
    %v3285 = vlaneseq
    %v3286 = vshrl.u32 %v3285, 7
    %v3287 = vsub.s32 %v3284, %v3286
    %v3288 = vrot.slane %v3280, %v3287
    %v3290 = vunpack.c.l.s4 1983009808
    %v3291 = vunpack.c.0.s8 %v3290
    %v3292 = vlaneseq
    %v3293 = vshrl.u32 %v3292, 7
    %v3294 = vsub.s32 %v3291, %v3293
    %v3295 = vrot.slane %v3281, %v3294
    %v3296 = vcombine.low %v3256, %v3260
    %v3297 = vcombine.high %v3256, %v3260
    %v3299 = vunpack.c.l.s4 1983009808
    %v3300 = vunpack.c.0.s8 %v3299
    %v3301 = vlaneseq
    %v3302 = vshrl.u32 %v3301, 7
    %v3303 = vsub.s32 %v3300, %v3302
    %v3304 = vrot.slane %v3296, %v3303
    %v3306 = vunpack.c.l.s4 1983009808
    %v3307 = vunpack.c.0.s8 %v3306
    %v3308 = vlaneseq
    %v3309 = vshrl.u32 %v3308, 7
    %v3310 = vsub.s32 %v3307, %v3309
    %v3311 = vrot.slane %v3297, %v3310
    %v3312 = vcombine.low %v3258, %v3262
    %v3313 = vcombine.high %v3258, %v3262
    %v3315 = vunpack.c.l.s4 1983009808
    %v3316 = vunpack.c.0.s8 %v3315
    %v3317 = vlaneseq
    %v3318 = vshrl.u32 %v3317, 7
    %v3319 = vsub.s32 %v3316, %v3318
    %v3320 = vrot.slane %v3312, %v3319
    %v3322 = vunpack.c.l.s4 1983009808
    %v3323 = vunpack.c.0.s8 %v3322
    %v3324 = vlaneseq
    %v3325 = vshrl.u32 %v3324, 7
    %v3326 = vsub.s32 %v3323, %v3325
    %v3327 = vrot.slane %v3313, %v3326
    %v3328 = vcombine.low %v3272, %v3288
    %v3329 = vcombine.high %v3272, %v3288
    %v3331 = vunpack.c.l.s4 1934713408
    %v3332 = vunpack.c.0.s8 %v3331
    %v3333 = vlaneseq
    %v3334 = vshrl.u32 %v3333, 7
    %v3335 = vsub.s32 %v3332, %v3334
    %v3336 = vrot.slane %v3328, %v3335
    %v3338 = vunpack.c.l.s4 1934713408
    %v3339 = vunpack.c.0.s8 %v3338
    %v3340 = vlaneseq
    %v3341 = vshrl.u32 %v3340, 7
    %v3342 = vsub.s32 %v3339, %v3341
    %v3343 = vrot.slane %v3329, %v3342
    %v3344 = vcombine.low %v3279, %v3295
    %v3345 = vcombine.high %v3279, %v3295
    %v3347 = vunpack.c.l.s4 1934713408
    %v3348 = vunpack.c.0.s8 %v3347
    %v3349 = vlaneseq
    %v3350 = vshrl.u32 %v3349, 7
    %v3351 = vsub.s32 %v3348, %v3350
    %v3352 = vrot.slane %v3344, %v3351
    %v3354 = vunpack.c.l.s4 1934713408
    %v3355 = vunpack.c.0.s8 %v3354
    %v3356 = vlaneseq
    %v3357 = vshrl.u32 %v3356, 7
    %v3358 = vsub.s32 %v3355, %v3357
    %v3359 = vrot.slane %v3345, %v3358
    %v3360 = vcombine.low %v3304, %v3320
    %v3361 = vcombine.high %v3304, %v3320
    %v3363 = vunpack.c.l.s4 1934713408
    %v3364 = vunpack.c.0.s8 %v3363
    %v3365 = vlaneseq
    %v3366 = vshrl.u32 %v3365, 7
    %v3367 = vsub.s32 %v3364, %v3366
    %v3368 = vrot.slane %v3360, %v3367
    %v3370 = vunpack.c.l.s4 1934713408
    %v3371 = vunpack.c.0.s8 %v3370
    %v3372 = vlaneseq
    %v3373 = vshrl.u32 %v3372, 7
    %v3374 = vsub.s32 %v3371, %v3373
    %v3375 = vrot.slane %v3361, %v3374
    %v3376 = vcombine.low %v3311, %v3327
    %v3377 = vcombine.high %v3311, %v3327
    %v3379 = vunpack.c.l.s4 1934713408
    %v3380 = vunpack.c.0.s8 %v3379
    %v3381 = vlaneseq
    %v3382 = vshrl.u32 %v3381, 7
    %v3383 = vsub.s32 %v3380, %v3382
    %v3384 = vrot.slane %v3376, %v3383
    %v3386 = vunpack.c.l.s4 1934713408
    %v3387 = vunpack.c.0.s8 %v3386
    %v3388 = vlaneseq
    %v3389 = vshrl.u32 %v3388, 7
    %v3390 = vsub.s32 %v3387, %v3389
    %v3391 = vrot.slane %v3377, %v3390
    %v3392 = vcombine.low %v3336, %v3368
    %v3393 = vcombine.high %v3336, %v3368
    %v3394 = vcombine.low %v3343, %v3375
    %v3395 = vcombine.high %v3343, %v3375
    %v3396 = vcombine.low %v3352, %v3384
    %v3397 = vcombine.high %v3352, %v3384
    %v3398 = vcombine.low %v3359, %v3391
    %v3399 = vcombine.high %v3359, %v3391
    %v3400 = vcombine.low %v3249, %v3253
    %v3401 = vcombine.high %v3249, %v3253
    %v3403 = vunpack.c.l.s4 1983009808
    %v3404 = vunpack.c.0.s8 %v3403
    %v3405 = vlaneseq
    %v3406 = vshrl.u32 %v3405, 7
    %v3407 = vsub.s32 %v3404, %v3406
    %v3408 = vrot.slane %v3400, %v3407
    %v3410 = vunpack.c.l.s4 1983009808
    %v3411 = vunpack.c.0.s8 %v3410
    %v3412 = vlaneseq
    %v3413 = vshrl.u32 %v3412, 7
    %v3414 = vsub.s32 %v3411, %v3413
    %v3415 = vrot.slane %v3401, %v3414
    %v3416 = vcombine.low %v3251, %v3255
    %v3417 = vcombine.high %v3251, %v3255
    %v3419 = vunpack.c.l.s4 1983009808
    %v3420 = vunpack.c.0.s8 %v3419
    %v3421 = vlaneseq
    %v3422 = vshrl.u32 %v3421, 7
    %v3423 = vsub.s32 %v3420, %v3422
    %v3424 = vrot.slane %v3416, %v3423
    %v3426 = vunpack.c.l.s4 1983009808
    %v3427 = vunpack.c.0.s8 %v3426
    %v3428 = vlaneseq
    %v3429 = vshrl.u32 %v3428, 7
    %v3430 = vsub.s32 %v3427, %v3429
    %v3431 = vrot.slane %v3417, %v3430
    %v3432 = vcombine.low %v3257, %v3261
    %v3433 = vcombine.high %v3257, %v3261
    %v3435 = vunpack.c.l.s4 1983009808
    %v3436 = vunpack.c.0.s8 %v3435
    %v3437 = vlaneseq
    %v3438 = vshrl.u32 %v3437, 7
    %v3439 = vsub.s32 %v3436, %v3438
    %v3440 = vrot.slane %v3432, %v3439
    %v3442 = vunpack.c.l.s4 1983009808
    %v3443 = vunpack.c.0.s8 %v3442
    %v3444 = vlaneseq
    %v3445 = vshrl.u32 %v3444, 7
    %v3446 = vsub.s32 %v3443, %v3445
    %v3447 = vrot.slane %v3433, %v3446
    %v3448 = vcombine.low %v3259, %v3263
    %v3449 = vcombine.high %v3259, %v3263
    %v3451 = vunpack.c.l.s4 1983009808
    %v3452 = vunpack.c.0.s8 %v3451
    %v3453 = vlaneseq
    %v3454 = vshrl.u32 %v3453, 7
    %v3455 = vsub.s32 %v3452, %v3454
    %v3456 = vrot.slane %v3448, %v3455
    %v3458 = vunpack.c.l.s4 1983009808
    %v3459 = vunpack.c.0.s8 %v3458
    %v3460 = vlaneseq
    %v3461 = vshrl.u32 %v3460, 7
    %v3462 = vsub.s32 %v3459, %v3461
    %v3463 = vrot.slane %v3449, %v3462
    %v3464 = vcombine.low %v3408, %v3424
    %v3465 = vcombine.high %v3408, %v3424
    %v3467 = vunpack.c.l.s4 1934713408
    %v3468 = vunpack.c.0.s8 %v3467
    %v3469 = vlaneseq
    %v3470 = vshrl.u32 %v3469, 7
    %v3471 = vsub.s32 %v3468, %v3470
    %v3472 = vrot.slane %v3464, %v3471
    %v3474 = vunpack.c.l.s4 1934713408
    %v3475 = vunpack.c.0.s8 %v3474
    %v3476 = vlaneseq
    %v3477 = vshrl.u32 %v3476, 7
    %v3478 = vsub.s32 %v3475, %v3477
    %v3479 = vrot.slane %v3465, %v3478
    %v3480 = vcombine.low %v3415, %v3431
    %v3481 = vcombine.high %v3415, %v3431
    %v3483 = vunpack.c.l.s4 1934713408
    %v3484 = vunpack.c.0.s8 %v3483
    %v3485 = vlaneseq
    %v3486 = vshrl.u32 %v3485, 7
    %v3487 = vsub.s32 %v3484, %v3486
    %v3488 = vrot.slane %v3480, %v3487
    %v3490 = vunpack.c.l.s4 1934713408
    %v3491 = vunpack.c.0.s8 %v3490
    %v3492 = vlaneseq
    %v3493 = vshrl.u32 %v3492, 7
    %v3494 = vsub.s32 %v3491, %v3493
    %v3495 = vrot.slane %v3481, %v3494
    %v3496 = vcombine.low %v3440, %v3456
    %v3497 = vcombine.high %v3440, %v3456
    %v3499 = vunpack.c.l.s4 1934713408
    %v3500 = vunpack.c.0.s8 %v3499
    %v3501 = vlaneseq
    %v3502 = vshrl.u32 %v3501, 7
    %v3503 = vsub.s32 %v3500, %v3502
    %v3504 = vrot.slane %v3496, %v3503
    %v3506 = vunpack.c.l.s4 1934713408
    %v3507 = vunpack.c.0.s8 %v3506
    %v3508 = vlaneseq
    %v3509 = vshrl.u32 %v3508, 7
    %v3510 = vsub.s32 %v3507, %v3509
    %v3511 = vrot.slane %v3497, %v3510
    %v3512 = vcombine.low %v3447, %v3463
    %v3513 = vcombine.high %v3447, %v3463
    %v3515 = vunpack.c.l.s4 1934713408
    %v3516 = vunpack.c.0.s8 %v3515
    %v3517 = vlaneseq
    %v3518 = vshrl.u32 %v3517, 7
    %v3519 = vsub.s32 %v3516, %v3518
    %v3520 = vrot.slane %v3512, %v3519
    %v3522 = vunpack.c.l.s4 1934713408
    %v3523 = vunpack.c.0.s8 %v3522
    %v3524 = vlaneseq
    %v3525 = vshrl.u32 %v3524, 7
    %v3526 = vsub.s32 %v3523, %v3525
    %v3527 = vrot.slane %v3513, %v3526
    %v3528 = vcombine.low %v3472, %v3504
    %v3529 = vcombine.high %v3472, %v3504
    %v3530 = vcombine.low %v3479, %v3511
    %v3531 = vcombine.high %v3479, %v3511
    %v3532 = vcombine.low %v3488, %v3520
    %v3533 = vcombine.high %v3488, %v3520
    %v3534 = vcombine.low %v3495, %v3527
    %v3535 = vcombine.high %v3495, %v3527
    %3536 = vst [vmem:[#allocation4] sm:$0xff] %v3392
    %3537 = vst [vmem:[#allocation4 + $0x8] sm:$0xff] %v3393
    %3538 = vst [vmem:[#allocation4 + $0x10] sm:$0xff] %v3394
    %3539 = vst [vmem:[#allocation4 + $0x18] sm:$0xff] %v3395
    %3540 = vst [vmem:[#allocation4 + $0x20] sm:$0xff] %v3396
    %3541 = vst [vmem:[#allocation4 + $0x28] sm:$0xff] %v3397
    %3542 = vst [vmem:[#allocation4 + $0x30] sm:$0xff] %v3398
    %3543 = vst [vmem:[#allocation4 + $0x38] sm:$0xff] %v3399
    %3544 = vst [vmem:[#allocation4 + $0x40] sm:$0xff] %v3528
    %3545 = vst [vmem:[#allocation4 + $0x48] sm:$0xff] %v3529
    %3546 = vst [vmem:[#allocation4 + $0x50] sm:$0xff] %v3530
    %3547 = vst [vmem:[#allocation4 + $0x58] sm:$0xff] %v3531
    %3548 = vst [vmem:[#allocation4 + $0x60] sm:$0xff] %v3532
    %3549 = vst [vmem:[#allocation4 + $0x68] sm:$0xff] %v3533
    %3550 = vst [vmem:[#allocation4 + $0x70] sm:$0xff] %v3534
    %3551 = vst [vmem:[#allocation4 + $0x78] sm:$0xff] %v3535
    %v3552 = vld [vmem:[%s11] sm:$0x1]
    %v3553 = vld [vmem:[%s12] sm:$0x1]
    %3554 = vadd.xlane.f32.xlu0 %v2766
    %v3555 = vpop.xlane.xlu0 %3554
    %3556 = vadd.xlane.f32.xlu0 %v2767
    %v3557 = vpop.xlane.xlu0 %3556
    %v3558 = vmul.f32 %v3555, 0.03125
    %v3559 = vmul.f32 %v3557, 0.03125
    %v3560 = vmul.f32 %v2766, %v2766
    %v3561 = vmul.f32 %v2767, %v2767
    %3562 = vadd.xlane.f32.xlu0 %v3560
    %v3563 = vpop.xlane.xlu0 %3562
    %3564 = vadd.xlane.f32.xlu0 %v3561
    %v3565 = vpop.xlane.xlu0 %3564
    %v3566 = vmul.f32 %v3563, 0.03125
    %v3567 = vmul.f32 %v3565, 0.03125
    %v3568 = vmul.f32 %v3558, %v3558
    %v3569 = vmul.f32 %v3559, %v3559
    %v3570 = vsub.f32 %v3566, %v3568
    %v3571 = vsub.f32 %v3567, %v3569
    %v3572 = vmax.f32 %v3570, 0.0
    %v3573 = vmax.f32 %v3571, 0.0
    %v3574 = vsub.f32 %v2766, %v3558
    %v3575 = vsub.f32 %v2767, %v3559
    %v3576 = vadd.f32 %v3572, 1e-05
    %v3577 = vadd.f32 %v3573, 1e-05
    %v3578 = vrsqrt.pop %v3576
    %v3579 = vrsqrt.pop %v3577
    %v3580 = vmul.f32 %v3574, %v3578
    %v3581 = vmul.f32 %v3575, %v3579
    %v3583 = vlaneseq
    %v3584 = vshrl.u32 %v3583, 7
    %v3585 = vsub.s32 0, %v3584
    %v3586 = vrot.slane %v3552, %v3585
    %v3588 = vmul.f32 %v3580, %v3586
    %v3589 = vmul.f32 %v3581, %v3586
    %v3591 = vlaneseq
    %v3592 = vshrl.u32 %v3591, 7
    %v3593 = vsub.s32 0, %v3592
    %v3594 = vrot.slane %v3553, %v3593
    %v3596 = vadd.f32 %v3588, %v3594
    %v3597 = vadd.f32 %v3589, %v3594
    %3598 = vst [vmem:[#allocation6] sm:$0xff] %v3596
    %3599 = vst [vmem:[#allocation6 + $0x8] sm:$0xff] %v3597
    // Predicated region
    $region62: #{mamba_forward.1} parent=1 // pred_check
      _
    $region63: #{mamba_forward.1} parent=1 // pred_check_branch
      %3601 = sbr.rel (0) target = $region65
    $region64: #{mamba_forward.1} parent=1 // pred_region
      %s3603 = ssub.s32 2048, 2048
      %3604 = vsyncadd [#allocation5], %s3603
      %s3605 = sshll.u32 [#allocation4], 4
      %s3606 = int_to_ptr.vmem [resolvable:$true] %s3605
      %3611 = dma.vmem_to_hbm [thread:$0]  %s3606, 2048, %s15, [#allocation5], 128, 128, 8
    $region65: #{mamba_forward.1} parent=1 // pred_fallthru
      _
    // Predicated region
    $region66: #{mamba_forward.1} parent=1 // pred_check
      _
    $region67: #{mamba_forward.1} parent=1 // pred_check_branch
      %3613 = sbr.rel (0) target = $region69
    $region68: #{mamba_forward.1} parent=1 // pred_region
      %s3615 = ssub.s32 256, 256
      %3616 = vsyncadd [#allocation7], %s3615
      %s3617 = sshll.u32 [#allocation6], 4
      %s3618 = int_to_ptr.vmem [resolvable:$true] %s3617
      %3623 = dma.vmem_to_hbm [thread:$0]  %s3618, 256, %s16, [#allocation7], 128, 128, 8
    $region69: #{mamba_forward.1} parent=1 // pred_fallthru
      _
    // Predicated region
    $region70: #{mamba_forward.1} parent=1 // pred_check
      _
    $region71: #{mamba_forward.1} parent=1 // pred_check_branch
      %3625 = sbr.rel (0) target = $region73
    $region72: #{mamba_forward.1} parent=1 // pred_region
      %3626 = dma.done [#allocation5], 2048
    $region73: #{mamba_forward.1} parent=1 // pred_fallthru
      _
    // Predicated region
    $region74: #{mamba_forward.1} parent=1 // pred_check
      _
    $region75: #{mamba_forward.1} parent=1 // pred_check_branch
      %3628 = sbr.rel (0) target = $region77
    $region76: #{mamba_forward.1} parent=1 // pred_region
      %3629 = dma.done [#allocation7], 256
    $region77: #{mamba_forward.1} parent=1 // pred_fallthru
      _
    %3630 = vsyncpa [#allocation5], 1
    %3631 = vsyncpa [#allocation7], 1

</llo_original>
